<compile_context>
chip_gen: v6e
topology: v6e:2x2x1
jax: 0.10.0
libtpu: 0.0.40
codegen_flags: <defaults>
</compile_context>

<pallas_src>
import functools

import jax
import jax.numpy as jnp
import numpy as np
from jax import lax
from jax.experimental import pallas as pl
from jax.experimental.pallas import tpu as pltpu

# ---- module hyper-parameters (consistent with the PyTorch forward) ----------
SPACIAL_FEATURES = 4
SPATIAL_RESOLUTION_X = 16
SPATIAL_RESOLUTION_Y = 16
MAP_SKIP_CHANNELS = 8           # settings.map_skip_channels
SPATIAL_EMBEDDING_SIZE = 32     # settings.spatial_embedding_size

C1 = 64                         # conv1 out channels
C2 = 32                         # conv2 out channels
C3 = MAP_SKIP_CHANNELS          # conv3 out channels
EMB = SPATIAL_EMBEDDING_SIZE
KSIZE = 4
STRIDE = 2
NTAPS = KSIZE * KSIZE           # 16 kernel taps for the 4x4 convs


def calc_post_conv_dims(input_shape, kernel_size, stride=1, padding=0):
    # Floor arithmetic (matches nn.Conv2d); the module's round() coincides here.
    return tuple((t - kernel_size + 2 * padding) // stride + 1 for t in input_shape)


HIN, WIN = SPATIAL_RESOLUTION_X, SPATIAL_RESOLUTION_Y
H2, W2 = calc_post_conv_dims((HIN, WIN), KSIZE, STRIDE)   # 7, 7
H3, W3 = calc_post_conv_dims((H2, W2), KSIZE, STRIDE)     # 2, 2
HW = HIN * WIN                   # 256 pixels per image
NPOS2 = H2 * W2                  # 49 conv2 output positions
NPOS3 = H3 * W3                  # 4  conv3 output positions

# Rows per tap block of the gathered patch matrices, padded to a multiple of 16
# so every in-kernel row slice of a bf16 value is sublane-aligned.
T2PAD = 64                       # >= NPOS2
T3PAD = 16                       # >= NPOS3


def _tree_sum(vals):
    """Pairwise (tree) sum of a list of arrays — no serial dependency chain."""
    vals = list(vals)
    while len(vals) > 1:
        nxt = [vals[i] + vals[i + 1] for i in range(0, len(vals) - 1, 2)]
        if len(vals) % 2:
            nxt.append(vals[-1])
        vals = nxt
    return vals[0]


# -----------------------------------------------------------------------------
# The single fused kernel.  `batch` is a static Python int bound via partial.
# -----------------------------------------------------------------------------
def _fused_spatial_encoder_kernel(
        batch,
        x_ref, w1_ref, b1_ref, s2_hbm, w2_hbm, b2_ref,
        s3_ref, w3_ref, b3_ref, wf_ref, bf_ref,
        emb_ref, skip_ref,
        s2_vmem, w2_vmem, col2, col3, sems):
    """Whole SpatialEncoder forward, batch packed along the lane dimension.

    x_ref : [HW, B*4]            f32   row = h*WIN + w, col = b*4 + c
    w1_ref: [B*4, B*C1]          bf16  conv1, batch-block-diagonal
    s2_hbm: [NTAPS*T2PAD, HW]    bf16  conv2 patch gather (0/1), HBM (manual DMA)
    w2_hbm: [NTAPS*B*C1, B*C2]   bf16  conv2 taps, per-tap batch-block-diag, HBM
    s3_ref: [NTAPS*T3PAD, T2PAD] bf16  conv3 patch gather (0/1)
    w3_ref: [NTAPS*B*C2, B*C3]   bf16  conv3 taps, per-tap batch-block-diag
    wf_ref: [NPOS3*B*C3, B*EMB]  bf16  fc, position-major, batch-block-diag
    b*_ref: [1, B*n]             f32   biases, tiled over batch
    emb_ref : [1, B*EMB]         f32   col = b*EMB + e
    skip_ref: [NPOS3, B*C3]      f32   row = oi*W3 + oj, col = b*C3 + c
    """
    f32, bf16 = jnp.float32, jnp.bfloat16
    B = batch
    BC1, BC2, BC3 = B * C1, B * C2, B * C3

    # Kick off the two big constant DMAs; they overlap conv1 / the gather dot.
    cp_s2 = pltpu.make_async_copy(s2_hbm, s2_vmem, sems.at[0])
    cp_w2 = pltpu.make_async_copy(w2_hbm, w2_vmem, sems.at[1])
    cp_s2.start()
    cp_w2.start()

    # ---- conv1 (1x1) + ReLU: one dot for the whole batch --------------------
    h1 = jnp.dot(x_ref[...].astype(bf16), w1_ref[...], preferred_element_type=f32)
    h1 = jnp.maximum(h1 + b1_ref[...], 0.0).astype(bf16)        # [HW, BC1]

    # ---- conv2 (4x4, stride 2) + ReLU ---------------------------------------
    # Gather all 16 tap planes with ONE fat dot, then scatter the tap row
    # blocks into 128-lane-aligned column blocks of the im2col scratch.
    cp_s2.wait()
    p2 = jnp.dot(s2_vmem[...], h1, preferred_element_type=f32).astype(bf16)
    for t in range(NTAPS):                                       # [T2PAD, BC1] copies
        col2[:, t * BC1:(t + 1) * BC1] = p2[t * T2PAD:(t + 1) * T2PAD, :]

    cp_w2.wait()
    h2 = jnp.dot(col2[...], w2_vmem[...], preferred_element_type=f32) + b2_ref[...]
    h2 = jnp.maximum(h2, 0.0)
    # Explicitly zero the padded rows (>= NPOS2) so relu(b2) garbage can never
    # leak, independent of the s3 gather layout.
    row2 = lax.broadcasted_iota(jnp.int32, (T2PAD, 1), 0)
    h2 = jnp.where(row2 < NPOS2, h2, 0.0).astype(bf16)           # [T2PAD, BC2]

    # ---- conv3 (4x4, stride 2) + ReLU -> map_skip ----------------------------
    p3 = jnp.dot(s3_ref[...], h2, preferred_element_type=f32).astype(bf16)
    for t in range(NTAPS):                                       # [T3PAD, BC2] copies
        col3[:, t * BC2:(t + 1) * BC2] = p3[t * T3PAD:(t + 1) * T3PAD, :]
    h3 = jnp.dot(col3[...], w3_ref[...], preferred_element_type=f32) + b3_ref[...]
    h3 = jnp.maximum(h3, 0.0)                                    # [T3PAD, BC3]

    # map_skip: one lane-dense store for the whole batch.
    skip_ref[...] = h3[0:NPOS3, :]

    # ---- fc + ReLU: per-position dots, tree-summed ---------------------------
    parts = [jnp.dot(h3[p:p + 1, :].astype(bf16),
                     wf_ref[p * BC3:(p + 1) * BC3, :],
                     preferred_element_type=f32)
             for p in range(NPOS3)]
    emb = _tree_sum(parts) + bf_ref[...]
    emb_ref[...] = jnp.maximum(emb, 0.0)                         # [1, B*EMB]


# -----------------------------------------------------------------------------
# Precomputed 0/1 patch-gather matrices (built once at init, DMA'd as weights).
# -----------------------------------------------------------------------------
def _build_gather_matrices():
    s2 = np.zeros((NTAPS * T2PAD, HW), np.float32)
    s3 = np.zeros((NTAPS * T3PAD, T2PAD), np.float32)
    for di in range(KSIZE):
        for dj in range(KSIZE):
            t = di * KSIZE + dj
            for i in range(H2):
                for j in range(W2):
                    s2[t * T2PAD + i * W2 + j,
                       (STRIDE * i + di) * WIN + (STRIDE * j + dj)] = 1.0
            for oi in range(H3):
                for oj in range(W3):
                    s3[t * T3PAD + oi * W3 + oj,
                       (STRIDE * oi + di) * W2 + (STRIDE * oj + dj)] = 1.0
    # Invariant: s3 never selects padded conv2 rows (also zeroed in-kernel).
    assert not s3[:, NPOS2:].any()
    return s2, s3


# -----------------------------------------------------------------------------
# Parameters.  `init_params` builds canonical (torch-equivalent) weights:
#   conv weights [kh, kw, Cin, Cout], fc weight [in_features, out_features]
#   with the NCHW-flatten row order.  `prepare_kernel_params` repacks them into
#   the kernel's batch-block-diagonal operand layouts (batch size is baked in).
# -----------------------------------------------------------------------------
def init_params(key):
    fc_in = C3 * H3 * W3
    ks = jax.random.split(key, 8)
    canon = {
        "w1": jax.random.normal(ks[0], (SPACIAL_FEATURES, C1), jnp.float32) * 0.1,
        "b1": jax.random.normal(ks[1], (C1,), jnp.float32) * 0.01,
        "w2": jax.random.normal(ks[2], (KSIZE, KSIZE, C1, C2), jnp.float32) * 0.05,
        "b2": jax.random.normal(ks[3], (C2,), jnp.float32) * 0.01,
        "w3": jax.random.normal(ks[4], (KSIZE, KSIZE, C2, C3), jnp.float32) * 0.05,
        "b3": jax.random.normal(ks[5], (C3,), jnp.float32) * 0.01,
        "wf": jax.random.normal(ks[6], (fc_in, EMB), jnp.float32) * 0.1,
        "bf": jax.random.normal(ks[7], (EMB,), jnp.float32) * 0.01,
    }
    return canon, (H3, W3)


def prepare_kernel_params(canon, batch):
    B = batch
    BC1, BC2, BC3, BEMB = B * C1, B * C2, B * C3, B * EMB
    s2_np, s3_np = _build_gather_matrices()

    # conv1: batch-block-diagonal [B*4, B*C1]
    w1 = np.asarray(canon["w1"], np.float32)
    w1_bd = np.zeros((B * SPACIAL_FEATURES, BC1), np.float32)
    for b in range(B):
        w1_bd[b * SPACIAL_FEATURES:(b + 1) * SPACIAL_FEATURES,
              b * C1:(b + 1) * C1] = w1

    # conv2: row block t is the batch-block-diag of w2[tap t]  -> [NTAPS*BC1, BC2]
    w2_taps = np.asarray(canon["w2"], np.float32).reshape(NTAPS, C1, C2)
    w2cat = np.zeros((NTAPS * BC1, BC2), np.float32)
    for t in range(NTAPS):
        for b in range(B):
            w2cat[t * BC1 + b * C1:t * BC1 + (b + 1) * C1,
                  b * C2:(b + 1) * C2] = w2_taps[t]

    # conv3: same scheme -> [NTAPS*BC2, BC3]
    w3_taps = np.asarray(canon["w3"], np.float32).reshape(NTAPS, C2, C3)
    w3cat = np.zeros((NTAPS * BC2, BC3), np.float32)
    for t in range(NTAPS):
        for b in range(B):
            w3cat[t * BC2 + b * C2:t * BC2 + (b + 1) * C2,
                  b * C3:(b + 1) * C3] = w3_taps[t]

    # fc: rows reordered from NCHW-flat (c*NPOS3 + p) to position-major, then
    # batch-block-diag per position -> [NPOS3*BC3, B*EMB]
    wf_pcE = np.asarray(canon["wf"], np.float32).reshape(C3, NPOS3, EMB)
    wf_pcE = wf_pcE.transpose(1, 0, 2)                       # [p, c, E]
    wf_bd = np.zeros((NPOS3 * BC3, BEMB), np.float32)
    for p in range(NPOS3):
        for b in range(B):
            wf_bd[p * BC3 + b * C3:p * BC3 + (b + 1) * C3,
                  b * EMB:(b + 1) * EMB] = wf_pcE[p]

    def tile_bias(v):
        return np.tile(np.asarray(v, np.float32).reshape(1, -1), (1, B))

    return {
        "w1": jnp.asarray(w1_bd, jnp.bfloat16),
        "b1": jnp.asarray(tile_bias(canon["b1"]), jnp.float32),
        "s2": jnp.asarray(s2_np, jnp.bfloat16),
        "w2": jnp.asarray(w2cat, jnp.bfloat16),
        "b2": jnp.asarray(tile_bias(canon["b2"]), jnp.float32),
        "s3": jnp.asarray(s3_np, jnp.bfloat16),
        "w3": jnp.asarray(w3cat, jnp.bfloat16),
        "b3": jnp.asarray(tile_bias(canon["b3"]), jnp.float32),
        "wf": jnp.asarray(wf_bd, jnp.bfloat16),
        "bf": jnp.asarray(tile_bias(canon["bf"]), jnp.float32),
    }


# -----------------------------------------------------------------------------
# Forward pass (mirrors SpatialEncoder.forward): one fused pallas_call.
# -----------------------------------------------------------------------------
def spatial_encoder_forward(kparams, map_features_nchw):
    B, C, H, W = map_features_nchw.shape
    assert (C, H, W) == (SPACIAL_FEATURES, HIN, WIN)
    assert kparams["w1"].shape[0] == B * SPACIAL_FEATURES, (
        "kernel params were packed for a different batch size")
    BC1, BC2, BC3, BEMB = B * C1, B * C2, B * C3, B * EMB

    # [B, C, H, W] -> [HW, B*C]  (batch packed along lanes)
    x_lanes = jnp.transpose(map_features_nchw, (2, 3, 0, 1)).reshape(H * W, B * C)

    vmem = pl.BlockSpec(memory_space=pltpu.MemorySpace.VMEM)
    hbm = pl.BlockSpec(memory_space=pl.ANY)

    emb_flat, skip_flat = pl.pallas_call(
        functools.partial(_fused_spatial_encoder_kernel, B),
        out_shape=(jax.ShapeDtypeStruct((1, BEMB), jnp.float32),
                   jax.ShapeDtypeStruct((NPOS3, BC3), jnp.float32)),
        in_specs=[vmem, vmem, vmem, hbm, hbm, vmem, vmem, vmem, vmem, vmem, vmem],
        out_specs=(vmem, vmem),
        scratch_shapes=[
            pltpu.VMEM((NTAPS * T2PAD, HW), jnp.bfloat16),   # s2 landing buffer
            pltpu.VMEM((NTAPS * BC1, BC2), jnp.bfloat16),    # w2cat landing buffer
            pltpu.VMEM((T2PAD, NTAPS * BC1), jnp.bfloat16),  # conv2 im2col scratch
            pltpu.VMEM((T3PAD, NTAPS * BC2), jnp.bfloat16),  # conv3 im2col scratch
            pltpu.SemaphoreType.DMA((2,)),
        ],
    )(x_lanes,
      kparams["w1"], kparams["b1"], kparams["s2"], kparams["w2"], kparams["b2"],
      kparams["s3"], kparams["w3"], kparams["b3"], kparams["wf"], kparams["bf"])

    embedded = emb_flat.reshape(B, EMB)
    # Tiny (B*32-element) relayout of the skip output to PyTorch's NCHW.
    map_skip = jnp.transpose(skip_flat.reshape(H3, W3, B, C3), (2, 3, 0, 1))
    return embedded, map_skip


# -----------------------------------------------------------------------------
# Pure-JAX reference (XLA convs, f32) for a numerical sanity check.
# -----------------------------------------------------------------------------
def reference_forward(canon, x_nchw):
    dn = ("NHWC", "HWIO", "NHWC")
    x = jnp.transpose(x_nchw, (0, 2, 3, 1))
    h1 = jax.nn.relu(lax.conv_general_dilated(
        x, canon["w1"].reshape(1, 1, SPACIAL_FEATURES, C1), (1, 1), "VALID",
        dimension_numbers=dn) + canon["b1"])
    h2 = jax.nn.relu(lax.conv_general_dilated(
        h1, canon["w2"], (STRIDE, STRIDE), "VALID", dimension_numbers=dn) + canon["b2"])
    h3 = jax.nn.relu(lax.conv_general_dilated(
        h2, canon["w3"], (STRIDE, STRIDE), "VALID", dimension_numbers=dn) + canon["b3"])
    map_skip = jnp.transpose(h3, (0, 3, 1, 2))
    flat = map_skip.reshape(map_skip.shape[0], -1)
    emb = jax.nn.relu(flat @ canon["wf"] + canon["bf"])
    return emb, map_skip


if __name__ == "__main__":
    key = jax.random.PRNGKey(0)
    pkey, xkey = jax.random.split(key)

    canon_params, map_skip_dims = init_params(pkey)

    batch = 2
    kernel_params = prepare_kernel_params(canon_params, batch)
    x = jax.random.normal(
        xkey, (batch, SPACIAL_FEATURES, SPATIAL_RESOLUTION_X, SPATIAL_RESOLUTION_Y),
        jnp.float32)

    fwd = jax.jit(spatial_encoder_forward)
    embedded, map_skip = fwd(kernel_params, x)
    (embedded, map_skip) = jax.block_until_ready((embedded, map_skip))

    assert embedded.shape == (batch, SPATIAL_EMBEDDING_SIZE), embedded.shape
    assert map_skip.shape == (batch, MAP_SKIP_CHANNELS,
                              map_skip_dims[0], map_skip_dims[1]), map_skip.shape
    assert bool(jnp.all(embedded >= 0)) and bool(jnp.all(map_skip >= 0))

    # Numerical check vs. the f32 XLA reference (bf16 MXU operands -> loose tol).
    emb_expected, skip_expected = reference_forward(canon_params, x)
    emb_err = float(jnp.max(jnp.abs(embedded - emb_expected)))
    skip_err = float(jnp.max(jnp.abs(map_skip - skip_expected)))
    assert emb_err < 5e-2, f"embedded mismatch, max abs err = {emb_err}"
    assert skip_err < 5e-2, f"map_skip mismatch, max abs err = {skip_err}"

    print("KERNEL_OK")
</pallas_src>

<mosaic_0001>
module attributes {stable_mosaic.version = 11 : i64} {
  func.func @_fused_spatial_encoder_kernel(%arg0: memref<256x8xf32, #tpu.memory_space<vmem>>, %arg1: memref<8x128xbf16, #tpu.memory_space<vmem>>, %arg2: memref<1x128xf32, #tpu.memory_space<vmem>>, %arg3: memref<1024x256xbf16, #tpu.memory_space<any>>, %arg4: memref<2048x64xbf16, #tpu.memory_space<any>>, %arg5: memref<1x64xf32, #tpu.memory_space<vmem>>, %arg6: memref<256x64xbf16, #tpu.memory_space<vmem>>, %arg7: memref<1024x16xbf16, #tpu.memory_space<vmem>>, %arg8: memref<1x16xf32, #tpu.memory_space<vmem>>, %arg9: memref<64x64xbf16, #tpu.memory_space<vmem>>, %arg10: memref<1x64xf32, #tpu.memory_space<vmem>>, %arg11: memref<1x64xf32, #tpu.memory_space<vmem>>, %arg12: memref<4x16xf32, #tpu.memory_space<vmem>>, %arg13: memref<1024x256xbf16, #tpu.memory_space<vmem>>, %arg14: memref<2048x64xbf16, #tpu.memory_space<vmem>>, %arg15: memref<64x2048xbf16, #tpu.memory_space<vmem>>, %arg16: memref<16x1024xbf16, #tpu.memory_space<vmem>>, %arg17: memref<2x!tpu.dma_semaphore, #tpu.memory_space<semaphore_mem>>) attributes {dimension_semantics = [], scalar_prefetch = 0 : i64, scratch_operands = 5 : i64, tpu.core_type = #tpu.core_type<tc>} {
    %c0_i32 = arith.constant 0 : i32
    %0 = tpu.memref_slice %arg17[%c0_i32] : memref<2x!tpu.dma_semaphore, #tpu.memory_space<semaphore_mem>> -> memref<1x!tpu.dma_semaphore, #tpu.memory_space<semaphore_mem>>
    %1 = tpu.memref_squeeze %0 : memref<1x!tpu.dma_semaphore, #tpu.memory_space<semaphore_mem>> -> memref<!tpu.dma_semaphore, #tpu.memory_space<semaphore_mem>>
    tpu.enqueue_dma source(%arg3 : memref<1024x256xbf16, #tpu.memory_space<any>>) target(%arg13 : memref<1024x256xbf16, #tpu.memory_space<vmem>>) target_semaphore(%1 : memref<!tpu.dma_semaphore, #tpu.memory_space<semaphore_mem>>)
    %c1_i32 = arith.constant 1 : i32
    %2 = tpu.memref_slice %arg17[%c1_i32] : memref<2x!tpu.dma_semaphore, #tpu.memory_space<semaphore_mem>> -> memref<1x!tpu.dma_semaphore, #tpu.memory_space<semaphore_mem>>
    %3 = tpu.memref_squeeze %2 : memref<1x!tpu.dma_semaphore, #tpu.memory_space<semaphore_mem>> -> memref<!tpu.dma_semaphore, #tpu.memory_space<semaphore_mem>>
    tpu.enqueue_dma source(%arg4 : memref<2048x64xbf16, #tpu.memory_space<any>>) target(%arg14 : memref<2048x64xbf16, #tpu.memory_space<vmem>>) target_semaphore(%3 : memref<!tpu.dma_semaphore, #tpu.memory_space<semaphore_mem>>)
    %c0 = arith.constant 0 : index
    %c0_0 = arith.constant 0 : index
    %4 = vector.load %arg0[%c0, %c0_0] : memref<256x8xf32, #tpu.memory_space<vmem>>, vector<256x8xf32>
    %5 = arith.truncf %4 : vector<256x8xf32> to vector<256x8xbf16>
    %c0_1 = arith.constant 0 : index
    %c0_2 = arith.constant 0 : index
    %6 = vector.load %arg1[%c0_1, %c0_2] : memref<8x128xbf16, #tpu.memory_space<vmem>>, vector<8x128xbf16>
    %cst = arith.constant dense<0.000000e+00> : vector<256x128xf32>
    %7 = tpu.matmul %5, %6, %cst {dimension_numbers = #tpu.dot_dimension_numbers<[1], [0], [0], [1], [0, 0, 1, 1], [], []>} : vector<256x8xbf16>, vector<8x128xbf16>, vector<256x128xf32> -> vector<256x128xf32>
    %c0_3 = arith.constant 0 : index
    %c0_4 = arith.constant 0 : index
    %8 = vector.load %arg2[%c0_3, %c0_4] : memref<1x128xf32, #tpu.memory_space<vmem>>, vector<1x128xf32>
    %9 = vector.broadcast %8 : vector<1x128xf32> to vector<256x128xf32>
    %10 = arith.addf %7, %9 : vector<256x128xf32>
    %cst_5 = arith.constant 0.000000e+00 : f32
    %11 = vector.broadcast %cst_5 : f32 to vector<256x128xf32>
    %12 = arith.maximumf %10, %11 : vector<256x128xf32>
    %13 = arith.truncf %12 : vector<256x128xf32> to vector<256x128xbf16>
    %c0_i32_6 = arith.constant 0 : i32
    %14 = tpu.memref_slice %arg17[%c0_i32_6] : memref<2x!tpu.dma_semaphore, #tpu.memory_space<semaphore_mem>> -> memref<1x!tpu.dma_semaphore, #tpu.memory_space<semaphore_mem>>
    %15 = tpu.memref_squeeze %14 : memref<1x!tpu.dma_semaphore, #tpu.memory_space<semaphore_mem>> -> memref<!tpu.dma_semaphore, #tpu.memory_space<semaphore_mem>>
    tpu.wait_dma2 semaphore(%15 : memref<!tpu.dma_semaphore, #tpu.memory_space<semaphore_mem>>) src(%arg3 : memref<1024x256xbf16, #tpu.memory_space<any>>) dst(%arg13 : memref<1024x256xbf16, #tpu.memory_space<vmem>>)
    %c0_7 = arith.constant 0 : index
    %c0_8 = arith.constant 0 : index
    %16 = vector.load %arg13[%c0_7, %c0_8] : memref<1024x256xbf16, #tpu.memory_space<vmem>>, vector<1024x256xbf16>
    %cst_9 = arith.constant dense<0.000000e+00> : vector<1024x128xf32>
    %17 = tpu.matmul %16, %13, %cst_9 {dimension_numbers = #tpu.dot_dimension_numbers<[1], [0], [0], [1], [0, 0, 1, 1], [], []>} : vector<1024x256xbf16>, vector<256x128xbf16>, vector<1024x128xf32> -> vector<1024x128xf32>
    %18 = arith.truncf %17 : vector<1024x128xf32> to vector<1024x128xbf16>
    %19 = vector.extract_strided_slice %18 {offsets = [0, 0], sizes = [64, 128], strides = [1, 1]} : vector<1024x128xbf16> to vector<64x128xbf16>
    %c0_10 = arith.constant 0 : index
    %c0_11 = arith.constant 0 : index
    %20 = vector.load %arg15[%c0_10, %c0_11] : memref<64x2048xbf16, #tpu.memory_space<vmem>>, vector<64x128xbf16>
    tpu.vector_store %arg15[%c0_10, %c0_11], %19 {strides = array<i32>} : memref<64x2048xbf16, #tpu.memory_space<vmem>>, vector<64x128xbf16>,
    %21 = vector.extract_strided_slice %18 {offsets = [64, 0], sizes = [64, 128], strides = [1, 1]} : vector<1024x128xbf16> to vector<64x128xbf16>
    %c0_12 = arith.constant 0 : index
    %c128 = arith.constant 128 : index
    %22 = vector.load %arg15[%c0_12, %c128] : memref<64x2048xbf16, #tpu.memory_space<vmem>>, vector<64x128xbf16>
    tpu.vector_store %arg15[%c0_12, %c128], %21 {strides = array<i32>} : memref<64x2048xbf16, #tpu.memory_space<vmem>>, vector<64x128xbf16>,
    %23 = vector.extract_strided_slice %18 {offsets = [128, 0], sizes = [64, 128], strides = [1, 1]} : vector<1024x128xbf16> to vector<64x128xbf16>
    %c0_13 = arith.constant 0 : index
    %c256 = arith.constant 256 : index
    %24 = vector.load %arg15[%c0_13, %c256] : memref<64x2048xbf16, #tpu.memory_space<vmem>>, vector<64x128xbf16>
    tpu.vector_store %arg15[%c0_13, %c256], %23 {strides = array<i32>} : memref<64x2048xbf16, #tpu.memory_space<vmem>>, vector<64x128xbf16>,
    %25 = vector.extract_strided_slice %18 {offsets = [192, 0], sizes = [64, 128], strides = [1, 1]} : vector<1024x128xbf16> to vector<64x128xbf16>
    %c0_14 = arith.constant 0 : index
    %c384 = arith.constant 384 : index
    %26 = vector.load %arg15[%c0_14, %c384] : memref<64x2048xbf16, #tpu.memory_space<vmem>>, vector<64x128xbf16>
    tpu.vector_store %arg15[%c0_14, %c384], %25 {strides = array<i32>} : memref<64x2048xbf16, #tpu.memory_space<vmem>>, vector<64x128xbf16>,
    %27 = vector.extract_strided_slice %18 {offsets = [256, 0], sizes = [64, 128], strides = [1, 1]} : vector<1024x128xbf16> to vector<64x128xbf16>
    %c0_15 = arith.constant 0 : index
    %c512 = arith.constant 512 : index
    %28 = vector.load %arg15[%c0_15, %c512] : memref<64x2048xbf16, #tpu.memory_space<vmem>>, vector<64x128xbf16>
    tpu.vector_store %arg15[%c0_15, %c512], %27 {strides = array<i32>} : memref<64x2048xbf16, #tpu.memory_space<vmem>>, vector<64x128xbf16>,
    %29 = vector.extract_strided_slice %18 {offsets = [320, 0], sizes = [64, 128], strides = [1, 1]} : vector<1024x128xbf16> to vector<64x128xbf16>
    %c0_16 = arith.constant 0 : index
    %c640 = arith.constant 640 : index
    %30 = vector.load %arg15[%c0_16, %c640] : memref<64x2048xbf16, #tpu.memory_space<vmem>>, vector<64x128xbf16>
    tpu.vector_store %arg15[%c0_16, %c640], %29 {strides = array<i32>} : memref<64x2048xbf16, #tpu.memory_space<vmem>>, vector<64x128xbf16>,
    %31 = vector.extract_strided_slice %18 {offsets = [384, 0], sizes = [64, 128], strides = [1, 1]} : vector<1024x128xbf16> to vector<64x128xbf16>
    %c0_17 = arith.constant 0 : index
    %c768 = arith.constant 768 : index
    %32 = vector.load %arg15[%c0_17, %c768] : memref<64x2048xbf16, #tpu.memory_space<vmem>>, vector<64x128xbf16>
    tpu.vector_store %arg15[%c0_17, %c768], %31 {strides = array<i32>} : memref<64x2048xbf16, #tpu.memory_space<vmem>>, vector<64x128xbf16>,
    %33 = vector.extract_strided_slice %18 {offsets = [448, 0], sizes = [64, 128], strides = [1, 1]} : vector<1024x128xbf16> to vector<64x128xbf16>
    %c0_18 = arith.constant 0 : index
    %c896 = arith.constant 896 : index
    %34 = vector.load %arg15[%c0_18, %c896] : memref<64x2048xbf16, #tpu.memory_space<vmem>>, vector<64x128xbf16>
    tpu.vector_store %arg15[%c0_18, %c896], %33 {strides = array<i32>} : memref<64x2048xbf16, #tpu.memory_space<vmem>>, vector<64x128xbf16>,
    %35 = vector.extract_strided_slice %18 {offsets = [512, 0], sizes = [64, 128], strides = [1, 1]} : vector<1024x128xbf16> to vector<64x128xbf16>
    %c0_19 = arith.constant 0 : index
    %c1024 = arith.constant 1024 : index
    %36 = vector.load %arg15[%c0_19, %c1024] : memref<64x2048xbf16, #tpu.memory_space<vmem>>, vector<64x128xbf16>
    tpu.vector_store %arg15[%c0_19, %c1024], %35 {strides = array<i32>} : memref<64x2048xbf16, #tpu.memory_space<vmem>>, vector<64x128xbf16>,
    %37 = vector.extract_strided_slice %18 {offsets = [576, 0], sizes = [64, 128], strides = [1, 1]} : vector<1024x128xbf16> to vector<64x128xbf16>
    %c0_20 = arith.constant 0 : index
    %c1152 = arith.constant 1152 : index
    %38 = vector.load %arg15[%c0_20, %c1152] : memref<64x2048xbf16, #tpu.memory_space<vmem>>, vector<64x128xbf16>
    tpu.vector_store %arg15[%c0_20, %c1152], %37 {strides = array<i32>} : memref<64x2048xbf16, #tpu.memory_space<vmem>>, vector<64x128xbf16>,
    %39 = vector.extract_strided_slice %18 {offsets = [640, 0], sizes = [64, 128], strides = [1, 1]} : vector<1024x128xbf16> to vector<64x128xbf16>
    %c0_21 = arith.constant 0 : index
    %c1280 = arith.constant 1280 : index
    %40 = vector.load %arg15[%c0_21, %c1280] : memref<64x2048xbf16, #tpu.memory_space<vmem>>, vector<64x128xbf16>
    tpu.vector_store %arg15[%c0_21, %c1280], %39 {strides = array<i32>} : memref<64x2048xbf16, #tpu.memory_space<vmem>>, vector<64x128xbf16>,
    %41 = vector.extract_strided_slice %18 {offsets = [704, 0], sizes = [64, 128], strides = [1, 1]} : vector<1024x128xbf16> to vector<64x128xbf16>
    %c0_22 = arith.constant 0 : index
    %c1408 = arith.constant 1408 : index
    %42 = vector.load %arg15[%c0_22, %c1408] : memref<64x2048xbf16, #tpu.memory_space<vmem>>, vector<64x128xbf16>
    tpu.vector_store %arg15[%c0_22, %c1408], %41 {strides = array<i32>} : memref<64x2048xbf16, #tpu.memory_space<vmem>>, vector<64x128xbf16>,
    %43 = vector.extract_strided_slice %18 {offsets = [768, 0], sizes = [64, 128], strides = [1, 1]} : vector<1024x128xbf16> to vector<64x128xbf16>
    %c0_23 = arith.constant 0 : index
    %c1536 = arith.constant 1536 : index
    %44 = vector.load %arg15[%c0_23, %c1536] : memref<64x2048xbf16, #tpu.memory_space<vmem>>, vector<64x128xbf16>
    tpu.vector_store %arg15[%c0_23, %c1536], %43 {strides = array<i32>} : memref<64x2048xbf16, #tpu.memory_space<vmem>>, vector<64x128xbf16>,
    %45 = vector.extract_strided_slice %18 {offsets = [832, 0], sizes = [64, 128], strides = [1, 1]} : vector<1024x128xbf16> to vector<64x128xbf16>
    %c0_24 = arith.constant 0 : index
    %c1664 = arith.constant 1664 : index
    %46 = vector.load %arg15[%c0_24, %c1664] : memref<64x2048xbf16, #tpu.memory_space<vmem>>, vector<64x128xbf16>
    tpu.vector_store %arg15[%c0_24, %c1664], %45 {strides = array<i32>} : memref<64x2048xbf16, #tpu.memory_space<vmem>>, vector<64x128xbf16>,
    %47 = vector.extract_strided_slice %18 {offsets = [896, 0], sizes = [64, 128], strides = [1, 1]} : vector<1024x128xbf16> to vector<64x128xbf16>
    %c0_25 = arith.constant 0 : index
    %c1792 = arith.constant 1792 : index
    %48 = vector.load %arg15[%c0_25, %c1792] : memref<64x2048xbf16, #tpu.memory_space<vmem>>, vector<64x128xbf16>
    tpu.vector_store %arg15[%c0_25, %c1792], %47 {strides = array<i32>} : memref<64x2048xbf16, #tpu.memory_space<vmem>>, vector<64x128xbf16>,
    %49 = vector.extract_strided_slice %18 {offsets = [960, 0], sizes = [64, 128], strides = [1, 1]} : vector<1024x128xbf16> to vector<64x128xbf16>
    %c0_26 = arith.constant 0 : index
    %c1920 = arith.constant 1920 : index
    %50 = vector.load %arg15[%c0_26, %c1920] : memref<64x2048xbf16, #tpu.memory_space<vmem>>, vector<64x128xbf16>
    tpu.vector_store %arg15[%c0_26, %c1920], %49 {strides = array<i32>} : memref<64x2048xbf16, #tpu.memory_space<vmem>>, vector<64x128xbf16>,
    %c1_i32_27 = arith.constant 1 : i32
    %51 = tpu.memref_slice %arg17[%c1_i32_27] : memref<2x!tpu.dma_semaphore, #tpu.memory_space<semaphore_mem>> -> memref<1x!tpu.dma_semaphore, #tpu.memory_space<semaphore_mem>>
    %52 = tpu.memref_squeeze %51 : memref<1x!tpu.dma_semaphore, #tpu.memory_space<semaphore_mem>> -> memref<!tpu.dma_semaphore, #tpu.memory_space<semaphore_mem>>
    tpu.wait_dma2 semaphore(%52 : memref<!tpu.dma_semaphore, #tpu.memory_space<semaphore_mem>>) src(%arg4 : memref<2048x64xbf16, #tpu.memory_space<any>>) dst(%arg14 : memref<2048x64xbf16, #tpu.memory_space<vmem>>)
    %c0_28 = arith.constant 0 : index
    %c0_29 = arith.constant 0 : index
    %53 = vector.load %arg15[%c0_28, %c0_29] : memref<64x2048xbf16, #tpu.memory_space<vmem>>, vector<64x2048xbf16>
    %c0_30 = arith.constant 0 : index
    %c0_31 = arith.constant 0 : index
    %54 = vector.load %arg14[%c0_30, %c0_31] : memref<2048x64xbf16, #tpu.memory_space<vmem>>, vector<2048x64xbf16>
    %cst_32 = arith.constant dense<0.000000e+00> : vector<64x64xf32>
    %55 = tpu.matmul %53, %54, %cst_32 {dimension_numbers = #tpu.dot_dimension_numbers<[1], [0], [0], [1], [0, 0, 1, 1], [], []>} : vector<64x2048xbf16>, vector<2048x64xbf16>, vector<64x64xf32> -> vector<64x64xf32>
    %c0_33 = arith.constant 0 : index
    %c0_34 = arith.constant 0 : index
    %56 = vector.load %arg5[%c0_33, %c0_34] : memref<1x64xf32, #tpu.memory_space<vmem>>, vector<1x64xf32>
    %57 = vector.broadcast %56 : vector<1x64xf32> to vector<64x64xf32>
    %58 = arith.addf %55, %57 : vector<64x64xf32>
    %cst_35 = arith.constant 0.000000e+00 : f32
    %59 = vector.broadcast %cst_35 : f32 to vector<64x64xf32>
    %60 = arith.maximumf %58, %59 : vector<64x64xf32>
    %61 = tpu.iota {dimensions = array<i32: 0>} : vector<64x1xi32>
    %c49_i32 = arith.constant 49 : i32
    %62 = vector.broadcast %c49_i32 : i32 to vector<64x1xi32>
    %63 = arith.cmpi slt, %61, %62 : vector<64x1xi32>
    %cst_36 = arith.constant 0.000000e+00 : f32
    %64 = vector.shape_cast %63 : vector<64x1xi1> to vector<64x1xi1>
    %65 = vector.broadcast %64 : vector<64x1xi1> to vector<64x64xi1>
    %66 = vector.broadcast %cst_36 : f32 to vector<64x64xf32>
    %67 = arith.select %65, %60, %66 : vector<64x64xi1>, vector<64x64xf32>
    %68 = arith.truncf %67 : vector<64x64xf32> to vector<64x64xbf16>
    %c0_37 = arith.constant 0 : index
    %c0_38 = arith.constant 0 : index
    %69 = vector.load %arg6[%c0_37, %c0_38] : memref<256x64xbf16, #tpu.memory_space<vmem>>, vector<256x64xbf16>
    %cst_39 = arith.constant dense<0.000000e+00> : vector<256x64xf32>
    %70 = tpu.matmul %69, %68, %cst_39 {dimension_numbers = #tpu.dot_dimension_numbers<[1], [0], [0], [1], [0, 0, 1, 1], [], []>} : vector<256x64xbf16>, vector<64x64xbf16>, vector<256x64xf32> -> vector<256x64xf32>
    %71 = arith.truncf %70 : vector<256x64xf32> to vector<256x64xbf16>
    %72 = vector.extract_strided_slice %71 {offsets = [0, 0], sizes = [16, 64], strides = [1, 1]} : vector<256x64xbf16> to vector<16x64xbf16>
    %c0_40 = arith.constant 0 : index
    %c0_41 = arith.constant 0 : index
    %73 = vector.load %arg16[%c0_40, %c0_41] : memref<16x1024xbf16, #tpu.memory_space<vmem>>, vector<16x64xbf16>
    tpu.vector_store %arg16[%c0_40, %c0_41], %72 {strides = array<i32>} : memref<16x1024xbf16, #tpu.memory_space<vmem>>, vector<16x64xbf16>,
    %74 = vector.extract_strided_slice %71 {offsets = [16, 0], sizes = [16, 64], strides = [1, 1]} : vector<256x64xbf16> to vector<16x64xbf16>
    %c0_42 = arith.constant 0 : index
    %c64 = arith.constant 64 : index
    %75 = vector.load %arg16[%c0_42, %c64] : memref<16x1024xbf16, #tpu.memory_space<vmem>>, vector<16x64xbf16>
    tpu.vector_store %arg16[%c0_42, %c64], %74 {strides = array<i32>} : memref<16x1024xbf16, #tpu.memory_space<vmem>>, vector<16x64xbf16>,
    %76 = vector.extract_strided_slice %71 {offsets = [32, 0], sizes = [16, 64], strides = [1, 1]} : vector<256x64xbf16> to vector<16x64xbf16>
    %c0_43 = arith.constant 0 : index
    %c128_44 = arith.constant 128 : index
    %77 = vector.load %arg16[%c0_43, %c128_44] : memref<16x1024xbf16, #tpu.memory_space<vmem>>, vector<16x64xbf16>
    tpu.vector_store %arg16[%c0_43, %c128_44], %76 {strides = array<i32>} : memref<16x1024xbf16, #tpu.memory_space<vmem>>, vector<16x64xbf16>,
    %78 = vector.extract_strided_slice %71 {offsets = [48, 0], sizes = [16, 64], strides = [1, 1]} : vector<256x64xbf16> to vector<16x64xbf16>
    %c0_45 = arith.constant 0 : index
    %c192 = arith.constant 192 : index
    %79 = vector.load %arg16[%c0_45, %c192] : memref<16x1024xbf16, #tpu.memory_space<vmem>>, vector<16x64xbf16>
    tpu.vector_store %arg16[%c0_45, %c192], %78 {strides = array<i32>} : memref<16x1024xbf16, #tpu.memory_space<vmem>>, vector<16x64xbf16>,
    %80 = vector.extract_strided_slice %71 {offsets = [64, 0], sizes = [16, 64], strides = [1, 1]} : vector<256x64xbf16> to vector<16x64xbf16>
    %c0_46 = arith.constant 0 : index
    %c256_47 = arith.constant 256 : index
    %81 = vector.load %arg16[%c0_46, %c256_47] : memref<16x1024xbf16, #tpu.memory_space<vmem>>, vector<16x64xbf16>
    tpu.vector_store %arg16[%c0_46, %c256_47], %80 {strides = array<i32>} : memref<16x1024xbf16, #tpu.memory_space<vmem>>, vector<16x64xbf16>,
    %82 = vector.extract_strided_slice %71 {offsets = [80, 0], sizes = [16, 64], strides = [1, 1]} : vector<256x64xbf16> to vector<16x64xbf16>
    %c0_48 = arith.constant 0 : index
    %c320 = arith.constant 320 : index
    %83 = vector.load %arg16[%c0_48, %c320] : memref<16x1024xbf16, #tpu.memory_space<vmem>>, vector<16x64xbf16>
    tpu.vector_store %arg16[%c0_48, %c320], %82 {strides = array<i32>} : memref<16x1024xbf16, #tpu.memory_space<vmem>>, vector<16x64xbf16>,
    %84 = vector.extract_strided_slice %71 {offsets = [96, 0], sizes = [16, 64], strides = [1, 1]} : vector<256x64xbf16> to vector<16x64xbf16>
    %c0_49 = arith.constant 0 : index
    %c384_50 = arith.constant 384 : index
    %85 = vector.load %arg16[%c0_49, %c384_50] : memref<16x1024xbf16, #tpu.memory_space<vmem>>, vector<16x64xbf16>
    tpu.vector_store %arg16[%c0_49, %c384_50], %84 {strides = array<i32>} : memref<16x1024xbf16, #tpu.memory_space<vmem>>, vector<16x64xbf16>,
    %86 = vector.extract_strided_slice %71 {offsets = [112, 0], sizes = [16, 64], strides = [1, 1]} : vector<256x64xbf16> to vector<16x64xbf16>
    %c0_51 = arith.constant 0 : index
    %c448 = arith.constant 448 : index
    %87 = vector.load %arg16[%c0_51, %c448] : memref<16x1024xbf16, #tpu.memory_space<vmem>>, vector<16x64xbf16>
    tpu.vector_store %arg16[%c0_51, %c448], %86 {strides = array<i32>} : memref<16x1024xbf16, #tpu.memory_space<vmem>>, vector<16x64xbf16>,
    %88 = vector.extract_strided_slice %71 {offsets = [128, 0], sizes = [16, 64], strides = [1, 1]} : vector<256x64xbf16> to vector<16x64xbf16>
    %c0_52 = arith.constant 0 : index
    %c512_53 = arith.constant 512 : index
    %89 = vector.load %arg16[%c0_52, %c512_53] : memref<16x1024xbf16, #tpu.memory_space<vmem>>, vector<16x64xbf16>
    tpu.vector_store %arg16[%c0_52, %c512_53], %88 {strides = array<i32>} : memref<16x1024xbf16, #tpu.memory_space<vmem>>, vector<16x64xbf16>,
    %90 = vector.extract_strided_slice %71 {offsets = [144, 0], sizes = [16, 64], strides = [1, 1]} : vector<256x64xbf16> to vector<16x64xbf16>
    %c0_54 = arith.constant 0 : index
    %c576 = arith.constant 576 : index
    %91 = vector.load %arg16[%c0_54, %c576] : memref<16x1024xbf16, #tpu.memory_space<vmem>>, vector<16x64xbf16>
    tpu.vector_store %arg16[%c0_54, %c576], %90 {strides = array<i32>} : memref<16x1024xbf16, #tpu.memory_space<vmem>>, vector<16x64xbf16>,
    %92 = vector.extract_strided_slice %71 {offsets = [160, 0], sizes = [16, 64], strides = [1, 1]} : vector<256x64xbf16> to vector<16x64xbf16>
    %c0_55 = arith.constant 0 : index
    %c640_56 = arith.constant 640 : index
    %93 = vector.load %arg16[%c0_55, %c640_56] : memref<16x1024xbf16, #tpu.memory_space<vmem>>, vector<16x64xbf16>
    tpu.vector_store %arg16[%c0_55, %c640_56], %92 {strides = array<i32>} : memref<16x1024xbf16, #tpu.memory_space<vmem>>, vector<16x64xbf16>,
    %94 = vector.extract_strided_slice %71 {offsets = [176, 0], sizes = [16, 64], strides = [1, 1]} : vector<256x64xbf16> to vector<16x64xbf16>
    %c0_57 = arith.constant 0 : index
    %c704 = arith.constant 704 : index
    %95 = vector.load %arg16[%c0_57, %c704] : memref<16x1024xbf16, #tpu.memory_space<vmem>>, vector<16x64xbf16>
    tpu.vector_store %arg16[%c0_57, %c704], %94 {strides = array<i32>} : memref<16x1024xbf16, #tpu.memory_space<vmem>>, vector<16x64xbf16>,
    %96 = vector.extract_strided_slice %71 {offsets = [192, 0], sizes = [16, 64], strides = [1, 1]} : vector<256x64xbf16> to vector<16x64xbf16>
    %c0_58 = arith.constant 0 : index
    %c768_59 = arith.constant 768 : index
    %97 = vector.load %arg16[%c0_58, %c768_59] : memref<16x1024xbf16, #tpu.memory_space<vmem>>, vector<16x64xbf16>
    tpu.vector_store %arg16[%c0_58, %c768_59], %96 {strides = array<i32>} : memref<16x1024xbf16, #tpu.memory_space<vmem>>, vector<16x64xbf16>,
    %98 = vector.extract_strided_slice %71 {offsets = [208, 0], sizes = [16, 64], strides = [1, 1]} : vector<256x64xbf16> to vector<16x64xbf16>
    %c0_60 = arith.constant 0 : index
    %c832 = arith.constant 832 : index
    %99 = vector.load %arg16[%c0_60, %c832] : memref<16x1024xbf16, #tpu.memory_space<vmem>>, vector<16x64xbf16>
    tpu.vector_store %arg16[%c0_60, %c832], %98 {strides = array<i32>} : memref<16x1024xbf16, #tpu.memory_space<vmem>>, vector<16x64xbf16>,
    %100 = vector.extract_strided_slice %71 {offsets = [224, 0], sizes = [16, 64], strides = [1, 1]} : vector<256x64xbf16> to vector<16x64xbf16>
    %c0_61 = arith.constant 0 : index
    %c896_62 = arith.constant 896 : index
    %101 = vector.load %arg16[%c0_61, %c896_62] : memref<16x1024xbf16, #tpu.memory_space<vmem>>, vector<16x64xbf16>
    tpu.vector_store %arg16[%c0_61, %c896_62], %100 {strides = array<i32>} : memref<16x1024xbf16, #tpu.memory_space<vmem>>, vector<16x64xbf16>,
    %102 = vector.extract_strided_slice %71 {offsets = [240, 0], sizes = [16, 64], strides = [1, 1]} : vector<256x64xbf16> to vector<16x64xbf16>
    %c0_63 = arith.constant 0 : index
    %c960 = arith.constant 960 : index
    %103 = vector.load %arg16[%c0_63, %c960] : memref<16x1024xbf16, #tpu.memory_space<vmem>>, vector<16x64xbf16>
    tpu.vector_store %arg16[%c0_63, %c960], %102 {strides = array<i32>} : memref<16x1024xbf16, #tpu.memory_space<vmem>>, vector<16x64xbf16>,
    %c0_64 = arith.constant 0 : index
    %c0_65 = arith.constant 0 : index
    %104 = vector.load %arg16[%c0_64, %c0_65] : memref<16x1024xbf16, #tpu.memory_space<vmem>>, vector<16x1024xbf16>
    %c0_66 = arith.constant 0 : index
    %c0_67 = arith.constant 0 : index
    %105 = vector.load %arg7[%c0_66, %c0_67] : memref<1024x16xbf16, #tpu.memory_space<vmem>>, vector<1024x16xbf16>
    %cst_68 = arith.constant dense<0.000000e+00> : vector<16x16xf32>
    %106 = tpu.matmul %104, %105, %cst_68 {dimension_numbers = #tpu.dot_dimension_numbers<[1], [0], [0], [1], [0, 0, 1, 1], [], []>} : vector<16x1024xbf16>, vector<1024x16xbf16>, vector<16x16xf32> -> vector<16x16xf32>
    %c0_69 = arith.constant 0 : index
    %c0_70 = arith.constant 0 : index
    %107 = vector.load %arg8[%c0_69, %c0_70] : memref<1x16xf32, #tpu.memory_space<vmem>>, vector<1x16xf32>
    %108 = vector.broadcast %107 : vector<1x16xf32> to vector<16x16xf32>
    %109 = arith.addf %106, %108 : vector<16x16xf32>
    %cst_71 = arith.constant 0.000000e+00 : f32
    %110 = vector.broadcast %cst_71 : f32 to vector<16x16xf32>
    %111 = arith.maximumf %109, %110 : vector<16x16xf32>
    %112 = vector.extract_strided_slice %111 {offsets = [0, 0], sizes = [4, 16], strides = [1, 1]} : vector<16x16xf32> to vector<4x16xf32>
    %c0_72 = arith.constant 0 : index
    %c0_73 = arith.constant 0 : index
    %113 = vector.load %arg12[%c0_72, %c0_73] : memref<4x16xf32, #tpu.memory_space<vmem>>, vector<4x16xf32>
    tpu.vector_store %arg12[%c0_72, %c0_73], %112 {strides = array<i32>} : memref<4x16xf32, #tpu.memory_space<vmem>>, vector<4x16xf32>,
    %114 = vector.extract_strided_slice %111 {offsets = [0, 0], sizes = [1, 16], strides = [1, 1]} : vector<16x16xf32> to vector<1x16xf32>
    %115 = arith.truncf %114 : vector<1x16xf32> to vector<1x16xbf16>
    %c0_74 = arith.constant 0 : index
    %c0_75 = arith.constant 0 : index
    %116 = vector.load %arg9[%c0_74, %c0_75] : memref<64x64xbf16, #tpu.memory_space<vmem>>, vector<16x64xbf16>
    %cst_76 = arith.constant dense<0.000000e+00> : vector<1x64xf32>
    %117 = tpu.matmul %115, %116, %cst_76 {dimension_numbers = #tpu.dot_dimension_numbers<[1], [0], [0], [1], [0, 0, 1, 1], [], []>} : vector<1x16xbf16>, vector<16x64xbf16>, vector<1x64xf32> -> vector<1x64xf32>
    %118 = vector.extract_strided_slice %111 {offsets = [1, 0], sizes = [1, 16], strides = [1, 1]} : vector<16x16xf32> to vector<1x16xf32>
    %119 = arith.truncf %118 : vector<1x16xf32> to vector<1x16xbf16>
    %c16 = arith.constant 16 : index
    %c0_77 = arith.constant 0 : index
    %120 = vector.load %arg9[%c16, %c0_77] : memref<64x64xbf16, #tpu.memory_space<vmem>>, vector<16x64xbf16>
    %cst_78 = arith.constant dense<0.000000e+00> : vector<1x64xf32>
    %121 = tpu.matmul %119, %120, %cst_78 {dimension_numbers = #tpu.dot_dimension_numbers<[1], [0], [0], [1], [0, 0, 1, 1], [], []>} : vector<1x16xbf16>, vector<16x64xbf16>, vector<1x64xf32> -> vector<1x64xf32>
    %122 = vector.extract_strided_slice %111 {offsets = [2, 0], sizes = [1, 16], strides = [1, 1]} : vector<16x16xf32> to vector<1x16xf32>
    %123 = arith.truncf %122 : vector<1x16xf32> to vector<1x16xbf16>
    %c32 = arith.constant 32 : index
    %c0_79 = arith.constant 0 : index
    %124 = vector.load %arg9[%c32, %c0_79] : memref<64x64xbf16, #tpu.memory_space<vmem>>, vector<16x64xbf16>
    %cst_80 = arith.constant dense<0.000000e+00> : vector<1x64xf32>
    %125 = tpu.matmul %123, %124, %cst_80 {dimension_numbers = #tpu.dot_dimension_numbers<[1], [0], [0], [1], [0, 0, 1, 1], [], []>} : vector<1x16xbf16>, vector<16x64xbf16>, vector<1x64xf32> -> vector<1x64xf32>
    %126 = vector.extract_strided_slice %111 {offsets = [3, 0], sizes = [1, 16], strides = [1, 1]} : vector<16x16xf32> to vector<1x16xf32>
    %127 = arith.truncf %126 : vector<1x16xf32> to vector<1x16xbf16>
    %c48 = arith.constant 48 : index
    %c0_81 = arith.constant 0 : index
    %128 = vector.load %arg9[%c48, %c0_81] : memref<64x64xbf16, #tpu.memory_space<vmem>>, vector<16x64xbf16>
    %cst_82 = arith.constant dense<0.000000e+00> : vector<1x64xf32>
    %129 = tpu.matmul %127, %128, %cst_82 {dimension_numbers = #tpu.dot_dimension_numbers<[1], [0], [0], [1], [0, 0, 1, 1], [], []>} : vector<1x16xbf16>, vector<16x64xbf16>, vector<1x64xf32> -> vector<1x64xf32>
    %130 = arith.addf %117, %121 : vector<1x64xf32>
    %131 = arith.addf %125, %129 : vector<1x64xf32>
    %132 = arith.addf %130, %131 : vector<1x64xf32>
    %c0_83 = arith.constant 0 : index
    %c0_84 = arith.constant 0 : index
    %133 = vector.load %arg10[%c0_83, %c0_84] : memref<1x64xf32, #tpu.memory_space<vmem>>, vector<1x64xf32>
    %134 = arith.addf %132, %133 : vector<1x64xf32>
    %cst_85 = arith.constant 0.000000e+00 : f32
    %135 = vector.broadcast %cst_85 : f32 to vector<1x64xf32>
    %136 = arith.maximumf %134, %135 : vector<1x64xf32>
    %c0_86 = arith.constant 0 : index
    %c0_87 = arith.constant 0 : index
    %137 = vector.load %arg11[%c0_86, %c0_87] : memref<1x64xf32, #tpu.memory_space<vmem>>, vector<1x64xf32>
    tpu.vector_store %arg11[%c0_86, %c0_87], %136 {strides = array<i32>} : memref<1x64xf32, #tpu.memory_space<vmem>>, vector<1x64xf32>,
    return
  }
}

</mosaic_0001>

<llo_original>
// kernel: spatial_encoder_forward.1
$region0: #{spatial_encoder_forward.1}
  #allocation0 [shape = 'u32[]', space=smem, size = 0x4, offset = 0x4, fixed_abs, tag = 'smem constant byte address 0x4 - core index']
  #allocation1 [shape = 'u32[144,128]{1,0:T(1,128)}', space=vmem, size = 0x12000, scoped, tag = 'internal scratch']
  #allocation2 [shape = 'bf16[1024,256]{1,0:T(8,128)(2,1)}', space=vmem, size = 0x80000, scoped, tag = 'scratch operand']
  #allocation3 [shape = 'bf16[2048,64]{1,0:T(8,128)(2,1)}', space=vmem, size = 0x80000, scoped, tag = 'scratch operand']
  #allocation4 [shape = 'bf16[64,2048]{1,0:T(8,128)(2,1)}', space=vmem, size = 0x40000, scoped, tag = 'scratch operand']
  #allocation5 [shape = 'bf16[16,1024]{1,0:T(8,128)(2,1)}', space=vmem, size = 0x8000, scoped, tag = 'scratch operand']
  #allocation6 [shape = 's32[2]{0}', space=sflag, size = 0x8, scoped, tag = 'scratch operand']
  #allocation7 [shape = 's32[]', space=sflag, size = 0x4, offset = 0, fixed_abs, tag = 'sflag constant byte address 0x0 - dummy sync flag']
  #allocation8 [shape = 's32[]', space=sflag, size = 0x4, offset = 0, fixed_abs, tag = 'sflag constant byte address 0x0 - dummy sync flag']
  %s0 = inlined_call_operand.vmem [shape: f32[256,8], index: 0, kind: input, shape index: {}]
  %s1 = inlined_call_operand.vmem [shape: bf16[8,128], index: 1, kind: input, shape index: {}]
  %s2 = inlined_call_operand.vmem [shape: f32[1,128], index: 2, kind: input, shape index: {}]
  %s3 = inlined_call_operand.vmem [shape: bf16[1024,256], index: 3, kind: input, shape index: {}]
  %s4 = inlined_call_operand.vmem [shape: bf16[2048,64], index: 4, kind: input, shape index: {}]
  %s5 = inlined_call_operand.vmem [shape: f32[1,64], index: 5, kind: input, shape index: {}]
  %s6 = inlined_call_operand.vmem [shape: bf16[256,64], index: 6, kind: input, shape index: {}]
  %s7 = inlined_call_operand.vmem [shape: bf16[1024,16], index: 7, kind: input, shape index: {}]
  %s8 = inlined_call_operand.vmem [shape: f32[1,16], index: 8, kind: input, shape index: {}]
  %s9 = inlined_call_operand.vmem [shape: bf16[64,64], index: 9, kind: input, shape index: {}]
  %s10 = inlined_call_operand.vmem [shape: f32[1,64], index: 10, kind: input, shape index: {}]
  %s11 = inlined_call_operand.vmem [shape: f32[1,64], index: 11, kind: output, shape index: {0}]
  %s12 = inlined_call_operand.vmem [shape: f32[4,16], index: 12, kind: output, shape index: {1}]
  %13 = xla_tuple %s11, %s12
  %s14 = sld [smem:[#allocation0]]
  $region122: #{spatial_encoder_forward.1} parent=0
    _
  %s16 = ssub.s32 1, %s14
  %s17 = scalar_select 0, %s16, %s14
  // Predicated region
  $region2: #{spatial_encoder_forward.1} parent=0 // pred_check
    _
  $region3: #{spatial_encoder_forward.1} parent=0 // pred_check_branch
    %19 = sbr.rel (0) target = $region5
  $region4: #{spatial_encoder_forward.1} parent=0 // pred_region
    _
  $region5: #{spatial_encoder_forward.1} parent=0 // pred_fallthru
    _
  // Predicated region
  $region6: #{spatial_encoder_forward.1} parent=0 // pred_check
    _
  $region7: #{spatial_encoder_forward.1} parent=0 // pred_check_branch
    %21 = sbr.rel (0) target = $region9
  $region8: #{spatial_encoder_forward.1} parent=0 // pred_region
    _
  $region9: #{spatial_encoder_forward.1} parent=0 // pred_fallthru
    _
  // Predicated region
  $region10: #{spatial_encoder_forward.1} parent=0 // pred_check
    _
  $region11: #{spatial_encoder_forward.1} parent=0 // pred_check_branch
    %23 = sbr.rel (0) target = $region13
  $region12: #{spatial_encoder_forward.1} parent=0 // pred_region
    _
  $region13: #{spatial_encoder_forward.1} parent=0 // pred_fallthru
    _
  // Predicated region
  $region14: #{spatial_encoder_forward.1} parent=0 // pred_check
    _
  $region15: #{spatial_encoder_forward.1} parent=0 // pred_check_branch
    %25 = sbr.rel (0) target = $region17
  $region16: #{spatial_encoder_forward.1} parent=0 // pred_region
    _
  $region17: #{spatial_encoder_forward.1} parent=0 // pred_fallthru
    _
  // Predicated region
  $region18: #{spatial_encoder_forward.1} parent=0 // pred_check
    _
  $region19: #{spatial_encoder_forward.1} parent=0 // pred_check_branch
    %27 = sbr.rel (0) target = $region21
  $region20: #{spatial_encoder_forward.1} parent=0 // pred_region
    _
  $region21: #{spatial_encoder_forward.1} parent=0 // pred_fallthru
    _
  // Predicated region
  $region22: #{spatial_encoder_forward.1} parent=0 // pred_check
    _
  $region23: #{spatial_encoder_forward.1} parent=0 // pred_check_branch
    %29 = sbr.rel (0) target = $region25
  $region24: #{spatial_encoder_forward.1} parent=0 // pred_region
    _
  $region25: #{spatial_encoder_forward.1} parent=0 // pred_fallthru
    _
  // Predicated region
  $region26: #{spatial_encoder_forward.1} parent=0 // pred_check
    _
  $region27: #{spatial_encoder_forward.1} parent=0 // pred_check_branch
    %31 = sbr.rel (0) target = $region29
  $region28: #{spatial_encoder_forward.1} parent=0 // pred_region
    _
  $region29: #{spatial_encoder_forward.1} parent=0 // pred_fallthru
    _
  // Predicated region
  $region30: #{spatial_encoder_forward.1} parent=0 // pred_check
    _
  $region31: #{spatial_encoder_forward.1} parent=0 // pred_check_branch
    %33 = sbr.rel (0) target = $region33
  $region32: #{spatial_encoder_forward.1} parent=0 // pred_region
    _
  $region33: #{spatial_encoder_forward.1} parent=0 // pred_fallthru
    _
  // Predicated region
  $region34: #{spatial_encoder_forward.1} parent=0 // pred_check
    _
  $region35: #{spatial_encoder_forward.1} parent=0 // pred_check_branch
    %35 = sbr.rel (0) target = $region37
  $region36: #{spatial_encoder_forward.1} parent=0 // pred_region
    _
  $region37: #{spatial_encoder_forward.1} parent=0 // pred_fallthru
    _
  %p38 = scmp.lt.u32.totalorder 1024, 8
  %p39 = pneg %p38
  // Predicated region
  $region38: #{spatial_encoder_forward.1} parent=0 // pred_check
    _
  $region39: #{spatial_encoder_forward.1} parent=0 // pred_check_branch
    %41 = sbr.rel (%p38) target = $region41
  $region40: #{spatial_encoder_forward.1} parent=0 // pred_region
    %s57 = sand.u32 1024, 7
    %p58 = scmp.eq.s32.totalorder %s57, 0
    // Predicated region
    $region53: #{spatial_encoder_forward.1} parent=40 // pred_check
      %p59 = pneg %p58
    $region54: #{spatial_encoder_forward.1} parent=40 // pred_check_branch
      %61 = sbr.rel (%p59) target = $region56
    $region55: #{spatial_encoder_forward.1} parent=40 // pred_region
      loop: start=0, step=1, limit=1
      $region57: #{spatial_encoder_forward.1} parent=55 // loop_pre_header
        _
      $region58: #{spatial_encoder_forward.1} parent=55 // loop_header
        %s63 = sphi 0, %s67
        %p64 = scmp.ge.s32.totalorder %s63, 1
        %s68 = sphi %s3, %s3
        %s69 = sphi [#allocation2], [#allocation2]
      $region59: #{spatial_encoder_forward.1} parent=55 // loop_header_branch
        %66 = sbr.rel (%p64) target = $region63
      $region60: #{spatial_encoder_forward.1} parent=55 // loop_body
        %v70 = vld [vmem:[%s68] sm:$0xff]
        %71 = vst [vmem:[%s69] sm:$0xff] %v70
        %v72 = vld [vmem:[%s68 + $0x8] sm:$0xff]
        %73 = vst [vmem:[%s69 + $0x8] sm:$0xff] %v72
        %v74 = vld [vmem:[%s68 + $0x10] sm:$0xff]
        %75 = vst [vmem:[%s69 + $0x10] sm:$0xff] %v74
        %v76 = vld [vmem:[%s68 + $0x18] sm:$0xff]
        %77 = vst [vmem:[%s69 + $0x18] sm:$0xff] %v76
        %v78 = vld [vmem:[%s68 + $0x20] sm:$0xff]
        %79 = vst [vmem:[%s69 + $0x20] sm:$0xff] %v78
        %v80 = vld [vmem:[%s68 + $0x28] sm:$0xff]
        %81 = vst [vmem:[%s69 + $0x28] sm:$0xff] %v80
        %v82 = vld [vmem:[%s68 + $0x30] sm:$0xff]
        %83 = vst [vmem:[%s69 + $0x30] sm:$0xff] %v82
        %v84 = vld [vmem:[%s68 + $0x38] sm:$0xff]
        %85 = vst [vmem:[%s69 + $0x38] sm:$0xff] %v84
        %v86 = vld [vmem:[%s68 + $0x40] sm:$0xff]
        %87 = vst [vmem:[%s69 + $0x40] sm:$0xff] %v86
        %v88 = vld [vmem:[%s68 + $0x48] sm:$0xff]
        %89 = vst [vmem:[%s69 + $0x48] sm:$0xff] %v88
        %v90 = vld [vmem:[%s68 + $0x50] sm:$0xff]
        %91 = vst [vmem:[%s69 + $0x50] sm:$0xff] %v90
        %v92 = vld [vmem:[%s68 + $0x58] sm:$0xff]
        %93 = vst [vmem:[%s69 + $0x58] sm:$0xff] %v92
        %v94 = vld [vmem:[%s68 + $0x60] sm:$0xff]
        %95 = vst [vmem:[%s69 + $0x60] sm:$0xff] %v94
        %v96 = vld [vmem:[%s68 + $0x68] sm:$0xff]
        %97 = vst [vmem:[%s69 + $0x68] sm:$0xff] %v96
        %v98 = vld [vmem:[%s68 + $0x70] sm:$0xff]
        %99 = vst [vmem:[%s69 + $0x70] sm:$0xff] %v98
        %v100 = vld [vmem:[%s68 + $0x78] sm:$0xff]
        %101 = vst [vmem:[%s69 + $0x78] sm:$0xff] %v100
        %v102 = vld [vmem:[%s68 + $0x80] sm:$0xff]
        %103 = vst [vmem:[%s69 + $0x80] sm:$0xff] %v102
        %v104 = vld [vmem:[%s68 + $0x88] sm:$0xff]
        %105 = vst [vmem:[%s69 + $0x88] sm:$0xff] %v104
        %v106 = vld [vmem:[%s68 + $0x90] sm:$0xff]
        %107 = vst [vmem:[%s69 + $0x90] sm:$0xff] %v106
        %v108 = vld [vmem:[%s68 + $0x98] sm:$0xff]
        %109 = vst [vmem:[%s69 + $0x98] sm:$0xff] %v108
        %v110 = vld [vmem:[%s68 + $0xa0] sm:$0xff]
        %111 = vst [vmem:[%s69 + $0xa0] sm:$0xff] %v110
        %v112 = vld [vmem:[%s68 + $0xa8] sm:$0xff]
        %113 = vst [vmem:[%s69 + $0xa8] sm:$0xff] %v112
        %v114 = vld [vmem:[%s68 + $0xb0] sm:$0xff]
        %115 = vst [vmem:[%s69 + $0xb0] sm:$0xff] %v114
        %v116 = vld [vmem:[%s68 + $0xb8] sm:$0xff]
        %117 = vst [vmem:[%s69 + $0xb8] sm:$0xff] %v116
        %v118 = vld [vmem:[%s68 + $0xc0] sm:$0xff]
        %119 = vst [vmem:[%s69 + $0xc0] sm:$0xff] %v118
        %v120 = vld [vmem:[%s68 + $0xc8] sm:$0xff]
        %121 = vst [vmem:[%s69 + $0xc8] sm:$0xff] %v120
        %v122 = vld [vmem:[%s68 + $0xd0] sm:$0xff]
        %123 = vst [vmem:[%s69 + $0xd0] sm:$0xff] %v122
        %v124 = vld [vmem:[%s68 + $0xd8] sm:$0xff]
        %125 = vst [vmem:[%s69 + $0xd8] sm:$0xff] %v124
        %v126 = vld [vmem:[%s68 + $0xe0] sm:$0xff]
        %127 = vst [vmem:[%s69 + $0xe0] sm:$0xff] %v126
        %v128 = vld [vmem:[%s68 + $0xe8] sm:$0xff]
        %129 = vst [vmem:[%s69 + $0xe8] sm:$0xff] %v128
        %v130 = vld [vmem:[%s68 + $0xf0] sm:$0xff]
        %131 = vst [vmem:[%s69 + $0xf0] sm:$0xff] %v130
        %v132 = vld [vmem:[%s68 + $0xf8] sm:$0xff]
        %133 = vst [vmem:[%s69 + $0xf8] sm:$0xff] %v132
        %v134 = vld [vmem:[%s68 + $0x100] sm:$0xff]
        %135 = vst [vmem:[%s69 + $0x100] sm:$0xff] %v134
        %v136 = vld [vmem:[%s68 + $0x108] sm:$0xff]
        %137 = vst [vmem:[%s69 + $0x108] sm:$0xff] %v136
        %v138 = vld [vmem:[%s68 + $0x110] sm:$0xff]
        %139 = vst [vmem:[%s69 + $0x110] sm:$0xff] %v138
        %v140 = vld [vmem:[%s68 + $0x118] sm:$0xff]
        %141 = vst [vmem:[%s69 + $0x118] sm:$0xff] %v140
        %v142 = vld [vmem:[%s68 + $0x120] sm:$0xff]
        %143 = vst [vmem:[%s69 + $0x120] sm:$0xff] %v142
        %v144 = vld [vmem:[%s68 + $0x128] sm:$0xff]
        %145 = vst [vmem:[%s69 + $0x128] sm:$0xff] %v144
        %v146 = vld [vmem:[%s68 + $0x130] sm:$0xff]
        %147 = vst [vmem:[%s69 + $0x130] sm:$0xff] %v146
        %v148 = vld [vmem:[%s68 + $0x138] sm:$0xff]
        %149 = vst [vmem:[%s69 + $0x138] sm:$0xff] %v148
        %v150 = vld [vmem:[%s68 + $0x140] sm:$0xff]
        %151 = vst [vmem:[%s69 + $0x140] sm:$0xff] %v150
        %v152 = vld [vmem:[%s68 + $0x148] sm:$0xff]
        %153 = vst [vmem:[%s69 + $0x148] sm:$0xff] %v152
        %v154 = vld [vmem:[%s68 + $0x150] sm:$0xff]
        %155 = vst [vmem:[%s69 + $0x150] sm:$0xff] %v154
        %v156 = vld [vmem:[%s68 + $0x158] sm:$0xff]
        %157 = vst [vmem:[%s69 + $0x158] sm:$0xff] %v156
        %v158 = vld [vmem:[%s68 + $0x160] sm:$0xff]
        %159 = vst [vmem:[%s69 + $0x160] sm:$0xff] %v158
        %v160 = vld [vmem:[%s68 + $0x168] sm:$0xff]
        %161 = vst [vmem:[%s69 + $0x168] sm:$0xff] %v160
        %v162 = vld [vmem:[%s68 + $0x170] sm:$0xff]
        %163 = vst [vmem:[%s69 + $0x170] sm:$0xff] %v162
        %v164 = vld [vmem:[%s68 + $0x178] sm:$0xff]
        %165 = vst [vmem:[%s69 + $0x178] sm:$0xff] %v164
        %v166 = vld [vmem:[%s68 + $0x180] sm:$0xff]
        %167 = vst [vmem:[%s69 + $0x180] sm:$0xff] %v166
        %v168 = vld [vmem:[%s68 + $0x188] sm:$0xff]
        %169 = vst [vmem:[%s69 + $0x188] sm:$0xff] %v168
        %v170 = vld [vmem:[%s68 + $0x190] sm:$0xff]
        %171 = vst [vmem:[%s69 + $0x190] sm:$0xff] %v170
        %v172 = vld [vmem:[%s68 + $0x198] sm:$0xff]
        %173 = vst [vmem:[%s69 + $0x198] sm:$0xff] %v172
        %v174 = vld [vmem:[%s68 + $0x1a0] sm:$0xff]
        %175 = vst [vmem:[%s69 + $0x1a0] sm:$0xff] %v174
        %v176 = vld [vmem:[%s68 + $0x1a8] sm:$0xff]
        %177 = vst [vmem:[%s69 + $0x1a8] sm:$0xff] %v176
        %v178 = vld [vmem:[%s68 + $0x1b0] sm:$0xff]
        %179 = vst [vmem:[%s69 + $0x1b0] sm:$0xff] %v178
        %v180 = vld [vmem:[%s68 + $0x1b8] sm:$0xff]
        %181 = vst [vmem:[%s69 + $0x1b8] sm:$0xff] %v180
        %v182 = vld [vmem:[%s68 + $0x1c0] sm:$0xff]
        %183 = vst [vmem:[%s69 + $0x1c0] sm:$0xff] %v182
        %v184 = vld [vmem:[%s68 + $0x1c8] sm:$0xff]
        %185 = vst [vmem:[%s69 + $0x1c8] sm:$0xff] %v184
        %v186 = vld [vmem:[%s68 + $0x1d0] sm:$0xff]
        %187 = vst [vmem:[%s69 + $0x1d0] sm:$0xff] %v186
        %v188 = vld [vmem:[%s68 + $0x1d8] sm:$0xff]
        %189 = vst [vmem:[%s69 + $0x1d8] sm:$0xff] %v188
        %v190 = vld [vmem:[%s68 + $0x1e0] sm:$0xff]
        %191 = vst [vmem:[%s69 + $0x1e0] sm:$0xff] %v190
        %v192 = vld [vmem:[%s68 + $0x1e8] sm:$0xff]
        %193 = vst [vmem:[%s69 + $0x1e8] sm:$0xff] %v192
        %v194 = vld [vmem:[%s68 + $0x1f0] sm:$0xff]
        %195 = vst [vmem:[%s69 + $0x1f0] sm:$0xff] %v194
        %v196 = vld [vmem:[%s68 + $0x1f8] sm:$0xff]
        %197 = vst [vmem:[%s69 + $0x1f8] sm:$0xff] %v196
        %v198 = vld [vmem:[%s68 + $0x200] sm:$0xff]
        %199 = vst [vmem:[%s69 + $0x200] sm:$0xff] %v198
        %v200 = vld [vmem:[%s68 + $0x208] sm:$0xff]
        %201 = vst [vmem:[%s69 + $0x208] sm:$0xff] %v200
        %v202 = vld [vmem:[%s68 + $0x210] sm:$0xff]
        %203 = vst [vmem:[%s69 + $0x210] sm:$0xff] %v202
        %v204 = vld [vmem:[%s68 + $0x218] sm:$0xff]
        %205 = vst [vmem:[%s69 + $0x218] sm:$0xff] %v204
        %v206 = vld [vmem:[%s68 + $0x220] sm:$0xff]
        %207 = vst [vmem:[%s69 + $0x220] sm:$0xff] %v206
        %v208 = vld [vmem:[%s68 + $0x228] sm:$0xff]
        %209 = vst [vmem:[%s69 + $0x228] sm:$0xff] %v208
        %v210 = vld [vmem:[%s68 + $0x230] sm:$0xff]
        %211 = vst [vmem:[%s69 + $0x230] sm:$0xff] %v210
        %v212 = vld [vmem:[%s68 + $0x238] sm:$0xff]
        %213 = vst [vmem:[%s69 + $0x238] sm:$0xff] %v212
        %v214 = vld [vmem:[%s68 + $0x240] sm:$0xff]
        %215 = vst [vmem:[%s69 + $0x240] sm:$0xff] %v214
        %v216 = vld [vmem:[%s68 + $0x248] sm:$0xff]
        %217 = vst [vmem:[%s69 + $0x248] sm:$0xff] %v216
        %v218 = vld [vmem:[%s68 + $0x250] sm:$0xff]
        %219 = vst [vmem:[%s69 + $0x250] sm:$0xff] %v218
        %v220 = vld [vmem:[%s68 + $0x258] sm:$0xff]
        %221 = vst [vmem:[%s69 + $0x258] sm:$0xff] %v220
        %v222 = vld [vmem:[%s68 + $0x260] sm:$0xff]
        %223 = vst [vmem:[%s69 + $0x260] sm:$0xff] %v222
        %v224 = vld [vmem:[%s68 + $0x268] sm:$0xff]
        %225 = vst [vmem:[%s69 + $0x268] sm:$0xff] %v224
        %v226 = vld [vmem:[%s68 + $0x270] sm:$0xff]
        %227 = vst [vmem:[%s69 + $0x270] sm:$0xff] %v226
        %v228 = vld [vmem:[%s68 + $0x278] sm:$0xff]
        %229 = vst [vmem:[%s69 + $0x278] sm:$0xff] %v228
        %v230 = vld [vmem:[%s68 + $0x280] sm:$0xff]
        %231 = vst [vmem:[%s69 + $0x280] sm:$0xff] %v230
        %v232 = vld [vmem:[%s68 + $0x288] sm:$0xff]
        %233 = vst [vmem:[%s69 + $0x288] sm:$0xff] %v232
        %v234 = vld [vmem:[%s68 + $0x290] sm:$0xff]
        %235 = vst [vmem:[%s69 + $0x290] sm:$0xff] %v234
        %v236 = vld [vmem:[%s68 + $0x298] sm:$0xff]
        %237 = vst [vmem:[%s69 + $0x298] sm:$0xff] %v236
        %v238 = vld [vmem:[%s68 + $0x2a0] sm:$0xff]
        %239 = vst [vmem:[%s69 + $0x2a0] sm:$0xff] %v238
        %v240 = vld [vmem:[%s68 + $0x2a8] sm:$0xff]
        %241 = vst [vmem:[%s69 + $0x2a8] sm:$0xff] %v240
        %v242 = vld [vmem:[%s68 + $0x2b0] sm:$0xff]
        %243 = vst [vmem:[%s69 + $0x2b0] sm:$0xff] %v242
        %v244 = vld [vmem:[%s68 + $0x2b8] sm:$0xff]
        %245 = vst [vmem:[%s69 + $0x2b8] sm:$0xff] %v244
        %v246 = vld [vmem:[%s68 + $0x2c0] sm:$0xff]
        %247 = vst [vmem:[%s69 + $0x2c0] sm:$0xff] %v246
        %v248 = vld [vmem:[%s68 + $0x2c8] sm:$0xff]
        %249 = vst [vmem:[%s69 + $0x2c8] sm:$0xff] %v248
        %v250 = vld [vmem:[%s68 + $0x2d0] sm:$0xff]
        %251 = vst [vmem:[%s69 + $0x2d0] sm:$0xff] %v250
        %v252 = vld [vmem:[%s68 + $0x2d8] sm:$0xff]
        %253 = vst [vmem:[%s69 + $0x2d8] sm:$0xff] %v252
        %v254 = vld [vmem:[%s68 + $0x2e0] sm:$0xff]
        %255 = vst [vmem:[%s69 + $0x2e0] sm:$0xff] %v254
        %v256 = vld [vmem:[%s68 + $0x2e8] sm:$0xff]
        %257 = vst [vmem:[%s69 + $0x2e8] sm:$0xff] %v256
        %v258 = vld [vmem:[%s68 + $0x2f0] sm:$0xff]
        %259 = vst [vmem:[%s69 + $0x2f0] sm:$0xff] %v258
        %v260 = vld [vmem:[%s68 + $0x2f8] sm:$0xff]
        %261 = vst [vmem:[%s69 + $0x2f8] sm:$0xff] %v260
        %v262 = vld [vmem:[%s68 + $0x300] sm:$0xff]
        %263 = vst [vmem:[%s69 + $0x300] sm:$0xff] %v262
        %v264 = vld [vmem:[%s68 + $0x308] sm:$0xff]
        %265 = vst [vmem:[%s69 + $0x308] sm:$0xff] %v264
        %v266 = vld [vmem:[%s68 + $0x310] sm:$0xff]
        %267 = vst [vmem:[%s69 + $0x310] sm:$0xff] %v266
        %v268 = vld [vmem:[%s68 + $0x318] sm:$0xff]
        %269 = vst [vmem:[%s69 + $0x318] sm:$0xff] %v268
        %v270 = vld [vmem:[%s68 + $0x320] sm:$0xff]
        %271 = vst [vmem:[%s69 + $0x320] sm:$0xff] %v270
        %v272 = vld [vmem:[%s68 + $0x328] sm:$0xff]
        %273 = vst [vmem:[%s69 + $0x328] sm:$0xff] %v272
        %v274 = vld [vmem:[%s68 + $0x330] sm:$0xff]
        %275 = vst [vmem:[%s69 + $0x330] sm:$0xff] %v274
        %v276 = vld [vmem:[%s68 + $0x338] sm:$0xff]
        %277 = vst [vmem:[%s69 + $0x338] sm:$0xff] %v276
        %v278 = vld [vmem:[%s68 + $0x340] sm:$0xff]
        %279 = vst [vmem:[%s69 + $0x340] sm:$0xff] %v278
        %v280 = vld [vmem:[%s68 + $0x348] sm:$0xff]
        %281 = vst [vmem:[%s69 + $0x348] sm:$0xff] %v280
        %v282 = vld [vmem:[%s68 + $0x350] sm:$0xff]
        %283 = vst [vmem:[%s69 + $0x350] sm:$0xff] %v282
        %v284 = vld [vmem:[%s68 + $0x358] sm:$0xff]
        %285 = vst [vmem:[%s69 + $0x358] sm:$0xff] %v284
        %v286 = vld [vmem:[%s68 + $0x360] sm:$0xff]
        %287 = vst [vmem:[%s69 + $0x360] sm:$0xff] %v286
        %v288 = vld [vmem:[%s68 + $0x368] sm:$0xff]
        %289 = vst [vmem:[%s69 + $0x368] sm:$0xff] %v288
        %v290 = vld [vmem:[%s68 + $0x370] sm:$0xff]
        %291 = vst [vmem:[%s69 + $0x370] sm:$0xff] %v290
        %v292 = vld [vmem:[%s68 + $0x378] sm:$0xff]
        %293 = vst [vmem:[%s69 + $0x378] sm:$0xff] %v292
        %v294 = vld [vmem:[%s68 + $0x380] sm:$0xff]
        %295 = vst [vmem:[%s69 + $0x380] sm:$0xff] %v294
        %v296 = vld [vmem:[%s68 + $0x388] sm:$0xff]
        %297 = vst [vmem:[%s69 + $0x388] sm:$0xff] %v296
        %v298 = vld [vmem:[%s68 + $0x390] sm:$0xff]
        %299 = vst [vmem:[%s69 + $0x390] sm:$0xff] %v298
        %v300 = vld [vmem:[%s68 + $0x398] sm:$0xff]
        %301 = vst [vmem:[%s69 + $0x398] sm:$0xff] %v300
        %v302 = vld [vmem:[%s68 + $0x3a0] sm:$0xff]
        %303 = vst [vmem:[%s69 + $0x3a0] sm:$0xff] %v302
        %v304 = vld [vmem:[%s68 + $0x3a8] sm:$0xff]
        %305 = vst [vmem:[%s69 + $0x3a8] sm:$0xff] %v304
        %v306 = vld [vmem:[%s68 + $0x3b0] sm:$0xff]
        %307 = vst [vmem:[%s69 + $0x3b0] sm:$0xff] %v306
        %v308 = vld [vmem:[%s68 + $0x3b8] sm:$0xff]
        %309 = vst [vmem:[%s69 + $0x3b8] sm:$0xff] %v308
        %v310 = vld [vmem:[%s68 + $0x3c0] sm:$0xff]
        %311 = vst [vmem:[%s69 + $0x3c0] sm:$0xff] %v310
        %v312 = vld [vmem:[%s68 + $0x3c8] sm:$0xff]
        %313 = vst [vmem:[%s69 + $0x3c8] sm:$0xff] %v312
        %v314 = vld [vmem:[%s68 + $0x3d0] sm:$0xff]
        %315 = vst [vmem:[%s69 + $0x3d0] sm:$0xff] %v314
        %v316 = vld [vmem:[%s68 + $0x3d8] sm:$0xff]
        %317 = vst [vmem:[%s69 + $0x3d8] sm:$0xff] %v316
        %v318 = vld [vmem:[%s68 + $0x3e0] sm:$0xff]
        %319 = vst [vmem:[%s69 + $0x3e0] sm:$0xff] %v318
        %v320 = vld [vmem:[%s68 + $0x3e8] sm:$0xff]
        %321 = vst [vmem:[%s69 + $0x3e8] sm:$0xff] %v320
        %v322 = vld [vmem:[%s68 + $0x3f0] sm:$0xff]
        %323 = vst [vmem:[%s69 + $0x3f0] sm:$0xff] %v322
        %v324 = vld [vmem:[%s68 + $0x3f8] sm:$0xff]
        %325 = vst [vmem:[%s69 + $0x3f8] sm:$0xff] %v324
      $region61: #{spatial_encoder_forward.1} parent=55 // loop_footer
        %s67 = sadd.s32 1, %s63
      $region62: #{spatial_encoder_forward.1} parent=55 // loop_footer_branch
        %62 = sbr.rel target = $region58
      $region63: #{spatial_encoder_forward.1} parent=55 // loop_exit
        _
    $region56: #{spatial_encoder_forward.1} parent=40 // pred_fallthru
      _
    %p326 = pneg %p58
    // Predicated region
    $region64: #{spatial_encoder_forward.1} parent=40 // pred_check
      _
    $region65: #{spatial_encoder_forward.1} parent=40 // pred_check_branch
      %328 = sbr.rel (%p58) target = $region67
    $region66: #{spatial_encoder_forward.1} parent=40 // pred_region
      %s329 = sand.u32 1024, 7
    $region67: #{spatial_encoder_forward.1} parent=40 // pred_fallthru
      _
  $region41: #{spatial_encoder_forward.1} parent=0 // pred_fallthru
    _
  // Predicated region
  $region42: #{spatial_encoder_forward.1} parent=0 // pred_check
    %p42 = pneg %p38
  $region43: #{spatial_encoder_forward.1} parent=0 // pred_check_branch
    %44 = sbr.rel (%p42) target = $region45
  $region44: #{spatial_encoder_forward.1} parent=0 // pred_region
    %s45 = sshll.u32 1, 1024
    %s46 = ssub.s32 %s45, 1
    loop: start=0, step=1, limit=1
    $region46: #{spatial_encoder_forward.1} parent=44 // loop_pre_header
      _
    $region47: #{spatial_encoder_forward.1} parent=44 // loop_header
      %s48 = sphi 0, %s52
      %p49 = scmp.ge.s32.totalorder %s48, 1
      %s53 = sphi %s3, %s3
      %s54 = sphi [#allocation2], [#allocation2]
    $region48: #{spatial_encoder_forward.1} parent=44 // loop_header_branch
      %51 = sbr.rel (%p49) target = $region52
    $region49: #{spatial_encoder_forward.1} parent=44 // loop_body
      %v55 = vld [vmem:[%s53] sm:%s46]
      %56 = vst [vmem:[%s54] sm:%s46] %v55
    $region50: #{spatial_encoder_forward.1} parent=44 // loop_footer
      %s52 = sadd.s32 1, %s48
    $region51: #{spatial_encoder_forward.1} parent=44 // loop_footer_branch
      %47 = sbr.rel target = $region47
    $region52: #{spatial_encoder_forward.1} parent=44 // loop_exit
      _
  $region45: #{spatial_encoder_forward.1} parent=0 // pred_fallthru
    _
  // Predicated region
  $region68: #{spatial_encoder_forward.1} parent=0 // pred_check
    _
  $region69: #{spatial_encoder_forward.1} parent=0 // pred_check_branch
    %332 = sbr.rel (0) target = $region71
  $region70: #{spatial_encoder_forward.1} parent=0 // pred_region
    %333 = vsyncadd [#allocation6], 16384
  $region71: #{spatial_encoder_forward.1} parent=0 // pred_fallthru
    _
  %s334 = scalar_lea.sflag [#allocation6], 1
  %p336 = scmp.lt.u32.totalorder 1024, 8
  %p337 = pneg %p336
  // Predicated region
  $region72: #{spatial_encoder_forward.1} parent=0 // pred_check
    _
  $region73: #{spatial_encoder_forward.1} parent=0 // pred_check_branch
    %339 = sbr.rel (%p336) target = $region75
  $region74: #{spatial_encoder_forward.1} parent=0 // pred_region
    %s355 = sand.u32 1024, 7
    %p356 = scmp.eq.s32.totalorder %s355, 0
    // Predicated region
    $region87: #{spatial_encoder_forward.1} parent=74 // pred_check
      %p357 = pneg %p356
    $region88: #{spatial_encoder_forward.1} parent=74 // pred_check_branch
      %359 = sbr.rel (%p357) target = $region90
    $region89: #{spatial_encoder_forward.1} parent=74 // pred_region
      loop: start=0, step=1, limit=1
      $region91: #{spatial_encoder_forward.1} parent=89 // loop_pre_header
        _
      $region92: #{spatial_encoder_forward.1} parent=89 // loop_header
        %s361 = sphi 0, %s365
        %p362 = scmp.ge.s32.totalorder %s361, 1
        %s366 = sphi %s4, %s4
        %s367 = sphi [#allocation3], [#allocation3]
      $region93: #{spatial_encoder_forward.1} parent=89 // loop_header_branch
        %364 = sbr.rel (%p362) target = $region97
      $region94: #{spatial_encoder_forward.1} parent=89 // loop_body
        %v368 = vld [vmem:[%s366] sm:$0xff]
        %369 = vst [vmem:[%s367] sm:$0xff] %v368
        %v370 = vld [vmem:[%s366 + $0x8] sm:$0xff]
        %371 = vst [vmem:[%s367 + $0x8] sm:$0xff] %v370
        %v372 = vld [vmem:[%s366 + $0x10] sm:$0xff]
        %373 = vst [vmem:[%s367 + $0x10] sm:$0xff] %v372
        %v374 = vld [vmem:[%s366 + $0x18] sm:$0xff]
        %375 = vst [vmem:[%s367 + $0x18] sm:$0xff] %v374
        %v376 = vld [vmem:[%s366 + $0x20] sm:$0xff]
        %377 = vst [vmem:[%s367 + $0x20] sm:$0xff] %v376
        %v378 = vld [vmem:[%s366 + $0x28] sm:$0xff]
        %379 = vst [vmem:[%s367 + $0x28] sm:$0xff] %v378
        %v380 = vld [vmem:[%s366 + $0x30] sm:$0xff]
        %381 = vst [vmem:[%s367 + $0x30] sm:$0xff] %v380
        %v382 = vld [vmem:[%s366 + $0x38] sm:$0xff]
        %383 = vst [vmem:[%s367 + $0x38] sm:$0xff] %v382
        %v384 = vld [vmem:[%s366 + $0x40] sm:$0xff]
        %385 = vst [vmem:[%s367 + $0x40] sm:$0xff] %v384
        %v386 = vld [vmem:[%s366 + $0x48] sm:$0xff]
        %387 = vst [vmem:[%s367 + $0x48] sm:$0xff] %v386
        %v388 = vld [vmem:[%s366 + $0x50] sm:$0xff]
        %389 = vst [vmem:[%s367 + $0x50] sm:$0xff] %v388
        %v390 = vld [vmem:[%s366 + $0x58] sm:$0xff]
        %391 = vst [vmem:[%s367 + $0x58] sm:$0xff] %v390
        %v392 = vld [vmem:[%s366 + $0x60] sm:$0xff]
        %393 = vst [vmem:[%s367 + $0x60] sm:$0xff] %v392
        %v394 = vld [vmem:[%s366 + $0x68] sm:$0xff]
        %395 = vst [vmem:[%s367 + $0x68] sm:$0xff] %v394
        %v396 = vld [vmem:[%s366 + $0x70] sm:$0xff]
        %397 = vst [vmem:[%s367 + $0x70] sm:$0xff] %v396
        %v398 = vld [vmem:[%s366 + $0x78] sm:$0xff]
        %399 = vst [vmem:[%s367 + $0x78] sm:$0xff] %v398
        %v400 = vld [vmem:[%s366 + $0x80] sm:$0xff]
        %401 = vst [vmem:[%s367 + $0x80] sm:$0xff] %v400
        %v402 = vld [vmem:[%s366 + $0x88] sm:$0xff]
        %403 = vst [vmem:[%s367 + $0x88] sm:$0xff] %v402
        %v404 = vld [vmem:[%s366 + $0x90] sm:$0xff]
        %405 = vst [vmem:[%s367 + $0x90] sm:$0xff] %v404
        %v406 = vld [vmem:[%s366 + $0x98] sm:$0xff]
        %407 = vst [vmem:[%s367 + $0x98] sm:$0xff] %v406
        %v408 = vld [vmem:[%s366 + $0xa0] sm:$0xff]
        %409 = vst [vmem:[%s367 + $0xa0] sm:$0xff] %v408
        %v410 = vld [vmem:[%s366 + $0xa8] sm:$0xff]
        %411 = vst [vmem:[%s367 + $0xa8] sm:$0xff] %v410
        %v412 = vld [vmem:[%s366 + $0xb0] sm:$0xff]
        %413 = vst [vmem:[%s367 + $0xb0] sm:$0xff] %v412
        %v414 = vld [vmem:[%s366 + $0xb8] sm:$0xff]
        %415 = vst [vmem:[%s367 + $0xb8] sm:$0xff] %v414
        %v416 = vld [vmem:[%s366 + $0xc0] sm:$0xff]
        %417 = vst [vmem:[%s367 + $0xc0] sm:$0xff] %v416
        %v418 = vld [vmem:[%s366 + $0xc8] sm:$0xff]
        %419 = vst [vmem:[%s367 + $0xc8] sm:$0xff] %v418
        %v420 = vld [vmem:[%s366 + $0xd0] sm:$0xff]
        %421 = vst [vmem:[%s367 + $0xd0] sm:$0xff] %v420
        %v422 = vld [vmem:[%s366 + $0xd8] sm:$0xff]
        %423 = vst [vmem:[%s367 + $0xd8] sm:$0xff] %v422
        %v424 = vld [vmem:[%s366 + $0xe0] sm:$0xff]
        %425 = vst [vmem:[%s367 + $0xe0] sm:$0xff] %v424
        %v426 = vld [vmem:[%s366 + $0xe8] sm:$0xff]
        %427 = vst [vmem:[%s367 + $0xe8] sm:$0xff] %v426
        %v428 = vld [vmem:[%s366 + $0xf0] sm:$0xff]
        %429 = vst [vmem:[%s367 + $0xf0] sm:$0xff] %v428
        %v430 = vld [vmem:[%s366 + $0xf8] sm:$0xff]
        %431 = vst [vmem:[%s367 + $0xf8] sm:$0xff] %v430
        %v432 = vld [vmem:[%s366 + $0x100] sm:$0xff]
        %433 = vst [vmem:[%s367 + $0x100] sm:$0xff] %v432
        %v434 = vld [vmem:[%s366 + $0x108] sm:$0xff]
        %435 = vst [vmem:[%s367 + $0x108] sm:$0xff] %v434
        %v436 = vld [vmem:[%s366 + $0x110] sm:$0xff]
        %437 = vst [vmem:[%s367 + $0x110] sm:$0xff] %v436
        %v438 = vld [vmem:[%s366 + $0x118] sm:$0xff]
        %439 = vst [vmem:[%s367 + $0x118] sm:$0xff] %v438
        %v440 = vld [vmem:[%s366 + $0x120] sm:$0xff]
        %441 = vst [vmem:[%s367 + $0x120] sm:$0xff] %v440
        %v442 = vld [vmem:[%s366 + $0x128] sm:$0xff]
        %443 = vst [vmem:[%s367 + $0x128] sm:$0xff] %v442
        %v444 = vld [vmem:[%s366 + $0x130] sm:$0xff]
        %445 = vst [vmem:[%s367 + $0x130] sm:$0xff] %v444
        %v446 = vld [vmem:[%s366 + $0x138] sm:$0xff]
        %447 = vst [vmem:[%s367 + $0x138] sm:$0xff] %v446
        %v448 = vld [vmem:[%s366 + $0x140] sm:$0xff]
        %449 = vst [vmem:[%s367 + $0x140] sm:$0xff] %v448
        %v450 = vld [vmem:[%s366 + $0x148] sm:$0xff]
        %451 = vst [vmem:[%s367 + $0x148] sm:$0xff] %v450
        %v452 = vld [vmem:[%s366 + $0x150] sm:$0xff]
        %453 = vst [vmem:[%s367 + $0x150] sm:$0xff] %v452
        %v454 = vld [vmem:[%s366 + $0x158] sm:$0xff]
        %455 = vst [vmem:[%s367 + $0x158] sm:$0xff] %v454
        %v456 = vld [vmem:[%s366 + $0x160] sm:$0xff]
        %457 = vst [vmem:[%s367 + $0x160] sm:$0xff] %v456
        %v458 = vld [vmem:[%s366 + $0x168] sm:$0xff]
        %459 = vst [vmem:[%s367 + $0x168] sm:$0xff] %v458
        %v460 = vld [vmem:[%s366 + $0x170] sm:$0xff]
        %461 = vst [vmem:[%s367 + $0x170] sm:$0xff] %v460
        %v462 = vld [vmem:[%s366 + $0x178] sm:$0xff]
        %463 = vst [vmem:[%s367 + $0x178] sm:$0xff] %v462
        %v464 = vld [vmem:[%s366 + $0x180] sm:$0xff]
        %465 = vst [vmem:[%s367 + $0x180] sm:$0xff] %v464
        %v466 = vld [vmem:[%s366 + $0x188] sm:$0xff]
        %467 = vst [vmem:[%s367 + $0x188] sm:$0xff] %v466
        %v468 = vld [vmem:[%s366 + $0x190] sm:$0xff]
        %469 = vst [vmem:[%s367 + $0x190] sm:$0xff] %v468
        %v470 = vld [vmem:[%s366 + $0x198] sm:$0xff]
        %471 = vst [vmem:[%s367 + $0x198] sm:$0xff] %v470
        %v472 = vld [vmem:[%s366 + $0x1a0] sm:$0xff]
        %473 = vst [vmem:[%s367 + $0x1a0] sm:$0xff] %v472
        %v474 = vld [vmem:[%s366 + $0x1a8] sm:$0xff]
        %475 = vst [vmem:[%s367 + $0x1a8] sm:$0xff] %v474
        %v476 = vld [vmem:[%s366 + $0x1b0] sm:$0xff]
        %477 = vst [vmem:[%s367 + $0x1b0] sm:$0xff] %v476
        %v478 = vld [vmem:[%s366 + $0x1b8] sm:$0xff]
        %479 = vst [vmem:[%s367 + $0x1b8] sm:$0xff] %v478
        %v480 = vld [vmem:[%s366 + $0x1c0] sm:$0xff]
        %481 = vst [vmem:[%s367 + $0x1c0] sm:$0xff] %v480
        %v482 = vld [vmem:[%s366 + $0x1c8] sm:$0xff]
        %483 = vst [vmem:[%s367 + $0x1c8] sm:$0xff] %v482
        %v484 = vld [vmem:[%s366 + $0x1d0] sm:$0xff]
        %485 = vst [vmem:[%s367 + $0x1d0] sm:$0xff] %v484
        %v486 = vld [vmem:[%s366 + $0x1d8] sm:$0xff]
        %487 = vst [vmem:[%s367 + $0x1d8] sm:$0xff] %v486
        %v488 = vld [vmem:[%s366 + $0x1e0] sm:$0xff]
        %489 = vst [vmem:[%s367 + $0x1e0] sm:$0xff] %v488
        %v490 = vld [vmem:[%s366 + $0x1e8] sm:$0xff]
        %491 = vst [vmem:[%s367 + $0x1e8] sm:$0xff] %v490
        %v492 = vld [vmem:[%s366 + $0x1f0] sm:$0xff]
        %493 = vst [vmem:[%s367 + $0x1f0] sm:$0xff] %v492
        %v494 = vld [vmem:[%s366 + $0x1f8] sm:$0xff]
        %495 = vst [vmem:[%s367 + $0x1f8] sm:$0xff] %v494
        %v496 = vld [vmem:[%s366 + $0x200] sm:$0xff]
        %497 = vst [vmem:[%s367 + $0x200] sm:$0xff] %v496
        %v498 = vld [vmem:[%s366 + $0x208] sm:$0xff]
        %499 = vst [vmem:[%s367 + $0x208] sm:$0xff] %v498
        %v500 = vld [vmem:[%s366 + $0x210] sm:$0xff]
        %501 = vst [vmem:[%s367 + $0x210] sm:$0xff] %v500
        %v502 = vld [vmem:[%s366 + $0x218] sm:$0xff]
        %503 = vst [vmem:[%s367 + $0x218] sm:$0xff] %v502
        %v504 = vld [vmem:[%s366 + $0x220] sm:$0xff]
        %505 = vst [vmem:[%s367 + $0x220] sm:$0xff] %v504
        %v506 = vld [vmem:[%s366 + $0x228] sm:$0xff]
        %507 = vst [vmem:[%s367 + $0x228] sm:$0xff] %v506
        %v508 = vld [vmem:[%s366 + $0x230] sm:$0xff]
        %509 = vst [vmem:[%s367 + $0x230] sm:$0xff] %v508
        %v510 = vld [vmem:[%s366 + $0x238] sm:$0xff]
        %511 = vst [vmem:[%s367 + $0x238] sm:$0xff] %v510
        %v512 = vld [vmem:[%s366 + $0x240] sm:$0xff]
        %513 = vst [vmem:[%s367 + $0x240] sm:$0xff] %v512
        %v514 = vld [vmem:[%s366 + $0x248] sm:$0xff]
        %515 = vst [vmem:[%s367 + $0x248] sm:$0xff] %v514
        %v516 = vld [vmem:[%s366 + $0x250] sm:$0xff]
        %517 = vst [vmem:[%s367 + $0x250] sm:$0xff] %v516
        %v518 = vld [vmem:[%s366 + $0x258] sm:$0xff]
        %519 = vst [vmem:[%s367 + $0x258] sm:$0xff] %v518
        %v520 = vld [vmem:[%s366 + $0x260] sm:$0xff]
        %521 = vst [vmem:[%s367 + $0x260] sm:$0xff] %v520
        %v522 = vld [vmem:[%s366 + $0x268] sm:$0xff]
        %523 = vst [vmem:[%s367 + $0x268] sm:$0xff] %v522
        %v524 = vld [vmem:[%s366 + $0x270] sm:$0xff]
        %525 = vst [vmem:[%s367 + $0x270] sm:$0xff] %v524
        %v526 = vld [vmem:[%s366 + $0x278] sm:$0xff]
        %527 = vst [vmem:[%s367 + $0x278] sm:$0xff] %v526
        %v528 = vld [vmem:[%s366 + $0x280] sm:$0xff]
        %529 = vst [vmem:[%s367 + $0x280] sm:$0xff] %v528
        %v530 = vld [vmem:[%s366 + $0x288] sm:$0xff]
        %531 = vst [vmem:[%s367 + $0x288] sm:$0xff] %v530
        %v532 = vld [vmem:[%s366 + $0x290] sm:$0xff]
        %533 = vst [vmem:[%s367 + $0x290] sm:$0xff] %v532
        %v534 = vld [vmem:[%s366 + $0x298] sm:$0xff]
        %535 = vst [vmem:[%s367 + $0x298] sm:$0xff] %v534
        %v536 = vld [vmem:[%s366 + $0x2a0] sm:$0xff]
        %537 = vst [vmem:[%s367 + $0x2a0] sm:$0xff] %v536
        %v538 = vld [vmem:[%s366 + $0x2a8] sm:$0xff]
        %539 = vst [vmem:[%s367 + $0x2a8] sm:$0xff] %v538
        %v540 = vld [vmem:[%s366 + $0x2b0] sm:$0xff]
        %541 = vst [vmem:[%s367 + $0x2b0] sm:$0xff] %v540
        %v542 = vld [vmem:[%s366 + $0x2b8] sm:$0xff]
        %543 = vst [vmem:[%s367 + $0x2b8] sm:$0xff] %v542
        %v544 = vld [vmem:[%s366 + $0x2c0] sm:$0xff]
        %545 = vst [vmem:[%s367 + $0x2c0] sm:$0xff] %v544
        %v546 = vld [vmem:[%s366 + $0x2c8] sm:$0xff]
        %547 = vst [vmem:[%s367 + $0x2c8] sm:$0xff] %v546
        %v548 = vld [vmem:[%s366 + $0x2d0] sm:$0xff]
        %549 = vst [vmem:[%s367 + $0x2d0] sm:$0xff] %v548
        %v550 = vld [vmem:[%s366 + $0x2d8] sm:$0xff]
        %551 = vst [vmem:[%s367 + $0x2d8] sm:$0xff] %v550
        %v552 = vld [vmem:[%s366 + $0x2e0] sm:$0xff]
        %553 = vst [vmem:[%s367 + $0x2e0] sm:$0xff] %v552
        %v554 = vld [vmem:[%s366 + $0x2e8] sm:$0xff]
        %555 = vst [vmem:[%s367 + $0x2e8] sm:$0xff] %v554
        %v556 = vld [vmem:[%s366 + $0x2f0] sm:$0xff]
        %557 = vst [vmem:[%s367 + $0x2f0] sm:$0xff] %v556
        %v558 = vld [vmem:[%s366 + $0x2f8] sm:$0xff]
        %559 = vst [vmem:[%s367 + $0x2f8] sm:$0xff] %v558
        %v560 = vld [vmem:[%s366 + $0x300] sm:$0xff]
        %561 = vst [vmem:[%s367 + $0x300] sm:$0xff] %v560
        %v562 = vld [vmem:[%s366 + $0x308] sm:$0xff]
        %563 = vst [vmem:[%s367 + $0x308] sm:$0xff] %v562
        %v564 = vld [vmem:[%s366 + $0x310] sm:$0xff]
        %565 = vst [vmem:[%s367 + $0x310] sm:$0xff] %v564
        %v566 = vld [vmem:[%s366 + $0x318] sm:$0xff]
        %567 = vst [vmem:[%s367 + $0x318] sm:$0xff] %v566
        %v568 = vld [vmem:[%s366 + $0x320] sm:$0xff]
        %569 = vst [vmem:[%s367 + $0x320] sm:$0xff] %v568
        %v570 = vld [vmem:[%s366 + $0x328] sm:$0xff]
        %571 = vst [vmem:[%s367 + $0x328] sm:$0xff] %v570
        %v572 = vld [vmem:[%s366 + $0x330] sm:$0xff]
        %573 = vst [vmem:[%s367 + $0x330] sm:$0xff] %v572
        %v574 = vld [vmem:[%s366 + $0x338] sm:$0xff]
        %575 = vst [vmem:[%s367 + $0x338] sm:$0xff] %v574
        %v576 = vld [vmem:[%s366 + $0x340] sm:$0xff]
        %577 = vst [vmem:[%s367 + $0x340] sm:$0xff] %v576
        %v578 = vld [vmem:[%s366 + $0x348] sm:$0xff]
        %579 = vst [vmem:[%s367 + $0x348] sm:$0xff] %v578
        %v580 = vld [vmem:[%s366 + $0x350] sm:$0xff]
        %581 = vst [vmem:[%s367 + $0x350] sm:$0xff] %v580
        %v582 = vld [vmem:[%s366 + $0x358] sm:$0xff]
        %583 = vst [vmem:[%s367 + $0x358] sm:$0xff] %v582
        %v584 = vld [vmem:[%s366 + $0x360] sm:$0xff]
        %585 = vst [vmem:[%s367 + $0x360] sm:$0xff] %v584
        %v586 = vld [vmem:[%s366 + $0x368] sm:$0xff]
        %587 = vst [vmem:[%s367 + $0x368] sm:$0xff] %v586
        %v588 = vld [vmem:[%s366 + $0x370] sm:$0xff]
        %589 = vst [vmem:[%s367 + $0x370] sm:$0xff] %v588
        %v590 = vld [vmem:[%s366 + $0x378] sm:$0xff]
        %591 = vst [vmem:[%s367 + $0x378] sm:$0xff] %v590
        %v592 = vld [vmem:[%s366 + $0x380] sm:$0xff]
        %593 = vst [vmem:[%s367 + $0x380] sm:$0xff] %v592
        %v594 = vld [vmem:[%s366 + $0x388] sm:$0xff]
        %595 = vst [vmem:[%s367 + $0x388] sm:$0xff] %v594
        %v596 = vld [vmem:[%s366 + $0x390] sm:$0xff]
        %597 = vst [vmem:[%s367 + $0x390] sm:$0xff] %v596
        %v598 = vld [vmem:[%s366 + $0x398] sm:$0xff]
        %599 = vst [vmem:[%s367 + $0x398] sm:$0xff] %v598
        %v600 = vld [vmem:[%s366 + $0x3a0] sm:$0xff]
        %601 = vst [vmem:[%s367 + $0x3a0] sm:$0xff] %v600
        %v602 = vld [vmem:[%s366 + $0x3a8] sm:$0xff]
        %603 = vst [vmem:[%s367 + $0x3a8] sm:$0xff] %v602
        %v604 = vld [vmem:[%s366 + $0x3b0] sm:$0xff]
        %605 = vst [vmem:[%s367 + $0x3b0] sm:$0xff] %v604
        %v606 = vld [vmem:[%s366 + $0x3b8] sm:$0xff]
        %607 = vst [vmem:[%s367 + $0x3b8] sm:$0xff] %v606
        %v608 = vld [vmem:[%s366 + $0x3c0] sm:$0xff]
        %609 = vst [vmem:[%s367 + $0x3c0] sm:$0xff] %v608
        %v610 = vld [vmem:[%s366 + $0x3c8] sm:$0xff]
        %611 = vst [vmem:[%s367 + $0x3c8] sm:$0xff] %v610
        %v612 = vld [vmem:[%s366 + $0x3d0] sm:$0xff]
        %613 = vst [vmem:[%s367 + $0x3d0] sm:$0xff] %v612
        %v614 = vld [vmem:[%s366 + $0x3d8] sm:$0xff]
        %615 = vst [vmem:[%s367 + $0x3d8] sm:$0xff] %v614
        %v616 = vld [vmem:[%s366 + $0x3e0] sm:$0xff]
        %617 = vst [vmem:[%s367 + $0x3e0] sm:$0xff] %v616
        %v618 = vld [vmem:[%s366 + $0x3e8] sm:$0xff]
        %619 = vst [vmem:[%s367 + $0x3e8] sm:$0xff] %v618
        %v620 = vld [vmem:[%s366 + $0x3f0] sm:$0xff]
        %621 = vst [vmem:[%s367 + $0x3f0] sm:$0xff] %v620
        %v622 = vld [vmem:[%s366 + $0x3f8] sm:$0xff]
        %623 = vst [vmem:[%s367 + $0x3f8] sm:$0xff] %v622
      $region95: #{spatial_encoder_forward.1} parent=89 // loop_footer
        %s365 = sadd.s32 1, %s361
      $region96: #{spatial_encoder_forward.1} parent=89 // loop_footer_branch
        %360 = sbr.rel target = $region92
      $region97: #{spatial_encoder_forward.1} parent=89 // loop_exit
        _
    $region90: #{spatial_encoder_forward.1} parent=74 // pred_fallthru
      _
    %p624 = pneg %p356
    // Predicated region
    $region98: #{spatial_encoder_forward.1} parent=74 // pred_check
      _
    $region99: #{spatial_encoder_forward.1} parent=74 // pred_check_branch
      %626 = sbr.rel (%p356) target = $region101
    $region100: #{spatial_encoder_forward.1} parent=74 // pred_region
      %s627 = sand.u32 1024, 7
    $region101: #{spatial_encoder_forward.1} parent=74 // pred_fallthru
      _
  $region75: #{spatial_encoder_forward.1} parent=0 // pred_fallthru
    _
  // Predicated region
  $region76: #{spatial_encoder_forward.1} parent=0 // pred_check
    %p340 = pneg %p336
  $region77: #{spatial_encoder_forward.1} parent=0 // pred_check_branch
    %342 = sbr.rel (%p340) target = $region79
  $region78: #{spatial_encoder_forward.1} parent=0 // pred_region
    %s343 = sshll.u32 1, 1024
    %s344 = ssub.s32 %s343, 1
    loop: start=0, step=1, limit=1
    $region80: #{spatial_encoder_forward.1} parent=78 // loop_pre_header
      _
    $region81: #{spatial_encoder_forward.1} parent=78 // loop_header
      %s346 = sphi 0, %s350
      %p347 = scmp.ge.s32.totalorder %s346, 1
      %s351 = sphi %s4, %s4
      %s352 = sphi [#allocation3], [#allocation3]
    $region82: #{spatial_encoder_forward.1} parent=78 // loop_header_branch
      %349 = sbr.rel (%p347) target = $region86
    $region83: #{spatial_encoder_forward.1} parent=78 // loop_body
      %v353 = vld [vmem:[%s351] sm:%s344]
      %354 = vst [vmem:[%s352] sm:%s344] %v353
    $region84: #{spatial_encoder_forward.1} parent=78 // loop_footer
      %s350 = sadd.s32 1, %s346
    $region85: #{spatial_encoder_forward.1} parent=78 // loop_footer_branch
      %345 = sbr.rel target = $region81
    $region86: #{spatial_encoder_forward.1} parent=78 // loop_exit
      _
  $region79: #{spatial_encoder_forward.1} parent=0 // pred_fallthru
    _
  // Predicated region
  $region102: #{spatial_encoder_forward.1} parent=0 // pred_check
    _
  $region103: #{spatial_encoder_forward.1} parent=0 // pred_check_branch
    %630 = sbr.rel (0) target = $region105
  $region104: #{spatial_encoder_forward.1} parent=0 // pred_region
    %631 = vsyncadd %s334, 16384
  $region105: #{spatial_encoder_forward.1} parent=0 // pred_fallthru
    _
  %v632 = vld [vmem:[%s0] sm:$0xff]
  %v633 = vld [vmem:[%s0 + $0x8] sm:$0xff]
  %v634 = vld [vmem:[%s0 + $0x10] sm:$0xff]
  %v635 = vld [vmem:[%s0 + $0x18] sm:$0xff]
  %v636 = vld [vmem:[%s0 + $0x20] sm:$0xff]
  %v637 = vld [vmem:[%s0 + $0x28] sm:$0xff]
  %v638 = vld [vmem:[%s0 + $0x30] sm:$0xff]
  %v639 = vld [vmem:[%s0 + $0x38] sm:$0xff]
  %v640 = vld [vmem:[%s0 + $0x40] sm:$0xff]
  %v641 = vld [vmem:[%s0 + $0x48] sm:$0xff]
  %v642 = vld [vmem:[%s0 + $0x50] sm:$0xff]
  %v643 = vld [vmem:[%s0 + $0x58] sm:$0xff]
  %v644 = vld [vmem:[%s0 + $0x60] sm:$0xff]
  %v645 = vld [vmem:[%s0 + $0x68] sm:$0xff]
  %v646 = vld [vmem:[%s0 + $0x70] sm:$0xff]
  %v647 = vld [vmem:[%s0 + $0x78] sm:$0xff]
  %v648 = vld [vmem:[%s0 + $0x80] sm:$0xff]
  %v649 = vld [vmem:[%s0 + $0x88] sm:$0xff]
  %v650 = vld [vmem:[%s0 + $0x90] sm:$0xff]
  %v651 = vld [vmem:[%s0 + $0x98] sm:$0xff]
  %v652 = vld [vmem:[%s0 + $0xa0] sm:$0xff]
  %v653 = vld [vmem:[%s0 + $0xa8] sm:$0xff]
  %v654 = vld [vmem:[%s0 + $0xb0] sm:$0xff]
  %v655 = vld [vmem:[%s0 + $0xb8] sm:$0xff]
  %v656 = vld [vmem:[%s0 + $0xc0] sm:$0xff]
  %v657 = vld [vmem:[%s0 + $0xc8] sm:$0xff]
  %v658 = vld [vmem:[%s0 + $0xd0] sm:$0xff]
  %v659 = vld [vmem:[%s0 + $0xd8] sm:$0xff]
  %v660 = vld [vmem:[%s0 + $0xe0] sm:$0xff]
  %v661 = vld [vmem:[%s0 + $0xe8] sm:$0xff]
  %v662 = vld [vmem:[%s0 + $0xf0] sm:$0xff]
  %v663 = vld [vmem:[%s0 + $0xf8] sm:$0xff]
  %v664 = vpack.c.bf16 %v633, %v632
  %v665 = vpack.c.bf16 %v635, %v634
  %v666 = vpack.c.bf16 %v637, %v636
  %v667 = vpack.c.bf16 %v639, %v638
  %v668 = vpack.c.bf16 %v641, %v640
  %v669 = vpack.c.bf16 %v643, %v642
  %v670 = vpack.c.bf16 %v645, %v644
  %v671 = vpack.c.bf16 %v647, %v646
  %v672 = vpack.c.bf16 %v649, %v648
  %v673 = vpack.c.bf16 %v651, %v650
  %v674 = vpack.c.bf16 %v653, %v652
  %v675 = vpack.c.bf16 %v655, %v654
  %v676 = vpack.c.bf16 %v657, %v656
  %v677 = vpack.c.bf16 %v659, %v658
  %v678 = vpack.c.bf16 %v661, %v660
  %v679 = vpack.c.bf16 %v663, %v662
  %v680 = vld [vmem:[%s1] sm:$0xf]
  %v681 = vld [vmem:[%s2] sm:$0x1]
  %v683 = vlaneseq
  %v684 = vshrl.u32 %v683, 7
  %v685 = vsub.s32 0, %v684
  %v686 = vrot.slane %v681, %v685
  %vm688 = vcmask 64512
  %v690 = vsel %vm688, %v664, 0
  %v693 = vsel %vm688, %v665, 0
  %v696 = vsel %vm688, %v666, 0
  %v699 = vsel %vm688, %v667, 0
  %v702 = vsel %vm688, %v668, 0
  %v705 = vsel %vm688, %v669, 0
  %v708 = vsel %vm688, %v670, 0
  %v711 = vsel %vm688, %v671, 0
  %v714 = vsel %vm688, %v672, 0
  %v717 = vsel %vm688, %v673, 0
  %v720 = vsel %vm688, %v674, 0
  %v723 = vsel %vm688, %v675, 0
  %v726 = vsel %vm688, %v676, 0
  %v729 = vsel %vm688, %v677, 0
  %v732 = vsel %vm688, %v678, 0
  %v735 = vsel %vm688, %v679, 0
  %vm737 = vcmask 1043456
  %v739 = vsel %vm737, %v680, 0
  %741 = vmatprep.subr.bf16.mxu0 0
  %742 = vmatpush1.bf16.msra.mxu0 0
  %743 = vmatprep.subr.bf16.mxu0 0
  %744 = vmatpush1.bf16.msra.mxu0 0
  %745 = vmatprep.subr.bf16.mxu0 0
  %746 = vmatpush1.bf16.msra.mxu0 0
  %747 = vmatprep.subr.bf16.mxu0 0
  %748 = vmatpush1.bf16.msra.mxu0 0
  %749 = vmatprep.subr.bf16.mxu0 0
  %750 = vmatpush1.bf16.msra.mxu0 0
  %751 = vmatprep.subr.bf16.mxu0 0
  %752 = vmatpush1.bf16.msra.mxu0 0
  %753 = vmatprep.subr.bf16.mxu0 0
  %754 = vmatpush1.bf16.msra.mxu0 0
  %755 = vmatprep.subr.bf16.mxu0 0
  %756 = vmatpush1.bf16.msra.mxu0 %v739
  %757 = vmatprep.subr.bf16.mxu0 0
  %758 = vmatpush2.bf16.msra.mxu0 0
  %759 = vmatprep.subr.bf16.mxu0 0
  %760 = vmatpush2.bf16.msra.mxu0 0
  %761 = vmatprep.subr.bf16.mxu0 0
  %762 = vmatpush2.bf16.msra.mxu0 0
  %763 = vmatprep.subr.bf16.mxu0 0
  %764 = vmatpush2.bf16.msra.mxu0 0
  %765 = vmatprep.subr.bf16.mxu0 0
  %766 = vmatpush2.bf16.msra.mxu0 0
  %767 = vmatprep.subr.bf16.mxu0 0
  %768 = vmatpush2.bf16.msra.mxu0 0
  %769 = vmatprep.subr.bf16.mxu0 0
  %770 = vmatpush2.bf16.msra.mxu0 0
  %771 = vmatprep.subr.bf16.mxu0 0
  %772 = vmatpush2.bf16.msra.mxu0 0
  %773 = vmatprep.mubr.bf16.mxu0 0
  %774 = vmatmul.mubr.bf16.gmra.mxu0 %v690
  %v775 = vpop.f32.mrf.mxu0
  %v776 = vadd.f32 %v686, %v775
  %v777 = vpop.f32.mrf.mxu0
  %v778 = vpop.f32.mrf.mxu0
  %v779 = vadd.f32 %v686, %v778
  %v780 = vpop.f32.mrf.mxu0
  %781 = vmatprep.mubr.bf16.mxu0 0
  %782 = vmatmul.mubr.bf16.gmra.mxu0 %v693
  %v783 = vpop.f32.mrf.mxu0
  %v784 = vadd.f32 %v686, %v783
  %v785 = vpop.f32.mrf.mxu0
  %v786 = vpop.f32.mrf.mxu0
  %v787 = vadd.f32 %v686, %v786
  %v788 = vpop.f32.mrf.mxu0
  %789 = vmatprep.mubr.bf16.mxu0 0
  %790 = vmatmul.mubr.bf16.gmra.mxu0 %v696
  %v791 = vpop.f32.mrf.mxu0
  %v792 = vadd.f32 %v686, %v791
  %v793 = vpop.f32.mrf.mxu0
  %v794 = vpop.f32.mrf.mxu0
  %v795 = vadd.f32 %v686, %v794
  %v796 = vpop.f32.mrf.mxu0
  %797 = vmatprep.mubr.bf16.mxu0 0
  %798 = vmatmul.mubr.bf16.gmra.mxu0 %v699
  %v799 = vpop.f32.mrf.mxu0
  %v800 = vadd.f32 %v686, %v799
  %v801 = vpop.f32.mrf.mxu0
  %v802 = vpop.f32.mrf.mxu0
  %v803 = vadd.f32 %v686, %v802
  %v804 = vpop.f32.mrf.mxu0
  %805 = vmatprep.mubr.bf16.mxu0 0
  %806 = vmatmul.mubr.bf16.gmra.mxu0 %v702
  %v807 = vpop.f32.mrf.mxu0
  %v808 = vadd.f32 %v686, %v807
  %v809 = vpop.f32.mrf.mxu0
  %v810 = vpop.f32.mrf.mxu0
  %v811 = vadd.f32 %v686, %v810
  %v812 = vpop.f32.mrf.mxu0
  %813 = vmatprep.mubr.bf16.mxu0 0
  %814 = vmatmul.mubr.bf16.gmra.mxu0 %v705
  %v815 = vpop.f32.mrf.mxu0
  %v816 = vadd.f32 %v686, %v815
  %v817 = vpop.f32.mrf.mxu0
  %v818 = vpop.f32.mrf.mxu0
  %v819 = vadd.f32 %v686, %v818
  %v820 = vpop.f32.mrf.mxu0
  %821 = vmatprep.mubr.bf16.mxu0 0
  %822 = vmatmul.mubr.bf16.gmra.mxu0 %v708
  %v823 = vpop.f32.mrf.mxu0
  %v824 = vadd.f32 %v686, %v823
  %v825 = vpop.f32.mrf.mxu0
  %v826 = vpop.f32.mrf.mxu0
  %v827 = vadd.f32 %v686, %v826
  %v828 = vpop.f32.mrf.mxu0
  %829 = vmatprep.mubr.bf16.mxu0 0
  %830 = vmatmul.mubr.bf16.gmra.mxu0 %v711
  %v831 = vpop.f32.mrf.mxu0
  %v832 = vadd.f32 %v686, %v831
  %v833 = vpop.f32.mrf.mxu0
  %v834 = vpop.f32.mrf.mxu0
  %v835 = vadd.f32 %v686, %v834
  %v836 = vpop.f32.mrf.mxu0
  %837 = vmatprep.mubr.bf16.mxu0 0
  %838 = vmatmul.mubr.bf16.gmra.mxu0 %v714
  %v839 = vpop.f32.mrf.mxu0
  %v840 = vadd.f32 %v686, %v839
  %v841 = vpop.f32.mrf.mxu0
  %v842 = vpop.f32.mrf.mxu0
  %v843 = vadd.f32 %v686, %v842
  %v844 = vpop.f32.mrf.mxu0
  %845 = vmatprep.mubr.bf16.mxu0 0
  %846 = vmatmul.mubr.bf16.gmra.mxu0 %v717
  %v847 = vpop.f32.mrf.mxu0
  %v848 = vadd.f32 %v686, %v847
  %v849 = vpop.f32.mrf.mxu0
  %v850 = vpop.f32.mrf.mxu0
  %v851 = vadd.f32 %v686, %v850
  %v852 = vpop.f32.mrf.mxu0
  %853 = vmatprep.mubr.bf16.mxu0 0
  %854 = vmatmul.mubr.bf16.gmra.mxu0 %v720
  %v855 = vpop.f32.mrf.mxu0
  %v856 = vadd.f32 %v686, %v855
  %v857 = vpop.f32.mrf.mxu0
  %v858 = vpop.f32.mrf.mxu0
  %v859 = vadd.f32 %v686, %v858
  %v860 = vpop.f32.mrf.mxu0
  %861 = vmatprep.mubr.bf16.mxu0 0
  %862 = vmatmul.mubr.bf16.gmra.mxu0 %v723
  %v863 = vpop.f32.mrf.mxu0
  %v864 = vadd.f32 %v686, %v863
  %v865 = vpop.f32.mrf.mxu0
  %v866 = vpop.f32.mrf.mxu0
  %v867 = vadd.f32 %v686, %v866
  %v868 = vpop.f32.mrf.mxu0
  %869 = vmatprep.mubr.bf16.mxu0 0
  %870 = vmatmul.mubr.bf16.gmra.mxu0 %v726
  %v871 = vpop.f32.mrf.mxu0
  %v872 = vadd.f32 %v686, %v871
  %v873 = vpop.f32.mrf.mxu0
  %v874 = vpop.f32.mrf.mxu0
  %v875 = vadd.f32 %v686, %v874
  %v876 = vpop.f32.mrf.mxu0
  %877 = vmatprep.mubr.bf16.mxu0 0
  %878 = vmatmul.mubr.bf16.gmra.mxu0 %v729
  %v879 = vpop.f32.mrf.mxu0
  %v880 = vadd.f32 %v686, %v879
  %v881 = vpop.f32.mrf.mxu0
  %v882 = vpop.f32.mrf.mxu0
  %v883 = vadd.f32 %v686, %v882
  %v884 = vpop.f32.mrf.mxu0
  %885 = vmatprep.mubr.bf16.mxu0 0
  %886 = vmatmul.mubr.bf16.gmra.mxu0 %v732
  %v887 = vpop.f32.mrf.mxu0
  %v888 = vadd.f32 %v686, %v887
  %v889 = vpop.f32.mrf.mxu0
  %v890 = vpop.f32.mrf.mxu0
  %v891 = vadd.f32 %v686, %v890
  %v892 = vpop.f32.mrf.mxu0
  %893 = vmatprep.mubr.bf16.mxu0 0
  %894 = vmatmul.mubr.bf16.gmra.mxu0 %v735
  %v895 = vpop.f32.mrf.mxu0
  %v896 = vadd.f32 %v686, %v895
  %v897 = vpop.f32.mrf.mxu0
  %v898 = vpop.f32.mrf.mxu0
  %v899 = vadd.f32 %v686, %v898
  %v900 = vpop.f32.mrf.mxu0
  %901 = vdwg.mxu0
  %v902 = vmax.f32 %v776, 0.0
  %v903 = vmax.f32 %v779, 0.0
  %v904 = vmax.f32 %v784, 0.0
  %v905 = vmax.f32 %v787, 0.0
  %v906 = vmax.f32 %v792, 0.0
  %v907 = vmax.f32 %v795, 0.0
  %v908 = vmax.f32 %v800, 0.0
  %v909 = vmax.f32 %v803, 0.0
  %v910 = vmax.f32 %v808, 0.0
  %v911 = vmax.f32 %v811, 0.0
  %v912 = vmax.f32 %v816, 0.0
  %v913 = vmax.f32 %v819, 0.0
  %v914 = vmax.f32 %v824, 0.0
  %v915 = vmax.f32 %v827, 0.0
  %v916 = vmax.f32 %v832, 0.0
  %v917 = vmax.f32 %v835, 0.0
  %v918 = vmax.f32 %v840, 0.0
  %v919 = vmax.f32 %v843, 0.0
  %v920 = vmax.f32 %v848, 0.0
  %v921 = vmax.f32 %v851, 0.0
  %v922 = vmax.f32 %v856, 0.0
  %v923 = vmax.f32 %v859, 0.0
  %v924 = vmax.f32 %v864, 0.0
  %v925 = vmax.f32 %v867, 0.0
  %v926 = vmax.f32 %v872, 0.0
  %v927 = vmax.f32 %v875, 0.0
  %v928 = vmax.f32 %v880, 0.0
  %v929 = vmax.f32 %v883, 0.0
  %v930 = vmax.f32 %v888, 0.0
  %v931 = vmax.f32 %v891, 0.0
  %v932 = vmax.f32 %v896, 0.0
  %v933 = vmax.f32 %v899, 0.0
  %v934 = vpack.c.bf16 %v903, %v902
  %v935 = vpack.c.bf16 %v905, %v904
  %v936 = vpack.c.bf16 %v907, %v906
  %v937 = vpack.c.bf16 %v909, %v908
  %v938 = vpack.c.bf16 %v911, %v910
  %v939 = vpack.c.bf16 %v913, %v912
  %v940 = vpack.c.bf16 %v915, %v914
  %v941 = vpack.c.bf16 %v917, %v916
  %v942 = vpack.c.bf16 %v919, %v918
  %v943 = vpack.c.bf16 %v921, %v920
  %v944 = vpack.c.bf16 %v923, %v922
  %v945 = vpack.c.bf16 %v925, %v924
  %v946 = vpack.c.bf16 %v927, %v926
  %v947 = vpack.c.bf16 %v929, %v928
  %v948 = vpack.c.bf16 %v931, %v930
  %v949 = vpack.c.bf16 %v933, %v932
  %s950 = smul.u32 4, 128
  %s951 = smul.u32 %s950, 2
  %s952 = sshll.u32 %s951, 4
  %953 = dma.done [#allocation6], %s952
  %v954 = vld [vmem:[#allocation2] sm:$0xff]
  %v955 = vld [vmem:[#allocation2 + $0x8] sm:$0xff]
  %v956 = vld [vmem:[#allocation2 + $0x10] sm:$0xff]
  %v957 = vld [vmem:[#allocation2 + $0x18] sm:$0xff]
  %v958 = vld [vmem:[#allocation2 + $0x20] sm:$0xff]
  %v959 = vld [vmem:[#allocation2 + $0x28] sm:$0xff]
  %v960 = vld [vmem:[#allocation2 + $0x30] sm:$0xff]
  %v961 = vld [vmem:[#allocation2 + $0x38] sm:$0xff]
  %v962 = vld [vmem:[#allocation2 + $0x40] sm:$0xff]
  %v963 = vld [vmem:[#allocation2 + $0x48] sm:$0xff]
  %v964 = vld [vmem:[#allocation2 + $0x50] sm:$0xff]
  %v965 = vld [vmem:[#allocation2 + $0x58] sm:$0xff]
  %v966 = vld [vmem:[#allocation2 + $0x60] sm:$0xff]
  %v967 = vld [vmem:[#allocation2 + $0x68] sm:$0xff]
  %v968 = vld [vmem:[#allocation2 + $0x70] sm:$0xff]
  %v969 = vld [vmem:[#allocation2 + $0x78] sm:$0xff]
  %v970 = vld [vmem:[#allocation2 + $0x80] sm:$0xff]
  %v971 = vld [vmem:[#allocation2 + $0x88] sm:$0xff]
  %v972 = vld [vmem:[#allocation2 + $0x90] sm:$0xff]
  %v973 = vld [vmem:[#allocation2 + $0x98] sm:$0xff]
  %v974 = vld [vmem:[#allocation2 + $0xa0] sm:$0xff]
  %v975 = vld [vmem:[#allocation2 + $0xa8] sm:$0xff]
  %v976 = vld [vmem:[#allocation2 + $0xb0] sm:$0xff]
  %v977 = vld [vmem:[#allocation2 + $0xb8] sm:$0xff]
  %v978 = vld [vmem:[#allocation2 + $0xc0] sm:$0xff]
  %v979 = vld [vmem:[#allocation2 + $0xc8] sm:$0xff]
  %v980 = vld [vmem:[#allocation2 + $0xd0] sm:$0xff]
  %v981 = vld [vmem:[#allocation2 + $0xd8] sm:$0xff]
  %v982 = vld [vmem:[#allocation2 + $0xe0] sm:$0xff]
  %v983 = vld [vmem:[#allocation2 + $0xe8] sm:$0xff]
  %v984 = vld [vmem:[#allocation2 + $0xf0] sm:$0xff]
  %v985 = vld [vmem:[#allocation2 + $0xf8] sm:$0xff]
  %v986 = vld [vmem:[#allocation2 + $0x100] sm:$0xff]
  %v987 = vld [vmem:[#allocation2 + $0x108] sm:$0xff]
  %v988 = vld [vmem:[#allocation2 + $0x110] sm:$0xff]
  %v989 = vld [vmem:[#allocation2 + $0x118] sm:$0xff]
  %v990 = vld [vmem:[#allocation2 + $0x120] sm:$0xff]
  %v991 = vld [vmem:[#allocation2 + $0x128] sm:$0xff]
  %v992 = vld [vmem:[#allocation2 + $0x130] sm:$0xff]
  %v993 = vld [vmem:[#allocation2 + $0x138] sm:$0xff]
  %v994 = vld [vmem:[#allocation2 + $0x140] sm:$0xff]
  %v995 = vld [vmem:[#allocation2 + $0x148] sm:$0xff]
  %v996 = vld [vmem:[#allocation2 + $0x150] sm:$0xff]
  %v997 = vld [vmem:[#allocation2 + $0x158] sm:$0xff]
  %v998 = vld [vmem:[#allocation2 + $0x160] sm:$0xff]
  %v999 = vld [vmem:[#allocation2 + $0x168] sm:$0xff]
  %v1000 = vld [vmem:[#allocation2 + $0x170] sm:$0xff]
  %v1001 = vld [vmem:[#allocation2 + $0x178] sm:$0xff]
  %v1002 = vld [vmem:[#allocation2 + $0x180] sm:$0xff]
  %v1003 = vld [vmem:[#allocation2 + $0x188] sm:$0xff]
  %v1004 = vld [vmem:[#allocation2 + $0x190] sm:$0xff]
  %v1005 = vld [vmem:[#allocation2 + $0x198] sm:$0xff]
  %v1006 = vld [vmem:[#allocation2 + $0x1a0] sm:$0xff]
  %v1007 = vld [vmem:[#allocation2 + $0x1a8] sm:$0xff]
  %v1008 = vld [vmem:[#allocation2 + $0x1b0] sm:$0xff]
  %v1009 = vld [vmem:[#allocation2 + $0x1b8] sm:$0xff]
  %v1010 = vld [vmem:[#allocation2 + $0x1c0] sm:$0xff]
  %v1011 = vld [vmem:[#allocation2 + $0x1c8] sm:$0xff]
  %v1012 = vld [vmem:[#allocation2 + $0x1d0] sm:$0xff]
  %v1013 = vld [vmem:[#allocation2 + $0x1d8] sm:$0xff]
  %v1014 = vld [vmem:[#allocation2 + $0x1e0] sm:$0xff]
  %v1015 = vld [vmem:[#allocation2 + $0x1e8] sm:$0xff]
  %v1016 = vld [vmem:[#allocation2 + $0x1f0] sm:$0xff]
  %v1017 = vld [vmem:[#allocation2 + $0x1f8] sm:$0xff]
  %v1018 = vld [vmem:[#allocation2 + $0x200] sm:$0xff]
  %v1019 = vld [vmem:[#allocation2 + $0x208] sm:$0xff]
  %v1020 = vld [vmem:[#allocation2 + $0x210] sm:$0xff]
  %v1021 = vld [vmem:[#allocation2 + $0x218] sm:$0xff]
  %v1022 = vld [vmem:[#allocation2 + $0x220] sm:$0xff]
  %v1023 = vld [vmem:[#allocation2 + $0x228] sm:$0xff]
  %v1024 = vld [vmem:[#allocation2 + $0x230] sm:$0xff]
  %v1025 = vld [vmem:[#allocation2 + $0x238] sm:$0xff]
  %v1026 = vld [vmem:[#allocation2 + $0x240] sm:$0xff]
  %v1027 = vld [vmem:[#allocation2 + $0x248] sm:$0xff]
  %v1028 = vld [vmem:[#allocation2 + $0x250] sm:$0xff]
  %v1029 = vld [vmem:[#allocation2 + $0x258] sm:$0xff]
  %v1030 = vld [vmem:[#allocation2 + $0x260] sm:$0xff]
  %v1031 = vld [vmem:[#allocation2 + $0x268] sm:$0xff]
  %v1032 = vld [vmem:[#allocation2 + $0x270] sm:$0xff]
  %v1033 = vld [vmem:[#allocation2 + $0x278] sm:$0xff]
  %v1034 = vld [vmem:[#allocation2 + $0x280] sm:$0xff]
  %v1035 = vld [vmem:[#allocation2 + $0x288] sm:$0xff]
  %v1036 = vld [vmem:[#allocation2 + $0x290] sm:$0xff]
  %v1037 = vld [vmem:[#allocation2 + $0x298] sm:$0xff]
  %v1038 = vld [vmem:[#allocation2 + $0x2a0] sm:$0xff]
  %v1039 = vld [vmem:[#allocation2 + $0x2a8] sm:$0xff]
  %v1040 = vld [vmem:[#allocation2 + $0x2b0] sm:$0xff]
  %v1041 = vld [vmem:[#allocation2 + $0x2b8] sm:$0xff]
  %v1042 = vld [vmem:[#allocation2 + $0x2c0] sm:$0xff]
  %v1043 = vld [vmem:[#allocation2 + $0x2c8] sm:$0xff]
  %v1044 = vld [vmem:[#allocation2 + $0x2d0] sm:$0xff]
  %v1045 = vld [vmem:[#allocation2 + $0x2d8] sm:$0xff]
  %v1046 = vld [vmem:[#allocation2 + $0x2e0] sm:$0xff]
  %v1047 = vld [vmem:[#allocation2 + $0x2e8] sm:$0xff]
  %v1048 = vld [vmem:[#allocation2 + $0x2f0] sm:$0xff]
  %v1049 = vld [vmem:[#allocation2 + $0x2f8] sm:$0xff]
  %v1050 = vld [vmem:[#allocation2 + $0x300] sm:$0xff]
  %v1051 = vld [vmem:[#allocation2 + $0x308] sm:$0xff]
  %v1052 = vld [vmem:[#allocation2 + $0x310] sm:$0xff]
  %v1053 = vld [vmem:[#allocation2 + $0x318] sm:$0xff]
  %v1054 = vld [vmem:[#allocation2 + $0x320] sm:$0xff]
  %v1055 = vld [vmem:[#allocation2 + $0x328] sm:$0xff]
  %v1056 = vld [vmem:[#allocation2 + $0x330] sm:$0xff]
  %v1057 = vld [vmem:[#allocation2 + $0x338] sm:$0xff]
  %v1058 = vld [vmem:[#allocation2 + $0x340] sm:$0xff]
  %v1059 = vld [vmem:[#allocation2 + $0x348] sm:$0xff]
  %v1060 = vld [vmem:[#allocation2 + $0x350] sm:$0xff]
  %v1061 = vld [vmem:[#allocation2 + $0x358] sm:$0xff]
  %v1062 = vld [vmem:[#allocation2 + $0x360] sm:$0xff]
  %v1063 = vld [vmem:[#allocation2 + $0x368] sm:$0xff]
  %v1064 = vld [vmem:[#allocation2 + $0x370] sm:$0xff]
  %v1065 = vld [vmem:[#allocation2 + $0x378] sm:$0xff]
  %v1066 = vld [vmem:[#allocation2 + $0x380] sm:$0xff]
  %v1067 = vld [vmem:[#allocation2 + $0x388] sm:$0xff]
  %v1068 = vld [vmem:[#allocation2 + $0x390] sm:$0xff]
  %v1069 = vld [vmem:[#allocation2 + $0x398] sm:$0xff]
  %v1070 = vld [vmem:[#allocation2 + $0x3a0] sm:$0xff]
  %v1071 = vld [vmem:[#allocation2 + $0x3a8] sm:$0xff]
  %v1072 = vld [vmem:[#allocation2 + $0x3b0] sm:$0xff]
  %v1073 = vld [vmem:[#allocation2 + $0x3b8] sm:$0xff]
  %v1074 = vld [vmem:[#allocation2 + $0x3c0] sm:$0xff]
  %v1075 = vld [vmem:[#allocation2 + $0x3c8] sm:$0xff]
  %v1076 = vld [vmem:[#allocation2 + $0x3d0] sm:$0xff]
  %v1077 = vld [vmem:[#allocation2 + $0x3d8] sm:$0xff]
  %v1078 = vld [vmem:[#allocation2 + $0x3e0] sm:$0xff]
  %v1079 = vld [vmem:[#allocation2 + $0x3e8] sm:$0xff]
  %v1080 = vld [vmem:[#allocation2 + $0x3f0] sm:$0xff]
  %v1081 = vld [vmem:[#allocation2 + $0x3f8] sm:$0xff]
  %v1210 = vunpack.c.l.b16 %v954
  %v1211 = vunpack.c.h.b16 %v954
  %v1212 = vunpack.c.l.b16 %v955
  %v1213 = vunpack.c.h.b16 %v955
  %v1214 = vunpack.c.l.b16 %v956
  %v1215 = vunpack.c.h.b16 %v956
  %v1216 = vunpack.c.l.b16 %v957
  %v1217 = vunpack.c.h.b16 %v957
  %v1218 = vunpack.c.l.b16 %v958
  %v1219 = vunpack.c.h.b16 %v958
  %v1220 = vunpack.c.l.b16 %v959
  %v1221 = vunpack.c.h.b16 %v959
  %v1222 = vunpack.c.l.b16 %v960
  %v1223 = vunpack.c.h.b16 %v960
  %v1224 = vunpack.c.l.b16 %v961
  %v1225 = vunpack.c.h.b16 %v961
  %v1226 = vunpack.c.l.b16 %v962
  %v1227 = vunpack.c.h.b16 %v962
  %v1228 = vunpack.c.l.b16 %v963
  %v1229 = vunpack.c.h.b16 %v963
  %v1230 = vunpack.c.l.b16 %v964
  %v1231 = vunpack.c.h.b16 %v964
  %v1232 = vunpack.c.l.b16 %v965
  %v1233 = vunpack.c.h.b16 %v965
  %v1234 = vunpack.c.l.b16 %v966
  %v1235 = vunpack.c.h.b16 %v966
  %v1236 = vunpack.c.l.b16 %v967
  %v1237 = vunpack.c.h.b16 %v967
  %v1238 = vunpack.c.l.b16 %v968
  %v1239 = vunpack.c.h.b16 %v968
  %v1240 = vunpack.c.l.b16 %v969
  %v1241 = vunpack.c.h.b16 %v969
  %v1242 = vunpack.c.l.b16 %v970
  %v1243 = vunpack.c.h.b16 %v970
  %v1244 = vunpack.c.l.b16 %v971
  %v1245 = vunpack.c.h.b16 %v971
  %v1246 = vunpack.c.l.b16 %v972
  %v1247 = vunpack.c.h.b16 %v972
  %v1248 = vunpack.c.l.b16 %v973
  %v1249 = vunpack.c.h.b16 %v973
  %v1250 = vunpack.c.l.b16 %v974
  %v1251 = vunpack.c.h.b16 %v974
  %v1252 = vunpack.c.l.b16 %v975
  %v1253 = vunpack.c.h.b16 %v975
  %v1254 = vunpack.c.l.b16 %v976
  %v1255 = vunpack.c.h.b16 %v976
  %v1256 = vunpack.c.l.b16 %v977
  %v1257 = vunpack.c.h.b16 %v977
  %v1258 = vunpack.c.l.b16 %v978
  %v1259 = vunpack.c.h.b16 %v978
  %v1260 = vunpack.c.l.b16 %v979
  %v1261 = vunpack.c.h.b16 %v979
  %v1262 = vunpack.c.l.b16 %v980
  %v1263 = vunpack.c.h.b16 %v980
  %v1264 = vunpack.c.l.b16 %v981
  %v1265 = vunpack.c.h.b16 %v981
  %v1266 = vunpack.c.l.b16 %v982
  %v1267 = vunpack.c.h.b16 %v982
  %v1268 = vunpack.c.l.b16 %v983
  %v1269 = vunpack.c.h.b16 %v983
  %v1270 = vunpack.c.l.b16 %v984
  %v1271 = vunpack.c.h.b16 %v984
  %v1272 = vunpack.c.l.b16 %v985
  %v1273 = vunpack.c.h.b16 %v985
  %v1274 = vunpack.c.l.b16 %v986
  %v1275 = vunpack.c.h.b16 %v986
  %v1276 = vunpack.c.l.b16 %v987
  %v1277 = vunpack.c.h.b16 %v987
  %v1278 = vunpack.c.l.b16 %v988
  %v1279 = vunpack.c.h.b16 %v988
  %v1280 = vunpack.c.l.b16 %v989
  %v1281 = vunpack.c.h.b16 %v989
  %v1282 = vunpack.c.l.b16 %v990
  %v1283 = vunpack.c.h.b16 %v990
  %v1284 = vunpack.c.l.b16 %v991
  %v1285 = vunpack.c.h.b16 %v991
  %v1286 = vunpack.c.l.b16 %v992
  %v1287 = vunpack.c.h.b16 %v992
  %v1288 = vunpack.c.l.b16 %v993
  %v1289 = vunpack.c.h.b16 %v993
  %v1290 = vunpack.c.l.b16 %v994
  %v1291 = vunpack.c.h.b16 %v994
  %v1292 = vunpack.c.l.b16 %v995
  %v1293 = vunpack.c.h.b16 %v995
  %v1294 = vunpack.c.l.b16 %v996
  %v1295 = vunpack.c.h.b16 %v996
  %v1296 = vunpack.c.l.b16 %v997
  %v1297 = vunpack.c.h.b16 %v997
  %v1298 = vunpack.c.l.b16 %v998
  %v1299 = vunpack.c.h.b16 %v998
  %v1300 = vunpack.c.l.b16 %v999
  %v1301 = vunpack.c.h.b16 %v999
  %v1302 = vunpack.c.l.b16 %v1000
  %v1303 = vunpack.c.h.b16 %v1000
  %v1304 = vunpack.c.l.b16 %v1001
  %v1305 = vunpack.c.h.b16 %v1001
  %v1306 = vunpack.c.l.b16 %v1002
  %v1307 = vunpack.c.h.b16 %v1002
  %v1308 = vunpack.c.l.b16 %v1003
  %v1309 = vunpack.c.h.b16 %v1003
  %v1310 = vunpack.c.l.b16 %v1004
  %v1311 = vunpack.c.h.b16 %v1004
  %v1312 = vunpack.c.l.b16 %v1005
  %v1313 = vunpack.c.h.b16 %v1005
  %v1314 = vunpack.c.l.b16 %v1006
  %v1315 = vunpack.c.h.b16 %v1006
  %v1316 = vunpack.c.l.b16 %v1007
  %v1317 = vunpack.c.h.b16 %v1007
  %v1318 = vunpack.c.l.b16 %v1008
  %v1319 = vunpack.c.h.b16 %v1008
  %v1320 = vunpack.c.l.b16 %v1009
  %v1321 = vunpack.c.h.b16 %v1009
  %v1322 = vunpack.c.l.b16 %v1010
  %v1323 = vunpack.c.h.b16 %v1010
  %v1324 = vunpack.c.l.b16 %v1011
  %v1325 = vunpack.c.h.b16 %v1011
  %v1326 = vunpack.c.l.b16 %v1012
  %v1327 = vunpack.c.h.b16 %v1012
  %v1328 = vunpack.c.l.b16 %v1013
  %v1329 = vunpack.c.h.b16 %v1013
  %v1330 = vunpack.c.l.b16 %v1014
  %v1331 = vunpack.c.h.b16 %v1014
  %v1332 = vunpack.c.l.b16 %v1015
  %v1333 = vunpack.c.h.b16 %v1015
  %v1334 = vunpack.c.l.b16 %v1016
  %v1335 = vunpack.c.h.b16 %v1016
  %v1336 = vunpack.c.l.b16 %v1017
  %v1337 = vunpack.c.h.b16 %v1017
  %v1338 = vunpack.c.l.b16 %v1018
  %v1339 = vunpack.c.h.b16 %v1018
  %v1340 = vunpack.c.l.b16 %v1019
  %v1341 = vunpack.c.h.b16 %v1019
  %v1342 = vunpack.c.l.b16 %v1020
  %v1343 = vunpack.c.h.b16 %v1020
  %v1344 = vunpack.c.l.b16 %v1021
  %v1345 = vunpack.c.h.b16 %v1021
  %v1346 = vunpack.c.l.b16 %v1022
  %v1347 = vunpack.c.h.b16 %v1022
  %v1348 = vunpack.c.l.b16 %v1023
  %v1349 = vunpack.c.h.b16 %v1023
  %v1350 = vunpack.c.l.b16 %v1024
  %v1351 = vunpack.c.h.b16 %v1024
  %v1352 = vunpack.c.l.b16 %v1025
  %v1353 = vunpack.c.h.b16 %v1025
  %v1354 = vunpack.c.l.b16 %v1026
  %v1355 = vunpack.c.h.b16 %v1026
  %v1356 = vunpack.c.l.b16 %v1027
  %v1357 = vunpack.c.h.b16 %v1027
  %v1358 = vunpack.c.l.b16 %v1028
  %v1359 = vunpack.c.h.b16 %v1028
  %v1360 = vunpack.c.l.b16 %v1029
  %v1361 = vunpack.c.h.b16 %v1029
  %v1362 = vunpack.c.l.b16 %v1030
  %v1363 = vunpack.c.h.b16 %v1030
  %v1364 = vunpack.c.l.b16 %v1031
  %v1365 = vunpack.c.h.b16 %v1031
  %v1366 = vunpack.c.l.b16 %v1032
  %v1367 = vunpack.c.h.b16 %v1032
  %v1368 = vunpack.c.l.b16 %v1033
  %v1369 = vunpack.c.h.b16 %v1033
  %v1370 = vunpack.c.l.b16 %v1034
  %v1371 = vunpack.c.h.b16 %v1034
  %v1372 = vunpack.c.l.b16 %v1035
  %v1373 = vunpack.c.h.b16 %v1035
  %v1374 = vunpack.c.l.b16 %v1036
  %v1375 = vunpack.c.h.b16 %v1036
  %v1376 = vunpack.c.l.b16 %v1037
  %v1377 = vunpack.c.h.b16 %v1037
  %v1378 = vunpack.c.l.b16 %v1038
  %v1379 = vunpack.c.h.b16 %v1038
  %v1380 = vunpack.c.l.b16 %v1039
  %v1381 = vunpack.c.h.b16 %v1039
  %v1382 = vunpack.c.l.b16 %v1040
  %v1383 = vunpack.c.h.b16 %v1040
  %v1384 = vunpack.c.l.b16 %v1041
  %v1385 = vunpack.c.h.b16 %v1041
  %v1386 = vunpack.c.l.b16 %v1042
  %v1387 = vunpack.c.h.b16 %v1042
  %v1388 = vunpack.c.l.b16 %v1043
  %v1389 = vunpack.c.h.b16 %v1043
  %v1390 = vunpack.c.l.b16 %v1044
  %v1391 = vunpack.c.h.b16 %v1044
  %v1392 = vunpack.c.l.b16 %v1045
  %v1393 = vunpack.c.h.b16 %v1045
  %v1394 = vunpack.c.l.b16 %v1046
  %v1395 = vunpack.c.h.b16 %v1046
  %v1396 = vunpack.c.l.b16 %v1047
  %v1397 = vunpack.c.h.b16 %v1047
  %v1398 = vunpack.c.l.b16 %v1048
  %v1399 = vunpack.c.h.b16 %v1048
  %v1400 = vunpack.c.l.b16 %v1049
  %v1401 = vunpack.c.h.b16 %v1049
  %v1402 = vunpack.c.l.b16 %v1050
  %v1403 = vunpack.c.h.b16 %v1050
  %v1404 = vunpack.c.l.b16 %v1051
  %v1405 = vunpack.c.h.b16 %v1051
  %v1406 = vunpack.c.l.b16 %v1052
  %v1407 = vunpack.c.h.b16 %v1052
  %v1408 = vunpack.c.l.b16 %v1053
  %v1409 = vunpack.c.h.b16 %v1053
  %v1410 = vunpack.c.l.b16 %v1054
  %v1411 = vunpack.c.h.b16 %v1054
  %v1412 = vunpack.c.l.b16 %v1055
  %v1413 = vunpack.c.h.b16 %v1055
  %v1414 = vunpack.c.l.b16 %v1056
  %v1415 = vunpack.c.h.b16 %v1056
  %v1416 = vunpack.c.l.b16 %v1057
  %v1417 = vunpack.c.h.b16 %v1057
  %v1418 = vunpack.c.l.b16 %v1058
  %v1419 = vunpack.c.h.b16 %v1058
  %v1420 = vunpack.c.l.b16 %v1059
  %v1421 = vunpack.c.h.b16 %v1059
  %v1422 = vunpack.c.l.b16 %v1060
  %v1423 = vunpack.c.h.b16 %v1060
  %v1424 = vunpack.c.l.b16 %v1061
  %v1425 = vunpack.c.h.b16 %v1061
  %v1426 = vunpack.c.l.b16 %v1062
  %v1427 = vunpack.c.h.b16 %v1062
  %v1428 = vunpack.c.l.b16 %v1063
  %v1429 = vunpack.c.h.b16 %v1063
  %v1430 = vunpack.c.l.b16 %v1064
  %v1431 = vunpack.c.h.b16 %v1064
  %v1432 = vunpack.c.l.b16 %v1065
  %v1433 = vunpack.c.h.b16 %v1065
  %v1434 = vunpack.c.l.b16 %v1066
  %v1435 = vunpack.c.h.b16 %v1066
  %v1436 = vunpack.c.l.b16 %v1067
  %v1437 = vunpack.c.h.b16 %v1067
  %v1438 = vunpack.c.l.b16 %v1068
  %v1439 = vunpack.c.h.b16 %v1068
  %v1440 = vunpack.c.l.b16 %v1069
  %v1441 = vunpack.c.h.b16 %v1069
  %v1442 = vunpack.c.l.b16 %v1070
  %v1443 = vunpack.c.h.b16 %v1070
  %v1444 = vunpack.c.l.b16 %v1071
  %v1445 = vunpack.c.h.b16 %v1071
  %v1446 = vunpack.c.l.b16 %v1072
  %v1447 = vunpack.c.h.b16 %v1072
  %v1448 = vunpack.c.l.b16 %v1073
  %v1449 = vunpack.c.h.b16 %v1073
  %v1450 = vunpack.c.l.b16 %v1074
  %v1451 = vunpack.c.h.b16 %v1074
  %v1452 = vunpack.c.l.b16 %v1075
  %v1453 = vunpack.c.h.b16 %v1075
  %v1454 = vunpack.c.l.b16 %v1076
  %v1455 = vunpack.c.h.b16 %v1076
  %v1456 = vunpack.c.l.b16 %v1077
  %v1457 = vunpack.c.h.b16 %v1077
  %v1458 = vunpack.c.l.b16 %v1078
  %v1459 = vunpack.c.h.b16 %v1078
  %v1460 = vunpack.c.l.b16 %v1079
  %v1461 = vunpack.c.h.b16 %v1079
  %v1462 = vunpack.c.l.b16 %v1080
  %v1463 = vunpack.c.h.b16 %v1080
  %v1464 = vunpack.c.l.b16 %v1081
  %v1465 = vunpack.c.h.b16 %v1081
  %v1466 = vpack.c.b16 %v1212, %v1210
  %v1467 = vpack.c.b16 %v1213, %v1211
  %v1468 = vpack.c.b16 %v1216, %v1214
  %v1469 = vpack.c.b16 %v1217, %v1215
  %v1470 = vpack.c.b16 %v1220, %v1218
  %v1471 = vpack.c.b16 %v1221, %v1219
  %v1472 = vpack.c.b16 %v1224, %v1222
  %v1473 = vpack.c.b16 %v1225, %v1223
  %v1474 = vpack.c.b16 %v1228, %v1226
  %v1475 = vpack.c.b16 %v1229, %v1227
  %v1476 = vpack.c.b16 %v1232, %v1230
  %v1477 = vpack.c.b16 %v1233, %v1231
  %v1478 = vpack.c.b16 %v1236, %v1234
  %v1479 = vpack.c.b16 %v1237, %v1235
  %v1480 = vpack.c.b16 %v1240, %v1238
  %v1481 = vpack.c.b16 %v1241, %v1239
  %v1482 = vpack.c.b16 %v1244, %v1242
  %v1483 = vpack.c.b16 %v1245, %v1243
  %v1484 = vpack.c.b16 %v1248, %v1246
  %v1485 = vpack.c.b16 %v1249, %v1247
  %v1486 = vpack.c.b16 %v1252, %v1250
  %v1487 = vpack.c.b16 %v1253, %v1251
  %v1488 = vpack.c.b16 %v1256, %v1254
  %v1489 = vpack.c.b16 %v1257, %v1255
  %v1490 = vpack.c.b16 %v1260, %v1258
  %v1491 = vpack.c.b16 %v1261, %v1259
  %v1492 = vpack.c.b16 %v1264, %v1262
  %v1493 = vpack.c.b16 %v1265, %v1263
  %v1494 = vpack.c.b16 %v1268, %v1266
  %v1495 = vpack.c.b16 %v1269, %v1267
  %v1496 = vpack.c.b16 %v1272, %v1270
  %v1497 = vpack.c.b16 %v1273, %v1271
  %v1498 = vpack.c.b16 %v1276, %v1274
  %v1499 = vpack.c.b16 %v1277, %v1275
  %v1500 = vpack.c.b16 %v1280, %v1278
  %v1501 = vpack.c.b16 %v1281, %v1279
  %v1502 = vpack.c.b16 %v1284, %v1282
  %v1503 = vpack.c.b16 %v1285, %v1283
  %v1504 = vpack.c.b16 %v1288, %v1286
  %v1505 = vpack.c.b16 %v1289, %v1287
  %v1506 = vpack.c.b16 %v1292, %v1290
  %v1507 = vpack.c.b16 %v1293, %v1291
  %v1508 = vpack.c.b16 %v1296, %v1294
  %v1509 = vpack.c.b16 %v1297, %v1295
  %v1510 = vpack.c.b16 %v1300, %v1298
  %v1511 = vpack.c.b16 %v1301, %v1299
  %v1512 = vpack.c.b16 %v1304, %v1302
  %v1513 = vpack.c.b16 %v1305, %v1303
  %v1514 = vpack.c.b16 %v1308, %v1306
  %v1515 = vpack.c.b16 %v1309, %v1307
  %v1516 = vpack.c.b16 %v1312, %v1310
  %v1517 = vpack.c.b16 %v1313, %v1311
  %v1518 = vpack.c.b16 %v1316, %v1314
  %v1519 = vpack.c.b16 %v1317, %v1315
  %v1520 = vpack.c.b16 %v1320, %v1318
  %v1521 = vpack.c.b16 %v1321, %v1319
  %v1522 = vpack.c.b16 %v1324, %v1322
  %v1523 = vpack.c.b16 %v1325, %v1323
  %v1524 = vpack.c.b16 %v1328, %v1326
  %v1525 = vpack.c.b16 %v1329, %v1327
  %v1526 = vpack.c.b16 %v1332, %v1330
  %v1527 = vpack.c.b16 %v1333, %v1331
  %v1528 = vpack.c.b16 %v1336, %v1334
  %v1529 = vpack.c.b16 %v1337, %v1335
  %v1530 = vpack.c.b16 %v1340, %v1338
  %v1531 = vpack.c.b16 %v1341, %v1339
  %v1532 = vpack.c.b16 %v1344, %v1342
  %v1533 = vpack.c.b16 %v1345, %v1343
  %v1534 = vpack.c.b16 %v1348, %v1346
  %v1535 = vpack.c.b16 %v1349, %v1347
  %v1536 = vpack.c.b16 %v1352, %v1350
  %v1537 = vpack.c.b16 %v1353, %v1351
  %v1538 = vpack.c.b16 %v1356, %v1354
  %v1539 = vpack.c.b16 %v1357, %v1355
  %v1540 = vpack.c.b16 %v1360, %v1358
  %v1541 = vpack.c.b16 %v1361, %v1359
  %v1542 = vpack.c.b16 %v1364, %v1362
  %v1543 = vpack.c.b16 %v1365, %v1363
  %v1544 = vpack.c.b16 %v1368, %v1366
  %v1545 = vpack.c.b16 %v1369, %v1367
  %v1546 = vpack.c.b16 %v1372, %v1370
  %v1547 = vpack.c.b16 %v1373, %v1371
  %v1548 = vpack.c.b16 %v1376, %v1374
  %v1549 = vpack.c.b16 %v1377, %v1375
  %v1550 = vpack.c.b16 %v1380, %v1378
  %v1551 = vpack.c.b16 %v1381, %v1379
  %v1552 = vpack.c.b16 %v1384, %v1382
  %v1553 = vpack.c.b16 %v1385, %v1383
  %v1554 = vpack.c.b16 %v1388, %v1386
  %v1555 = vpack.c.b16 %v1389, %v1387
  %v1556 = vpack.c.b16 %v1392, %v1390
  %v1557 = vpack.c.b16 %v1393, %v1391
  %v1558 = vpack.c.b16 %v1396, %v1394
  %v1559 = vpack.c.b16 %v1397, %v1395
  %v1560 = vpack.c.b16 %v1400, %v1398
  %v1561 = vpack.c.b16 %v1401, %v1399
  %v1562 = vpack.c.b16 %v1404, %v1402
  %v1563 = vpack.c.b16 %v1405, %v1403
  %v1564 = vpack.c.b16 %v1408, %v1406
  %v1565 = vpack.c.b16 %v1409, %v1407
  %v1566 = vpack.c.b16 %v1412, %v1410
  %v1567 = vpack.c.b16 %v1413, %v1411
  %v1568 = vpack.c.b16 %v1416, %v1414
  %v1569 = vpack.c.b16 %v1417, %v1415
  %v1570 = vpack.c.b16 %v1420, %v1418
  %v1571 = vpack.c.b16 %v1421, %v1419
  %v1572 = vpack.c.b16 %v1424, %v1422
  %v1573 = vpack.c.b16 %v1425, %v1423
  %v1574 = vpack.c.b16 %v1428, %v1426
  %v1575 = vpack.c.b16 %v1429, %v1427
  %v1576 = vpack.c.b16 %v1432, %v1430
  %v1577 = vpack.c.b16 %v1433, %v1431
  %v1578 = vpack.c.b16 %v1436, %v1434
  %v1579 = vpack.c.b16 %v1437, %v1435
  %v1580 = vpack.c.b16 %v1440, %v1438
  %v1581 = vpack.c.b16 %v1441, %v1439
  %v1582 = vpack.c.b16 %v1444, %v1442
  %v1583 = vpack.c.b16 %v1445, %v1443
  %v1584 = vpack.c.b16 %v1448, %v1446
  %v1585 = vpack.c.b16 %v1449, %v1447
  %v1586 = vpack.c.b16 %v1452, %v1450
  %v1587 = vpack.c.b16 %v1453, %v1451
  %v1588 = vpack.c.b16 %v1456, %v1454
  %v1589 = vpack.c.b16 %v1457, %v1455
  %v1590 = vpack.c.b16 %v1460, %v1458
  %v1591 = vpack.c.b16 %v1461, %v1459
  %v1592 = vpack.c.b16 %v1464, %v1462
  %v1593 = vpack.c.b16 %v1465, %v1463
  %1722 = vmatprep.subr.bf16.mxu0 0
  %1723 = vmatpush1.bf16.msra.mxu0 %v941
  %1724 = vmatprep.subr.bf16.mxu0 0
  %1725 = vmatpush1.bf16.msra.mxu0 %v940
  %1726 = vmatprep.subr.bf16.mxu0 0
  %1727 = vmatpush1.bf16.msra.mxu0 %v939
  %1728 = vmatprep.subr.bf16.mxu0 0
  %1729 = vmatpush1.bf16.msra.mxu0 %v938
  %1730 = vmatprep.subr.bf16.mxu0 0
  %1731 = vmatpush1.bf16.msra.mxu0 %v937
  %1732 = vmatprep.subr.bf16.mxu0 0
  %1733 = vmatpush1.bf16.msra.mxu0 %v936
  %1734 = vmatprep.subr.bf16.mxu0 0
  %1735 = vmatpush1.bf16.msra.mxu0 %v935
  %1736 = vmatprep.subr.bf16.mxu0 0
  %1737 = vmatpush1.bf16.msra.mxu0 %v934
  %1738 = vmatprep.subr.bf16.mxu0 0
  %1739 = vmatpush2.bf16.msra.mxu0 %v949
  %1740 = vmatprep.subr.bf16.mxu0 0
  %1741 = vmatpush2.bf16.msra.mxu0 %v948
  %1742 = vmatprep.subr.bf16.mxu0 0
  %1743 = vmatpush2.bf16.msra.mxu0 %v947
  %1744 = vmatprep.subr.bf16.mxu0 0
  %1745 = vmatpush2.bf16.msra.mxu0 %v946
  %1746 = vmatprep.subr.bf16.mxu0 0
  %1747 = vmatpush2.bf16.msra.mxu0 %v945
  %1748 = vmatprep.subr.bf16.mxu0 0
  %1749 = vmatpush2.bf16.msra.mxu0 %v944
  %1750 = vmatprep.subr.bf16.mxu0 0
  %1751 = vmatpush2.bf16.msra.mxu0 %v943
  %1752 = vmatprep.subr.bf16.mxu0 0
  %1753 = vmatpush2.bf16.msra.mxu0 %v942
  %1754 = vmatprep.mubr.bf16.mxu0 %v1467
  %1755 = vmatmul.mubr.bf16.gmra.mxu0 %v1466
  %v1756 = vpop.f32.mrf.mxu0
  %v1757 = vadd.f32 0.0, %v1756
  %v1758 = vpop.f32.mrf.mxu0
  %v1759 = vpop.f32.mrf.mxu0
  %v1760 = vadd.f32 0.0, %v1759
  %v1761 = vpop.f32.mrf.mxu0
  %1762 = vmatprep.mubr.bf16.mxu0 %v1469
  %1763 = vmatmul.mubr.bf16.gmra.mxu0 %v1468
  %v1764 = vpop.f32.mrf.mxu0
  %v1765 = vadd.f32 0.0, %v1764
  %v1766 = vpop.f32.mrf.mxu0
  %v1767 = vpop.f32.mrf.mxu0
  %v1768 = vadd.f32 0.0, %v1767
  %v1769 = vpop.f32.mrf.mxu0
  %1770 = vmatprep.mubr.bf16.mxu0 %v1471
  %1771 = vmatmul.mubr.bf16.gmra.mxu0 %v1470
  %v1772 = vpop.f32.mrf.mxu0
  %v1773 = vadd.f32 0.0, %v1772
  %v1774 = vpop.f32.mrf.mxu0
  %v1775 = vpop.f32.mrf.mxu0
  %v1776 = vadd.f32 0.0, %v1775
  %v1777 = vpop.f32.mrf.mxu0
  %1778 = vmatprep.mubr.bf16.mxu0 %v1473
  %1779 = vmatmul.mubr.bf16.gmra.mxu0 %v1472
  %v1780 = vpop.f32.mrf.mxu0
  %v1781 = vadd.f32 0.0, %v1780
  %v1782 = vpop.f32.mrf.mxu0
  %v1783 = vpop.f32.mrf.mxu0
  %v1784 = vadd.f32 0.0, %v1783
  %v1785 = vpop.f32.mrf.mxu0
  %1786 = vmatprep.mubr.bf16.mxu0 %v1475
  %1787 = vmatmul.mubr.bf16.gmra.mxu0 %v1474
  %v1788 = vpop.f32.mrf.mxu0
  %v1789 = vadd.f32 0.0, %v1788
  %v1790 = vpop.f32.mrf.mxu0
  %v1791 = vpop.f32.mrf.mxu0
  %v1792 = vadd.f32 0.0, %v1791
  %v1793 = vpop.f32.mrf.mxu0
  %1794 = vmatprep.mubr.bf16.mxu0 %v1477
  %1795 = vmatmul.mubr.bf16.gmra.mxu0 %v1476
  %v1796 = vpop.f32.mrf.mxu0
  %v1797 = vadd.f32 0.0, %v1796
  %v1798 = vpop.f32.mrf.mxu0
  %v1799 = vpop.f32.mrf.mxu0
  %v1800 = vadd.f32 0.0, %v1799
  %v1801 = vpop.f32.mrf.mxu0
  %1802 = vmatprep.mubr.bf16.mxu0 %v1479
  %1803 = vmatmul.mubr.bf16.gmra.mxu0 %v1478
  %v1804 = vpop.f32.mrf.mxu0
  %v1805 = vadd.f32 0.0, %v1804
  %v1806 = vpop.f32.mrf.mxu0
  %v1807 = vpop.f32.mrf.mxu0
  %v1808 = vadd.f32 0.0, %v1807
  %v1809 = vpop.f32.mrf.mxu0
  %1810 = vmatprep.mubr.bf16.mxu0 %v1481
  %1811 = vmatmul.mubr.bf16.gmra.mxu0 %v1480
  %v1812 = vpop.f32.mrf.mxu0
  %v1813 = vadd.f32 0.0, %v1812
  %v1814 = vpop.f32.mrf.mxu0
  %v1815 = vpop.f32.mrf.mxu0
  %v1816 = vadd.f32 0.0, %v1815
  %v1817 = vpop.f32.mrf.mxu0
  %1818 = vmatprep.mubr.bf16.mxu0 %v1483
  %1819 = vmatmul.mubr.bf16.gmra.mxu0 %v1482
  %v1820 = vpop.f32.mrf.mxu0
  %v1821 = vadd.f32 0.0, %v1820
  %v1822 = vpop.f32.mrf.mxu0
  %v1823 = vpop.f32.mrf.mxu0
  %v1824 = vadd.f32 0.0, %v1823
  %v1825 = vpop.f32.mrf.mxu0
  %1826 = vmatprep.mubr.bf16.mxu0 %v1485
  %1827 = vmatmul.mubr.bf16.gmra.mxu0 %v1484
  %v1828 = vpop.f32.mrf.mxu0
  %v1829 = vadd.f32 0.0, %v1828
  %v1830 = vpop.f32.mrf.mxu0
  %v1831 = vpop.f32.mrf.mxu0
  %v1832 = vadd.f32 0.0, %v1831
  %v1833 = vpop.f32.mrf.mxu0
  %1834 = vmatprep.mubr.bf16.mxu0 %v1487
  %1835 = vmatmul.mubr.bf16.gmra.mxu0 %v1486
  %v1836 = vpop.f32.mrf.mxu0
  %v1837 = vadd.f32 0.0, %v1836
  %v1838 = vpop.f32.mrf.mxu0
  %v1839 = vpop.f32.mrf.mxu0
  %v1840 = vadd.f32 0.0, %v1839
  %v1841 = vpop.f32.mrf.mxu0
  %1842 = vmatprep.mubr.bf16.mxu0 %v1489
  %1843 = vmatmul.mubr.bf16.gmra.mxu0 %v1488
  %v1844 = vpop.f32.mrf.mxu0
  %v1845 = vadd.f32 0.0, %v1844
  %v1846 = vpop.f32.mrf.mxu0
  %v1847 = vpop.f32.mrf.mxu0
  %v1848 = vadd.f32 0.0, %v1847
  %v1849 = vpop.f32.mrf.mxu0
  %1850 = vmatprep.mubr.bf16.mxu0 %v1491
  %1851 = vmatmul.mubr.bf16.gmra.mxu0 %v1490
  %v1852 = vpop.f32.mrf.mxu0
  %v1853 = vadd.f32 0.0, %v1852
  %v1854 = vpop.f32.mrf.mxu0
  %v1855 = vpop.f32.mrf.mxu0
  %v1856 = vadd.f32 0.0, %v1855
  %v1857 = vpop.f32.mrf.mxu0
  %1858 = vmatprep.mubr.bf16.mxu0 %v1493
  %1859 = vmatmul.mubr.bf16.gmra.mxu0 %v1492
  %v1860 = vpop.f32.mrf.mxu0
  %v1861 = vadd.f32 0.0, %v1860
  %v1862 = vpop.f32.mrf.mxu0
  %v1863 = vpop.f32.mrf.mxu0
  %v1864 = vadd.f32 0.0, %v1863
  %v1865 = vpop.f32.mrf.mxu0
  %1866 = vmatprep.mubr.bf16.mxu0 %v1495
  %1867 = vmatmul.mubr.bf16.gmra.mxu0 %v1494
  %v1868 = vpop.f32.mrf.mxu0
  %v1869 = vadd.f32 0.0, %v1868
  %v1870 = vpop.f32.mrf.mxu0
  %v1871 = vpop.f32.mrf.mxu0
  %v1872 = vadd.f32 0.0, %v1871
  %v1873 = vpop.f32.mrf.mxu0
  %1874 = vmatprep.mubr.bf16.mxu0 %v1497
  %1875 = vmatmul.mubr.bf16.gmra.mxu0 %v1496
  %v1876 = vpop.f32.mrf.mxu0
  %v1877 = vadd.f32 0.0, %v1876
  %v1878 = vpop.f32.mrf.mxu0
  %v1879 = vpop.f32.mrf.mxu0
  %v1880 = vadd.f32 0.0, %v1879
  %v1881 = vpop.f32.mrf.mxu0
  %1882 = vmatprep.mubr.bf16.mxu0 %v1499
  %1883 = vmatmul.mubr.bf16.gmra.mxu0 %v1498
  %v1884 = vpop.f32.mrf.mxu0
  %v1885 = vadd.f32 0.0, %v1884
  %v1886 = vpop.f32.mrf.mxu0
  %v1887 = vpop.f32.mrf.mxu0
  %v1888 = vadd.f32 0.0, %v1887
  %v1889 = vpop.f32.mrf.mxu0
  %1890 = vmatprep.mubr.bf16.mxu0 %v1501
  %1891 = vmatmul.mubr.bf16.gmra.mxu0 %v1500
  %v1892 = vpop.f32.mrf.mxu0
  %v1893 = vadd.f32 0.0, %v1892
  %v1894 = vpop.f32.mrf.mxu0
  %v1895 = vpop.f32.mrf.mxu0
  %v1896 = vadd.f32 0.0, %v1895
  %v1897 = vpop.f32.mrf.mxu0
  %1898 = vmatprep.mubr.bf16.mxu0 %v1503
  %1899 = vmatmul.mubr.bf16.gmra.mxu0 %v1502
  %v1900 = vpop.f32.mrf.mxu0
  %v1901 = vadd.f32 0.0, %v1900
  %v1902 = vpop.f32.mrf.mxu0
  %v1903 = vpop.f32.mrf.mxu0
  %v1904 = vadd.f32 0.0, %v1903
  %v1905 = vpop.f32.mrf.mxu0
  %1906 = vmatprep.mubr.bf16.mxu0 %v1505
  %1907 = vmatmul.mubr.bf16.gmra.mxu0 %v1504
  %v1908 = vpop.f32.mrf.mxu0
  %v1909 = vadd.f32 0.0, %v1908
  %v1910 = vpop.f32.mrf.mxu0
  %v1911 = vpop.f32.mrf.mxu0
  %v1912 = vadd.f32 0.0, %v1911
  %v1913 = vpop.f32.mrf.mxu0
  %1914 = vmatprep.mubr.bf16.mxu0 %v1507
  %1915 = vmatmul.mubr.bf16.gmra.mxu0 %v1506
  %v1916 = vpop.f32.mrf.mxu0
  %v1917 = vadd.f32 0.0, %v1916
  %v1918 = vpop.f32.mrf.mxu0
  %v1919 = vpop.f32.mrf.mxu0
  %v1920 = vadd.f32 0.0, %v1919
  %v1921 = vpop.f32.mrf.mxu0
  %1922 = vmatprep.mubr.bf16.mxu0 %v1509
  %1923 = vmatmul.mubr.bf16.gmra.mxu0 %v1508
  %v1924 = vpop.f32.mrf.mxu0
  %v1925 = vadd.f32 0.0, %v1924
  %v1926 = vpop.f32.mrf.mxu0
  %v1927 = vpop.f32.mrf.mxu0
  %v1928 = vadd.f32 0.0, %v1927
  %v1929 = vpop.f32.mrf.mxu0
  %1930 = vmatprep.mubr.bf16.mxu0 %v1511
  %1931 = vmatmul.mubr.bf16.gmra.mxu0 %v1510
  %v1932 = vpop.f32.mrf.mxu0
  %v1933 = vadd.f32 0.0, %v1932
  %v1934 = vpop.f32.mrf.mxu0
  %v1935 = vpop.f32.mrf.mxu0
  %v1936 = vadd.f32 0.0, %v1935
  %v1937 = vpop.f32.mrf.mxu0
  %1938 = vmatprep.mubr.bf16.mxu0 %v1513
  %1939 = vmatmul.mubr.bf16.gmra.mxu0 %v1512
  %v1940 = vpop.f32.mrf.mxu0
  %v1941 = vadd.f32 0.0, %v1940
  %v1942 = vpop.f32.mrf.mxu0
  %v1943 = vpop.f32.mrf.mxu0
  %v1944 = vadd.f32 0.0, %v1943
  %v1945 = vpop.f32.mrf.mxu0
  %1946 = vmatprep.mubr.bf16.mxu0 %v1515
  %1947 = vmatmul.mubr.bf16.gmra.mxu0 %v1514
  %v1948 = vpop.f32.mrf.mxu0
  %v1949 = vadd.f32 0.0, %v1948
  %v1950 = vpop.f32.mrf.mxu0
  %v1951 = vpop.f32.mrf.mxu0
  %v1952 = vadd.f32 0.0, %v1951
  %v1953 = vpop.f32.mrf.mxu0
  %1954 = vmatprep.mubr.bf16.mxu0 %v1517
  %1955 = vmatmul.mubr.bf16.gmra.mxu0 %v1516
  %v1956 = vpop.f32.mrf.mxu0
  %v1957 = vadd.f32 0.0, %v1956
  %v1958 = vpop.f32.mrf.mxu0
  %v1959 = vpop.f32.mrf.mxu0
  %v1960 = vadd.f32 0.0, %v1959
  %v1961 = vpop.f32.mrf.mxu0
  %1962 = vmatprep.mubr.bf16.mxu0 %v1519
  %1963 = vmatmul.mubr.bf16.gmra.mxu0 %v1518
  %v1964 = vpop.f32.mrf.mxu0
  %v1965 = vadd.f32 0.0, %v1964
  %v1966 = vpop.f32.mrf.mxu0
  %v1967 = vpop.f32.mrf.mxu0
  %v1968 = vadd.f32 0.0, %v1967
  %v1969 = vpop.f32.mrf.mxu0
  %1970 = vmatprep.mubr.bf16.mxu0 %v1521
  %1971 = vmatmul.mubr.bf16.gmra.mxu0 %v1520
  %v1972 = vpop.f32.mrf.mxu0
  %v1973 = vadd.f32 0.0, %v1972
  %v1974 = vpop.f32.mrf.mxu0
  %v1975 = vpop.f32.mrf.mxu0
  %v1976 = vadd.f32 0.0, %v1975
  %v1977 = vpop.f32.mrf.mxu0
  %1978 = vmatprep.mubr.bf16.mxu0 %v1523
  %1979 = vmatmul.mubr.bf16.gmra.mxu0 %v1522
  %v1980 = vpop.f32.mrf.mxu0
  %v1981 = vadd.f32 0.0, %v1980
  %v1982 = vpop.f32.mrf.mxu0
  %v1983 = vpop.f32.mrf.mxu0
  %v1984 = vadd.f32 0.0, %v1983
  %v1985 = vpop.f32.mrf.mxu0
  %1986 = vmatprep.mubr.bf16.mxu0 %v1525
  %1987 = vmatmul.mubr.bf16.gmra.mxu0 %v1524
  %v1988 = vpop.f32.mrf.mxu0
  %v1989 = vadd.f32 0.0, %v1988
  %v1990 = vpop.f32.mrf.mxu0
  %v1991 = vpop.f32.mrf.mxu0
  %v1992 = vadd.f32 0.0, %v1991
  %v1993 = vpop.f32.mrf.mxu0
  %1994 = vmatprep.mubr.bf16.mxu0 %v1527
  %1995 = vmatmul.mubr.bf16.gmra.mxu0 %v1526
  %v1996 = vpop.f32.mrf.mxu0
  %v1997 = vadd.f32 0.0, %v1996
  %v1998 = vpop.f32.mrf.mxu0
  %v1999 = vpop.f32.mrf.mxu0
  %v2000 = vadd.f32 0.0, %v1999
  %v2001 = vpop.f32.mrf.mxu0
  %2002 = vmatprep.mubr.bf16.mxu0 %v1529
  %2003 = vmatmul.mubr.bf16.gmra.mxu0 %v1528
  %v2004 = vpop.f32.mrf.mxu0
  %v2005 = vadd.f32 0.0, %v2004
  %v2006 = vpop.f32.mrf.mxu0
  %v2007 = vpop.f32.mrf.mxu0
  %v2008 = vadd.f32 0.0, %v2007
  %v2009 = vpop.f32.mrf.mxu0
  %2010 = vmatprep.mubr.bf16.mxu0 %v1531
  %2011 = vmatmul.mubr.bf16.gmra.mxu0 %v1530
  %v2012 = vpop.f32.mrf.mxu0
  %v2013 = vadd.f32 0.0, %v2012
  %v2014 = vpop.f32.mrf.mxu0
  %v2015 = vpop.f32.mrf.mxu0
  %v2016 = vadd.f32 0.0, %v2015
  %v2017 = vpop.f32.mrf.mxu0
  %2018 = vmatprep.mubr.bf16.mxu0 %v1533
  %2019 = vmatmul.mubr.bf16.gmra.mxu0 %v1532
  %v2020 = vpop.f32.mrf.mxu0
  %v2021 = vadd.f32 0.0, %v2020
  %v2022 = vpop.f32.mrf.mxu0
  %v2023 = vpop.f32.mrf.mxu0
  %v2024 = vadd.f32 0.0, %v2023
  %v2025 = vpop.f32.mrf.mxu0
  %2026 = vmatprep.mubr.bf16.mxu0 %v1535
  %2027 = vmatmul.mubr.bf16.gmra.mxu0 %v1534
  %v2028 = vpop.f32.mrf.mxu0
  %v2029 = vadd.f32 0.0, %v2028
  %v2030 = vpop.f32.mrf.mxu0
  %v2031 = vpop.f32.mrf.mxu0
  %v2032 = vadd.f32 0.0, %v2031
  %v2033 = vpop.f32.mrf.mxu0
  %2034 = vmatprep.mubr.bf16.mxu0 %v1537
  %2035 = vmatmul.mubr.bf16.gmra.mxu0 %v1536
  %v2036 = vpop.f32.mrf.mxu0
  %v2037 = vadd.f32 0.0, %v2036
  %v2038 = vpop.f32.mrf.mxu0
  %v2039 = vpop.f32.mrf.mxu0
  %v2040 = vadd.f32 0.0, %v2039
  %v2041 = vpop.f32.mrf.mxu0
  %2042 = vmatprep.mubr.bf16.mxu0 %v1539
  %2043 = vmatmul.mubr.bf16.gmra.mxu0 %v1538
  %v2044 = vpop.f32.mrf.mxu0
  %v2045 = vadd.f32 0.0, %v2044
  %v2046 = vpop.f32.mrf.mxu0
  %v2047 = vpop.f32.mrf.mxu0
  %v2048 = vadd.f32 0.0, %v2047
  %v2049 = vpop.f32.mrf.mxu0
  %2050 = vmatprep.mubr.bf16.mxu0 %v1541
  %2051 = vmatmul.mubr.bf16.gmra.mxu0 %v1540
  %v2052 = vpop.f32.mrf.mxu0
  %v2053 = vadd.f32 0.0, %v2052
  %v2054 = vpop.f32.mrf.mxu0
  %v2055 = vpop.f32.mrf.mxu0
  %v2056 = vadd.f32 0.0, %v2055
  %v2057 = vpop.f32.mrf.mxu0
  %2058 = vmatprep.mubr.bf16.mxu0 %v1543
  %2059 = vmatmul.mubr.bf16.gmra.mxu0 %v1542
  %v2060 = vpop.f32.mrf.mxu0
  %v2061 = vadd.f32 0.0, %v2060
  %v2062 = vpop.f32.mrf.mxu0
  %v2063 = vpop.f32.mrf.mxu0
  %v2064 = vadd.f32 0.0, %v2063
  %v2065 = vpop.f32.mrf.mxu0
  %2066 = vmatprep.mubr.bf16.mxu0 %v1545
  %2067 = vmatmul.mubr.bf16.gmra.mxu0 %v1544
  %v2068 = vpop.f32.mrf.mxu0
  %v2069 = vadd.f32 0.0, %v2068
  %v2070 = vpop.f32.mrf.mxu0
  %v2071 = vpop.f32.mrf.mxu0
  %v2072 = vadd.f32 0.0, %v2071
  %v2073 = vpop.f32.mrf.mxu0
  %2074 = vmatprep.mubr.bf16.mxu0 %v1547
  %2075 = vmatmul.mubr.bf16.gmra.mxu0 %v1546
  %v2076 = vpop.f32.mrf.mxu0
  %v2077 = vadd.f32 0.0, %v2076
  %v2078 = vpop.f32.mrf.mxu0
  %v2079 = vpop.f32.mrf.mxu0
  %v2080 = vadd.f32 0.0, %v2079
  %v2081 = vpop.f32.mrf.mxu0
  %2082 = vmatprep.mubr.bf16.mxu0 %v1549
  %2083 = vmatmul.mubr.bf16.gmra.mxu0 %v1548
  %v2084 = vpop.f32.mrf.mxu0
  %v2085 = vadd.f32 0.0, %v2084
  %v2086 = vpop.f32.mrf.mxu0
  %v2087 = vpop.f32.mrf.mxu0
  %v2088 = vadd.f32 0.0, %v2087
  %v2089 = vpop.f32.mrf.mxu0
  %2090 = vmatprep.mubr.bf16.mxu0 %v1551
  %2091 = vmatmul.mubr.bf16.gmra.mxu0 %v1550
  %v2092 = vpop.f32.mrf.mxu0
  %v2093 = vadd.f32 0.0, %v2092
  %v2094 = vpop.f32.mrf.mxu0
  %v2095 = vpop.f32.mrf.mxu0
  %v2096 = vadd.f32 0.0, %v2095
  %v2097 = vpop.f32.mrf.mxu0
  %2098 = vmatprep.mubr.bf16.mxu0 %v1553
  %2099 = vmatmul.mubr.bf16.gmra.mxu0 %v1552
  %v2100 = vpop.f32.mrf.mxu0
  %v2101 = vadd.f32 0.0, %v2100
  %v2102 = vpop.f32.mrf.mxu0
  %v2103 = vpop.f32.mrf.mxu0
  %v2104 = vadd.f32 0.0, %v2103
  %v2105 = vpop.f32.mrf.mxu0
  %2106 = vmatprep.mubr.bf16.mxu0 %v1555
  %2107 = vmatmul.mubr.bf16.gmra.mxu0 %v1554
  %v2108 = vpop.f32.mrf.mxu0
  %v2109 = vadd.f32 0.0, %v2108
  %v2110 = vpop.f32.mrf.mxu0
  %v2111 = vpop.f32.mrf.mxu0
  %v2112 = vadd.f32 0.0, %v2111
  %v2113 = vpop.f32.mrf.mxu0
  %2114 = vmatprep.mubr.bf16.mxu0 %v1557
  %2115 = vmatmul.mubr.bf16.gmra.mxu0 %v1556
  %v2116 = vpop.f32.mrf.mxu0
  %v2117 = vadd.f32 0.0, %v2116
  %v2118 = vpop.f32.mrf.mxu0
  %v2119 = vpop.f32.mrf.mxu0
  %v2120 = vadd.f32 0.0, %v2119
  %v2121 = vpop.f32.mrf.mxu0
  %2122 = vmatprep.mubr.bf16.mxu0 %v1559
  %2123 = vmatmul.mubr.bf16.gmra.mxu0 %v1558
  %v2124 = vpop.f32.mrf.mxu0
  %v2125 = vadd.f32 0.0, %v2124
  %v2126 = vpop.f32.mrf.mxu0
  %v2127 = vpop.f32.mrf.mxu0
  %v2128 = vadd.f32 0.0, %v2127
  %v2129 = vpop.f32.mrf.mxu0
  %2130 = vmatprep.mubr.bf16.mxu0 %v1561
  %2131 = vmatmul.mubr.bf16.gmra.mxu0 %v1560
  %v2132 = vpop.f32.mrf.mxu0
  %v2133 = vadd.f32 0.0, %v2132
  %v2134 = vpop.f32.mrf.mxu0
  %v2135 = vpop.f32.mrf.mxu0
  %v2136 = vadd.f32 0.0, %v2135
  %v2137 = vpop.f32.mrf.mxu0
  %2138 = vmatprep.mubr.bf16.mxu0 %v1563
  %2139 = vmatmul.mubr.bf16.gmra.mxu0 %v1562
  %v2140 = vpop.f32.mrf.mxu0
  %v2141 = vadd.f32 0.0, %v2140
  %v2142 = vpop.f32.mrf.mxu0
  %v2143 = vpop.f32.mrf.mxu0
  %v2144 = vadd.f32 0.0, %v2143
  %v2145 = vpop.f32.mrf.mxu0
  %2146 = vmatprep.mubr.bf16.mxu0 %v1565
  %2147 = vmatmul.mubr.bf16.gmra.mxu0 %v1564
  %v2148 = vpop.f32.mrf.mxu0
  %v2149 = vadd.f32 0.0, %v2148
  %v2150 = vpop.f32.mrf.mxu0
  %v2151 = vpop.f32.mrf.mxu0
  %v2152 = vadd.f32 0.0, %v2151
  %v2153 = vpop.f32.mrf.mxu0
  %2154 = vmatprep.mubr.bf16.mxu0 %v1567
  %2155 = vmatmul.mubr.bf16.gmra.mxu0 %v1566
  %v2156 = vpop.f32.mrf.mxu0
  %v2157 = vadd.f32 0.0, %v2156
  %v2158 = vpop.f32.mrf.mxu0
  %v2159 = vpop.f32.mrf.mxu0
  %v2160 = vadd.f32 0.0, %v2159
  %v2161 = vpop.f32.mrf.mxu0
  %2162 = vmatprep.mubr.bf16.mxu0 %v1569
  %2163 = vmatmul.mubr.bf16.gmra.mxu0 %v1568
  %v2164 = vpop.f32.mrf.mxu0
  %v2165 = vadd.f32 0.0, %v2164
  %v2166 = vpop.f32.mrf.mxu0
  %v2167 = vpop.f32.mrf.mxu0
  %v2168 = vadd.f32 0.0, %v2167
  %v2169 = vpop.f32.mrf.mxu0
  %2170 = vmatprep.mubr.bf16.mxu0 %v1571
  %2171 = vmatmul.mubr.bf16.gmra.mxu0 %v1570
  %v2172 = vpop.f32.mrf.mxu0
  %v2173 = vadd.f32 0.0, %v2172
  %v2174 = vpop.f32.mrf.mxu0
  %v2175 = vpop.f32.mrf.mxu0
  %v2176 = vadd.f32 0.0, %v2175
  %v2177 = vpop.f32.mrf.mxu0
  %2178 = vmatprep.mubr.bf16.mxu0 %v1573
  %2179 = vmatmul.mubr.bf16.gmra.mxu0 %v1572
  %v2180 = vpop.f32.mrf.mxu0
  %v2181 = vadd.f32 0.0, %v2180
  %v2182 = vpop.f32.mrf.mxu0
  %v2183 = vpop.f32.mrf.mxu0
  %v2184 = vadd.f32 0.0, %v2183
  %v2185 = vpop.f32.mrf.mxu0
  %2186 = vmatprep.mubr.bf16.mxu0 %v1575
  %2187 = vmatmul.mubr.bf16.gmra.mxu0 %v1574
  %v2188 = vpop.f32.mrf.mxu0
  %v2189 = vadd.f32 0.0, %v2188
  %v2190 = vpop.f32.mrf.mxu0
  %v2191 = vpop.f32.mrf.mxu0
  %v2192 = vadd.f32 0.0, %v2191
  %v2193 = vpop.f32.mrf.mxu0
  %2194 = vmatprep.mubr.bf16.mxu0 %v1577
  %2195 = vmatmul.mubr.bf16.gmra.mxu0 %v1576
  %v2196 = vpop.f32.mrf.mxu0
  %v2197 = vadd.f32 0.0, %v2196
  %v2198 = vpop.f32.mrf.mxu0
  %v2199 = vpop.f32.mrf.mxu0
  %v2200 = vadd.f32 0.0, %v2199
  %v2201 = vpop.f32.mrf.mxu0
  %2202 = vmatprep.mubr.bf16.mxu0 %v1579
  %2203 = vmatmul.mubr.bf16.gmra.mxu0 %v1578
  %v2204 = vpop.f32.mrf.mxu0
  %v2205 = vadd.f32 0.0, %v2204
  %v2206 = vpop.f32.mrf.mxu0
  %v2207 = vpop.f32.mrf.mxu0
  %v2208 = vadd.f32 0.0, %v2207
  %v2209 = vpop.f32.mrf.mxu0
  %2210 = vmatprep.mubr.bf16.mxu0 %v1581
  %2211 = vmatmul.mubr.bf16.gmra.mxu0 %v1580
  %v2212 = vpop.f32.mrf.mxu0
  %v2213 = vadd.f32 0.0, %v2212
  %v2214 = vpop.f32.mrf.mxu0
  %v2215 = vpop.f32.mrf.mxu0
  %v2216 = vadd.f32 0.0, %v2215
  %v2217 = vpop.f32.mrf.mxu0
  %2218 = vmatprep.mubr.bf16.mxu0 %v1583
  %2219 = vmatmul.mubr.bf16.gmra.mxu0 %v1582
  %v2220 = vpop.f32.mrf.mxu0
  %v2221 = vadd.f32 0.0, %v2220
  %v2222 = vpop.f32.mrf.mxu0
  %v2223 = vpop.f32.mrf.mxu0
  %v2224 = vadd.f32 0.0, %v2223
  %v2225 = vpop.f32.mrf.mxu0
  %2226 = vmatprep.mubr.bf16.mxu0 %v1585
  %2227 = vmatmul.mubr.bf16.gmra.mxu0 %v1584
  %v2228 = vpop.f32.mrf.mxu0
  %v2229 = vadd.f32 0.0, %v2228
  %v2230 = vpop.f32.mrf.mxu0
  %v2231 = vpop.f32.mrf.mxu0
  %v2232 = vadd.f32 0.0, %v2231
  %v2233 = vpop.f32.mrf.mxu0
  %2234 = vmatprep.mubr.bf16.mxu0 %v1587
  %2235 = vmatmul.mubr.bf16.gmra.mxu0 %v1586
  %v2236 = vpop.f32.mrf.mxu0
  %v2237 = vadd.f32 0.0, %v2236
  %v2238 = vpop.f32.mrf.mxu0
  %v2239 = vpop.f32.mrf.mxu0
  %v2240 = vadd.f32 0.0, %v2239
  %v2241 = vpop.f32.mrf.mxu0
  %2242 = vmatprep.mubr.bf16.mxu0 %v1589
  %2243 = vmatmul.mubr.bf16.gmra.mxu0 %v1588
  %v2244 = vpop.f32.mrf.mxu0
  %v2245 = vadd.f32 0.0, %v2244
  %v2246 = vpop.f32.mrf.mxu0
  %v2247 = vpop.f32.mrf.mxu0
  %v2248 = vadd.f32 0.0, %v2247
  %v2249 = vpop.f32.mrf.mxu0
  %2250 = vmatprep.mubr.bf16.mxu0 %v1591
  %2251 = vmatmul.mubr.bf16.gmra.mxu0 %v1590
  %v2252 = vpop.f32.mrf.mxu0
  %v2253 = vadd.f32 0.0, %v2252
  %v2254 = vpop.f32.mrf.mxu0
  %v2255 = vpop.f32.mrf.mxu0
  %v2256 = vadd.f32 0.0, %v2255
  %v2257 = vpop.f32.mrf.mxu0
  %2258 = vmatprep.mubr.bf16.mxu0 %v1593
  %2259 = vmatmul.mubr.bf16.gmra.mxu0 %v1592
  %v2260 = vpop.f32.mrf.mxu0
  %v2261 = vadd.f32 0.0, %v2260
  %v2262 = vpop.f32.mrf.mxu0
  %v2263 = vpop.f32.mrf.mxu0
  %v2264 = vadd.f32 0.0, %v2263
  %v2265 = vpop.f32.mrf.mxu0
  %2266 = vdwg.mxu0
  %v2267 = vpack.c.bf16 %v1760, %v1757
  %v2268 = vpack.c.bf16 %v1768, %v1765
  %v2269 = vpack.c.bf16 %v1776, %v1773
  %v2270 = vpack.c.bf16 %v1784, %v1781
  %v2271 = vpack.c.bf16 %v1792, %v1789
  %v2272 = vpack.c.bf16 %v1800, %v1797
  %v2273 = vpack.c.bf16 %v1808, %v1805
  %v2274 = vpack.c.bf16 %v1816, %v1813
  %v2275 = vpack.c.bf16 %v1824, %v1821
  %v2276 = vpack.c.bf16 %v1832, %v1829
  %v2277 = vpack.c.bf16 %v1840, %v1837
  %v2278 = vpack.c.bf16 %v1848, %v1845
  %v2279 = vpack.c.bf16 %v1856, %v1853
  %v2280 = vpack.c.bf16 %v1864, %v1861
  %v2281 = vpack.c.bf16 %v1872, %v1869
  %v2282 = vpack.c.bf16 %v1880, %v1877
  %v2283 = vpack.c.bf16 %v1888, %v1885
  %v2284 = vpack.c.bf16 %v1896, %v1893
  %v2285 = vpack.c.bf16 %v1904, %v1901
  %v2286 = vpack.c.bf16 %v1912, %v1909
  %v2287 = vpack.c.bf16 %v1920, %v1917
  %v2288 = vpack.c.bf16 %v1928, %v1925
  %v2289 = vpack.c.bf16 %v1936, %v1933
  %v2290 = vpack.c.bf16 %v1944, %v1941
  %v2291 = vpack.c.bf16 %v1952, %v1949
  %v2292 = vpack.c.bf16 %v1960, %v1957
  %v2293 = vpack.c.bf16 %v1968, %v1965
  %v2294 = vpack.c.bf16 %v1976, %v1973
  %v2295 = vpack.c.bf16 %v1984, %v1981
  %v2296 = vpack.c.bf16 %v1992, %v1989
  %v2297 = vpack.c.bf16 %v2000, %v1997
  %v2298 = vpack.c.bf16 %v2008, %v2005
  %v2299 = vpack.c.bf16 %v2016, %v2013
  %v2300 = vpack.c.bf16 %v2024, %v2021
  %v2301 = vpack.c.bf16 %v2032, %v2029
  %v2302 = vpack.c.bf16 %v2040, %v2037
  %v2303 = vpack.c.bf16 %v2048, %v2045
  %v2304 = vpack.c.bf16 %v2056, %v2053
  %v2305 = vpack.c.bf16 %v2064, %v2061
  %v2306 = vpack.c.bf16 %v2072, %v2069
  %v2307 = vpack.c.bf16 %v2080, %v2077
  %v2308 = vpack.c.bf16 %v2088, %v2085
  %v2309 = vpack.c.bf16 %v2096, %v2093
  %v2310 = vpack.c.bf16 %v2104, %v2101
  %v2311 = vpack.c.bf16 %v2112, %v2109
  %v2312 = vpack.c.bf16 %v2120, %v2117
  %v2313 = vpack.c.bf16 %v2128, %v2125
  %v2314 = vpack.c.bf16 %v2136, %v2133
  %v2315 = vpack.c.bf16 %v2144, %v2141
  %v2316 = vpack.c.bf16 %v2152, %v2149
  %v2317 = vpack.c.bf16 %v2160, %v2157
  %v2318 = vpack.c.bf16 %v2168, %v2165
  %v2319 = vpack.c.bf16 %v2176, %v2173
  %v2320 = vpack.c.bf16 %v2184, %v2181
  %v2321 = vpack.c.bf16 %v2192, %v2189
  %v2322 = vpack.c.bf16 %v2200, %v2197
  %v2323 = vpack.c.bf16 %v2208, %v2205
  %v2324 = vpack.c.bf16 %v2216, %v2213
  %v2325 = vpack.c.bf16 %v2224, %v2221
  %v2326 = vpack.c.bf16 %v2232, %v2229
  %v2327 = vpack.c.bf16 %v2240, %v2237
  %v2328 = vpack.c.bf16 %v2248, %v2245
  %v2329 = vpack.c.bf16 %v2256, %v2253
  %v2330 = vpack.c.bf16 %v2264, %v2261
  %v2335 = vunpack.c.l.b16 %v2267
  %v2336 = vunpack.c.h.b16 %v2267
  %v2337 = vunpack.c.l.b16 %v2268
  %v2338 = vunpack.c.h.b16 %v2268
  %v2339 = vunpack.c.l.b16 %v2269
  %v2340 = vunpack.c.h.b16 %v2269
  %v2341 = vunpack.c.l.b16 %v2270
  %v2342 = vunpack.c.h.b16 %v2270
  %v2343 = vpack.c.b16 %v2335, %v2335
  %v2344 = vpack.c.b16 %v2336, %v2336
  %v2345 = vpack.c.b16 %v2337, %v2337
  %v2346 = vpack.c.b16 %v2338, %v2338
  %v2347 = vpack.c.b16 %v2339, %v2339
  %v2348 = vpack.c.b16 %v2340, %v2340
  %v2349 = vpack.c.b16 %v2341, %v2341
  %v2350 = vpack.c.b16 %v2342, %v2342
  %2359 = vst [vmem:[#allocation4] sm:$0xf] %v2343
  %2360 = vst [vmem:[#allocation4 + $0x40] sm:$0xf] %v2344
  %2361 = vst [vmem:[#allocation4 + $0x80] sm:$0xf] %v2345
  %2362 = vst [vmem:[#allocation4 + $0xc0] sm:$0xf] %v2346
  %2363 = vst [vmem:[#allocation4 + $0x100] sm:$0xf] %v2347
  %2364 = vst [vmem:[#allocation4 + $0x140] sm:$0xf] %v2348
  %2365 = vst [vmem:[#allocation4 + $0x180] sm:$0xf] %v2349
  %2366 = vst [vmem:[#allocation4 + $0x1c0] sm:$0xf] %v2350
  %v2371 = vunpack.c.l.b16 %v2271
  %v2372 = vunpack.c.h.b16 %v2271
  %v2373 = vunpack.c.l.b16 %v2272
  %v2374 = vunpack.c.h.b16 %v2272
  %v2375 = vunpack.c.l.b16 %v2273
  %v2376 = vunpack.c.h.b16 %v2273
  %v2377 = vunpack.c.l.b16 %v2274
  %v2378 = vunpack.c.h.b16 %v2274
  %v2379 = vpack.c.b16 %v2371, %v2371
  %v2380 = vpack.c.b16 %v2372, %v2372
  %v2381 = vpack.c.b16 %v2373, %v2373
  %v2382 = vpack.c.b16 %v2374, %v2374
  %v2383 = vpack.c.b16 %v2375, %v2375
  %v2384 = vpack.c.b16 %v2376, %v2376
  %v2385 = vpack.c.b16 %v2377, %v2377
  %v2386 = vpack.c.b16 %v2378, %v2378
  %2395 = vst [vmem:[#allocation4 + $0x4] sm:$0xf] %v2379
  %2396 = vst [vmem:[#allocation4 + $0x44] sm:$0xf] %v2380
  %2397 = vst [vmem:[#allocation4 + $0x84] sm:$0xf] %v2381
  %2398 = vst [vmem:[#allocation4 + $0xc4] sm:$0xf] %v2382
  %2399 = vst [vmem:[#allocation4 + $0x104] sm:$0xf] %v2383
  %2400 = vst [vmem:[#allocation4 + $0x144] sm:$0xf] %v2384
  %2401 = vst [vmem:[#allocation4 + $0x184] sm:$0xf] %v2385
  %2402 = vst [vmem:[#allocation4 + $0x1c4] sm:$0xf] %v2386
  %v2407 = vunpack.c.l.b16 %v2275
  %v2408 = vunpack.c.h.b16 %v2275
  %v2409 = vunpack.c.l.b16 %v2276
  %v2410 = vunpack.c.h.b16 %v2276
  %v2411 = vunpack.c.l.b16 %v2277
  %v2412 = vunpack.c.h.b16 %v2277
  %v2413 = vunpack.c.l.b16 %v2278
  %v2414 = vunpack.c.h.b16 %v2278
  %v2415 = vpack.c.b16 %v2407, %v2407
  %v2416 = vpack.c.b16 %v2408, %v2408
  %v2417 = vpack.c.b16 %v2409, %v2409
  %v2418 = vpack.c.b16 %v2410, %v2410
  %v2419 = vpack.c.b16 %v2411, %v2411
  %v2420 = vpack.c.b16 %v2412, %v2412
  %v2421 = vpack.c.b16 %v2413, %v2413
  %v2422 = vpack.c.b16 %v2414, %v2414
  %2431 = vst [vmem:[#allocation4 + $0x8] sm:$0xf] %v2415
  %2432 = vst [vmem:[#allocation4 + $0x48] sm:$0xf] %v2416
  %2433 = vst [vmem:[#allocation4 + $0x88] sm:$0xf] %v2417
  %2434 = vst [vmem:[#allocation4 + $0xc8] sm:$0xf] %v2418
  %2435 = vst [vmem:[#allocation4 + $0x108] sm:$0xf] %v2419
  %2436 = vst [vmem:[#allocation4 + $0x148] sm:$0xf] %v2420
  %2437 = vst [vmem:[#allocation4 + $0x188] sm:$0xf] %v2421
  %2438 = vst [vmem:[#allocation4 + $0x1c8] sm:$0xf] %v2422
  %v2443 = vunpack.c.l.b16 %v2279
  %v2444 = vunpack.c.h.b16 %v2279
  %v2445 = vunpack.c.l.b16 %v2280
  %v2446 = vunpack.c.h.b16 %v2280
  %v2447 = vunpack.c.l.b16 %v2281
  %v2448 = vunpack.c.h.b16 %v2281
  %v2449 = vunpack.c.l.b16 %v2282
  %v2450 = vunpack.c.h.b16 %v2282
  %v2451 = vpack.c.b16 %v2443, %v2443
  %v2452 = vpack.c.b16 %v2444, %v2444
  %v2453 = vpack.c.b16 %v2445, %v2445
  %v2454 = vpack.c.b16 %v2446, %v2446
  %v2455 = vpack.c.b16 %v2447, %v2447
  %v2456 = vpack.c.b16 %v2448, %v2448
  %v2457 = vpack.c.b16 %v2449, %v2449
  %v2458 = vpack.c.b16 %v2450, %v2450
  %2467 = vst [vmem:[#allocation4 + $0xc] sm:$0xf] %v2451
  %2468 = vst [vmem:[#allocation4 + $0x4c] sm:$0xf] %v2452
  %2469 = vst [vmem:[#allocation4 + $0x8c] sm:$0xf] %v2453
  %2470 = vst [vmem:[#allocation4 + $0xcc] sm:$0xf] %v2454
  %2471 = vst [vmem:[#allocation4 + $0x10c] sm:$0xf] %v2455
  %2472 = vst [vmem:[#allocation4 + $0x14c] sm:$0xf] %v2456
  %2473 = vst [vmem:[#allocation4 + $0x18c] sm:$0xf] %v2457
  %2474 = vst [vmem:[#allocation4 + $0x1cc] sm:$0xf] %v2458
  %v2479 = vunpack.c.l.b16 %v2283
  %v2480 = vunpack.c.h.b16 %v2283
  %v2481 = vunpack.c.l.b16 %v2284
  %v2482 = vunpack.c.h.b16 %v2284
  %v2483 = vunpack.c.l.b16 %v2285
  %v2484 = vunpack.c.h.b16 %v2285
  %v2485 = vunpack.c.l.b16 %v2286
  %v2486 = vunpack.c.h.b16 %v2286
  %v2487 = vpack.c.b16 %v2479, %v2479
  %v2488 = vpack.c.b16 %v2480, %v2480
  %v2489 = vpack.c.b16 %v2481, %v2481
  %v2490 = vpack.c.b16 %v2482, %v2482
  %v2491 = vpack.c.b16 %v2483, %v2483
  %v2492 = vpack.c.b16 %v2484, %v2484
  %v2493 = vpack.c.b16 %v2485, %v2485
  %v2494 = vpack.c.b16 %v2486, %v2486
  %2503 = vst [vmem:[#allocation4 + $0x10] sm:$0xf] %v2487
  %2504 = vst [vmem:[#allocation4 + $0x50] sm:$0xf] %v2488
  %2505 = vst [vmem:[#allocation4 + $0x90] sm:$0xf] %v2489
  %2506 = vst [vmem:[#allocation4 + $0xd0] sm:$0xf] %v2490
  %2507 = vst [vmem:[#allocation4 + $0x110] sm:$0xf] %v2491
  %2508 = vst [vmem:[#allocation4 + $0x150] sm:$0xf] %v2492
  %2509 = vst [vmem:[#allocation4 + $0x190] sm:$0xf] %v2493
  %2510 = vst [vmem:[#allocation4 + $0x1d0] sm:$0xf] %v2494
  %v2515 = vunpack.c.l.b16 %v2287
  %v2516 = vunpack.c.h.b16 %v2287
  %v2517 = vunpack.c.l.b16 %v2288
  %v2518 = vunpack.c.h.b16 %v2288
  %v2519 = vunpack.c.l.b16 %v2289
  %v2520 = vunpack.c.h.b16 %v2289
  %v2521 = vunpack.c.l.b16 %v2290
  %v2522 = vunpack.c.h.b16 %v2290
  %v2523 = vpack.c.b16 %v2515, %v2515
  %v2524 = vpack.c.b16 %v2516, %v2516
  %v2525 = vpack.c.b16 %v2517, %v2517
  %v2526 = vpack.c.b16 %v2518, %v2518
  %v2527 = vpack.c.b16 %v2519, %v2519
  %v2528 = vpack.c.b16 %v2520, %v2520
  %v2529 = vpack.c.b16 %v2521, %v2521
  %v2530 = vpack.c.b16 %v2522, %v2522
  %2539 = vst [vmem:[#allocation4 + $0x14] sm:$0xf] %v2523
  %2540 = vst [vmem:[#allocation4 + $0x54] sm:$0xf] %v2524
  %2541 = vst [vmem:[#allocation4 + $0x94] sm:$0xf] %v2525
  %2542 = vst [vmem:[#allocation4 + $0xd4] sm:$0xf] %v2526
  %2543 = vst [vmem:[#allocation4 + $0x114] sm:$0xf] %v2527
  %2544 = vst [vmem:[#allocation4 + $0x154] sm:$0xf] %v2528
  %2545 = vst [vmem:[#allocation4 + $0x194] sm:$0xf] %v2529
  %2546 = vst [vmem:[#allocation4 + $0x1d4] sm:$0xf] %v2530
  %v2551 = vunpack.c.l.b16 %v2291
  %v2552 = vunpack.c.h.b16 %v2291
  %v2553 = vunpack.c.l.b16 %v2292
  %v2554 = vunpack.c.h.b16 %v2292
  %v2555 = vunpack.c.l.b16 %v2293
  %v2556 = vunpack.c.h.b16 %v2293
  %v2557 = vunpack.c.l.b16 %v2294
  %v2558 = vunpack.c.h.b16 %v2294
  %v2559 = vpack.c.b16 %v2551, %v2551
  %v2560 = vpack.c.b16 %v2552, %v2552
  %v2561 = vpack.c.b16 %v2553, %v2553
  %v2562 = vpack.c.b16 %v2554, %v2554
  %v2563 = vpack.c.b16 %v2555, %v2555
  %v2564 = vpack.c.b16 %v2556, %v2556
  %v2565 = vpack.c.b16 %v2557, %v2557
  %v2566 = vpack.c.b16 %v2558, %v2558
  %2575 = vst [vmem:[#allocation4 + $0x18] sm:$0xf] %v2559
  %2576 = vst [vmem:[#allocation4 + $0x58] sm:$0xf] %v2560
  %2577 = vst [vmem:[#allocation4 + $0x98] sm:$0xf] %v2561
  %2578 = vst [vmem:[#allocation4 + $0xd8] sm:$0xf] %v2562
  %2579 = vst [vmem:[#allocation4 + $0x118] sm:$0xf] %v2563
  %2580 = vst [vmem:[#allocation4 + $0x158] sm:$0xf] %v2564
  %2581 = vst [vmem:[#allocation4 + $0x198] sm:$0xf] %v2565
  %2582 = vst [vmem:[#allocation4 + $0x1d8] sm:$0xf] %v2566
  %v2587 = vunpack.c.l.b16 %v2295
  %v2588 = vunpack.c.h.b16 %v2295
  %v2589 = vunpack.c.l.b16 %v2296
  %v2590 = vunpack.c.h.b16 %v2296
  %v2591 = vunpack.c.l.b16 %v2297
  %v2592 = vunpack.c.h.b16 %v2297
  %v2593 = vunpack.c.l.b16 %v2298
  %v2594 = vunpack.c.h.b16 %v2298
  %v2595 = vpack.c.b16 %v2587, %v2587
  %v2596 = vpack.c.b16 %v2588, %v2588
  %v2597 = vpack.c.b16 %v2589, %v2589
  %v2598 = vpack.c.b16 %v2590, %v2590
  %v2599 = vpack.c.b16 %v2591, %v2591
  %v2600 = vpack.c.b16 %v2592, %v2592
  %v2601 = vpack.c.b16 %v2593, %v2593
  %v2602 = vpack.c.b16 %v2594, %v2594
  %2611 = vst [vmem:[#allocation4 + $0x1c] sm:$0xf] %v2595
  %2612 = vst [vmem:[#allocation4 + $0x5c] sm:$0xf] %v2596
  %2613 = vst [vmem:[#allocation4 + $0x9c] sm:$0xf] %v2597
  %2614 = vst [vmem:[#allocation4 + $0xdc] sm:$0xf] %v2598
  %2615 = vst [vmem:[#allocation4 + $0x11c] sm:$0xf] %v2599
  %2616 = vst [vmem:[#allocation4 + $0x15c] sm:$0xf] %v2600
  %2617 = vst [vmem:[#allocation4 + $0x19c] sm:$0xf] %v2601
  %2618 = vst [vmem:[#allocation4 + $0x1dc] sm:$0xf] %v2602
  %v2623 = vunpack.c.l.b16 %v2299
  %v2624 = vunpack.c.h.b16 %v2299
  %v2625 = vunpack.c.l.b16 %v2300
  %v2626 = vunpack.c.h.b16 %v2300
  %v2627 = vunpack.c.l.b16 %v2301
  %v2628 = vunpack.c.h.b16 %v2301
  %v2629 = vunpack.c.l.b16 %v2302
  %v2630 = vunpack.c.h.b16 %v2302
  %v2631 = vpack.c.b16 %v2623, %v2623
  %v2632 = vpack.c.b16 %v2624, %v2624
  %v2633 = vpack.c.b16 %v2625, %v2625
  %v2634 = vpack.c.b16 %v2626, %v2626
  %v2635 = vpack.c.b16 %v2627, %v2627
  %v2636 = vpack.c.b16 %v2628, %v2628
  %v2637 = vpack.c.b16 %v2629, %v2629
  %v2638 = vpack.c.b16 %v2630, %v2630
  %2647 = vst [vmem:[#allocation4 + $0x20] sm:$0xf] %v2631
  %2648 = vst [vmem:[#allocation4 + $0x60] sm:$0xf] %v2632
  %2649 = vst [vmem:[#allocation4 + $0xa0] sm:$0xf] %v2633
  %2650 = vst [vmem:[#allocation4 + $0xe0] sm:$0xf] %v2634
  %2651 = vst [vmem:[#allocation4 + $0x120] sm:$0xf] %v2635
  %2652 = vst [vmem:[#allocation4 + $0x160] sm:$0xf] %v2636
  %2653 = vst [vmem:[#allocation4 + $0x1a0] sm:$0xf] %v2637
  %2654 = vst [vmem:[#allocation4 + $0x1e0] sm:$0xf] %v2638
  %v2659 = vunpack.c.l.b16 %v2303
  %v2660 = vunpack.c.h.b16 %v2303
  %v2661 = vunpack.c.l.b16 %v2304
  %v2662 = vunpack.c.h.b16 %v2304
  %v2663 = vunpack.c.l.b16 %v2305
  %v2664 = vunpack.c.h.b16 %v2305
  %v2665 = vunpack.c.l.b16 %v2306
  %v2666 = vunpack.c.h.b16 %v2306
  %v2667 = vpack.c.b16 %v2659, %v2659
  %v2668 = vpack.c.b16 %v2660, %v2660
  %v2669 = vpack.c.b16 %v2661, %v2661
  %v2670 = vpack.c.b16 %v2662, %v2662
  %v2671 = vpack.c.b16 %v2663, %v2663
  %v2672 = vpack.c.b16 %v2664, %v2664
  %v2673 = vpack.c.b16 %v2665, %v2665
  %v2674 = vpack.c.b16 %v2666, %v2666
  %2683 = vst [vmem:[#allocation4 + $0x24] sm:$0xf] %v2667
  %2684 = vst [vmem:[#allocation4 + $0x64] sm:$0xf] %v2668
  %2685 = vst [vmem:[#allocation4 + $0xa4] sm:$0xf] %v2669
  %2686 = vst [vmem:[#allocation4 + $0xe4] sm:$0xf] %v2670
  %2687 = vst [vmem:[#allocation4 + $0x124] sm:$0xf] %v2671
  %2688 = vst [vmem:[#allocation4 + $0x164] sm:$0xf] %v2672
  %2689 = vst [vmem:[#allocation4 + $0x1a4] sm:$0xf] %v2673
  %2690 = vst [vmem:[#allocation4 + $0x1e4] sm:$0xf] %v2674
  %v2695 = vunpack.c.l.b16 %v2307
  %v2696 = vunpack.c.h.b16 %v2307
  %v2697 = vunpack.c.l.b16 %v2308
  %v2698 = vunpack.c.h.b16 %v2308
  %v2699 = vunpack.c.l.b16 %v2309
  %v2700 = vunpack.c.h.b16 %v2309
  %v2701 = vunpack.c.l.b16 %v2310
  %v2702 = vunpack.c.h.b16 %v2310
  %v2703 = vpack.c.b16 %v2695, %v2695
  %v2704 = vpack.c.b16 %v2696, %v2696
  %v2705 = vpack.c.b16 %v2697, %v2697
  %v2706 = vpack.c.b16 %v2698, %v2698
  %v2707 = vpack.c.b16 %v2699, %v2699
  %v2708 = vpack.c.b16 %v2700, %v2700
  %v2709 = vpack.c.b16 %v2701, %v2701
  %v2710 = vpack.c.b16 %v2702, %v2702
  %2719 = vst [vmem:[#allocation4 + $0x28] sm:$0xf] %v2703
  %2720 = vst [vmem:[#allocation4 + $0x68] sm:$0xf] %v2704
  %2721 = vst [vmem:[#allocation4 + $0xa8] sm:$0xf] %v2705
  %2722 = vst [vmem:[#allocation4 + $0xe8] sm:$0xf] %v2706
  %2723 = vst [vmem:[#allocation4 + $0x128] sm:$0xf] %v2707
  %2724 = vst [vmem:[#allocation4 + $0x168] sm:$0xf] %v2708
  %2725 = vst [vmem:[#allocation4 + $0x1a8] sm:$0xf] %v2709
  %2726 = vst [vmem:[#allocation4 + $0x1e8] sm:$0xf] %v2710
  %v2731 = vunpack.c.l.b16 %v2311
  %v2732 = vunpack.c.h.b16 %v2311
  %v2733 = vunpack.c.l.b16 %v2312
  %v2734 = vunpack.c.h.b16 %v2312
  %v2735 = vunpack.c.l.b16 %v2313
  %v2736 = vunpack.c.h.b16 %v2313
  %v2737 = vunpack.c.l.b16 %v2314
  %v2738 = vunpack.c.h.b16 %v2314
  %v2739 = vpack.c.b16 %v2731, %v2731
  %v2740 = vpack.c.b16 %v2732, %v2732
  %v2741 = vpack.c.b16 %v2733, %v2733
  %v2742 = vpack.c.b16 %v2734, %v2734
  %v2743 = vpack.c.b16 %v2735, %v2735
  %v2744 = vpack.c.b16 %v2736, %v2736
  %v2745 = vpack.c.b16 %v2737, %v2737
  %v2746 = vpack.c.b16 %v2738, %v2738
  %2755 = vst [vmem:[#allocation4 + $0x2c] sm:$0xf] %v2739
  %2756 = vst [vmem:[#allocation4 + $0x6c] sm:$0xf] %v2740
  %2757 = vst [vmem:[#allocation4 + $0xac] sm:$0xf] %v2741
  %2758 = vst [vmem:[#allocation4 + $0xec] sm:$0xf] %v2742
  %2759 = vst [vmem:[#allocation4 + $0x12c] sm:$0xf] %v2743
  %2760 = vst [vmem:[#allocation4 + $0x16c] sm:$0xf] %v2744
  %2761 = vst [vmem:[#allocation4 + $0x1ac] sm:$0xf] %v2745
  %2762 = vst [vmem:[#allocation4 + $0x1ec] sm:$0xf] %v2746
  %v2767 = vunpack.c.l.b16 %v2315
  %v2768 = vunpack.c.h.b16 %v2315
  %v2769 = vunpack.c.l.b16 %v2316
  %v2770 = vunpack.c.h.b16 %v2316
  %v2771 = vunpack.c.l.b16 %v2317
  %v2772 = vunpack.c.h.b16 %v2317
  %v2773 = vunpack.c.l.b16 %v2318
  %v2774 = vunpack.c.h.b16 %v2318
  %v2775 = vpack.c.b16 %v2767, %v2767
  %v2776 = vpack.c.b16 %v2768, %v2768
  %v2777 = vpack.c.b16 %v2769, %v2769
  %v2778 = vpack.c.b16 %v2770, %v2770
  %v2779 = vpack.c.b16 %v2771, %v2771
  %v2780 = vpack.c.b16 %v2772, %v2772
  %v2781 = vpack.c.b16 %v2773, %v2773
  %v2782 = vpack.c.b16 %v2774, %v2774
  %2791 = vst [vmem:[#allocation4 + $0x30] sm:$0xf] %v2775
  %2792 = vst [vmem:[#allocation4 + $0x70] sm:$0xf] %v2776
  %2793 = vst [vmem:[#allocation4 + $0xb0] sm:$0xf] %v2777
  %2794 = vst [vmem:[#allocation4 + $0xf0] sm:$0xf] %v2778
  %2795 = vst [vmem:[#allocation4 + $0x130] sm:$0xf] %v2779
  %2796 = vst [vmem:[#allocation4 + $0x170] sm:$0xf] %v2780
  %2797 = vst [vmem:[#allocation4 + $0x1b0] sm:$0xf] %v2781
  %2798 = vst [vmem:[#allocation4 + $0x1f0] sm:$0xf] %v2782
  %v2803 = vunpack.c.l.b16 %v2319
  %v2804 = vunpack.c.h.b16 %v2319
  %v2805 = vunpack.c.l.b16 %v2320
  %v2806 = vunpack.c.h.b16 %v2320
  %v2807 = vunpack.c.l.b16 %v2321
  %v2808 = vunpack.c.h.b16 %v2321
  %v2809 = vunpack.c.l.b16 %v2322
  %v2810 = vunpack.c.h.b16 %v2322
  %v2811 = vpack.c.b16 %v2803, %v2803
  %v2812 = vpack.c.b16 %v2804, %v2804
  %v2813 = vpack.c.b16 %v2805, %v2805
  %v2814 = vpack.c.b16 %v2806, %v2806
  %v2815 = vpack.c.b16 %v2807, %v2807
  %v2816 = vpack.c.b16 %v2808, %v2808
  %v2817 = vpack.c.b16 %v2809, %v2809
  %v2818 = vpack.c.b16 %v2810, %v2810
  %2827 = vst [vmem:[#allocation4 + $0x34] sm:$0xf] %v2811
  %2828 = vst [vmem:[#allocation4 + $0x74] sm:$0xf] %v2812
  %2829 = vst [vmem:[#allocation4 + $0xb4] sm:$0xf] %v2813
  %2830 = vst [vmem:[#allocation4 + $0xf4] sm:$0xf] %v2814
  %2831 = vst [vmem:[#allocation4 + $0x134] sm:$0xf] %v2815
  %2832 = vst [vmem:[#allocation4 + $0x174] sm:$0xf] %v2816
  %2833 = vst [vmem:[#allocation4 + $0x1b4] sm:$0xf] %v2817
  %2834 = vst [vmem:[#allocation4 + $0x1f4] sm:$0xf] %v2818
  %v2839 = vunpack.c.l.b16 %v2323
  %v2840 = vunpack.c.h.b16 %v2323
  %v2841 = vunpack.c.l.b16 %v2324
  %v2842 = vunpack.c.h.b16 %v2324
  %v2843 = vunpack.c.l.b16 %v2325
  %v2844 = vunpack.c.h.b16 %v2325
  %v2845 = vunpack.c.l.b16 %v2326
  %v2846 = vunpack.c.h.b16 %v2326
  %v2847 = vpack.c.b16 %v2839, %v2839
  %v2848 = vpack.c.b16 %v2840, %v2840
  %v2849 = vpack.c.b16 %v2841, %v2841
  %v2850 = vpack.c.b16 %v2842, %v2842
  %v2851 = vpack.c.b16 %v2843, %v2843
  %v2852 = vpack.c.b16 %v2844, %v2844
  %v2853 = vpack.c.b16 %v2845, %v2845
  %v2854 = vpack.c.b16 %v2846, %v2846
  %2863 = vst [vmem:[#allocation4 + $0x38] sm:$0xf] %v2847
  %2864 = vst [vmem:[#allocation4 + $0x78] sm:$0xf] %v2848
  %2865 = vst [vmem:[#allocation4 + $0xb8] sm:$0xf] %v2849
  %2866 = vst [vmem:[#allocation4 + $0xf8] sm:$0xf] %v2850
  %2867 = vst [vmem:[#allocation4 + $0x138] sm:$0xf] %v2851
  %2868 = vst [vmem:[#allocation4 + $0x178] sm:$0xf] %v2852
  %2869 = vst [vmem:[#allocation4 + $0x1b8] sm:$0xf] %v2853
  %2870 = vst [vmem:[#allocation4 + $0x1f8] sm:$0xf] %v2854
  %v2875 = vunpack.c.l.b16 %v2327
  %v2876 = vunpack.c.h.b16 %v2327
  %v2877 = vunpack.c.l.b16 %v2328
  %v2878 = vunpack.c.h.b16 %v2328
  %v2879 = vunpack.c.l.b16 %v2329
  %v2880 = vunpack.c.h.b16 %v2329
  %v2881 = vunpack.c.l.b16 %v2330
  %v2882 = vunpack.c.h.b16 %v2330
  %v2883 = vpack.c.b16 %v2875, %v2875
  %v2884 = vpack.c.b16 %v2876, %v2876
  %v2885 = vpack.c.b16 %v2877, %v2877
  %v2886 = vpack.c.b16 %v2878, %v2878
  %v2887 = vpack.c.b16 %v2879, %v2879
  %v2888 = vpack.c.b16 %v2880, %v2880
  %v2889 = vpack.c.b16 %v2881, %v2881
  %v2890 = vpack.c.b16 %v2882, %v2882
  %2899 = vst [vmem:[#allocation4 + $0x3c] sm:$0xf] %v2883
  %2900 = vst [vmem:[#allocation4 + $0x7c] sm:$0xf] %v2884
  %2901 = vst [vmem:[#allocation4 + $0xbc] sm:$0xf] %v2885
  %2902 = vst [vmem:[#allocation4 + $0xfc] sm:$0xf] %v2886
  %2903 = vst [vmem:[#allocation4 + $0x13c] sm:$0xf] %v2887
  %2904 = vst [vmem:[#allocation4 + $0x17c] sm:$0xf] %v2888
  %2905 = vst [vmem:[#allocation4 + $0x1bc] sm:$0xf] %v2889
  %2906 = vst [vmem:[#allocation4 + $0x1fc] sm:$0xf] %v2890
  %s2907 = smul.u32 4, 256
  %s2908 = smul.u32 %s2907, 1
  %s2909 = sshll.u32 %s2908, 4
  %2910 = dma.done %s334, %s2909
  %v2911 = vld [vmem:[#allocation4] sm:$0xff]
  %v2912 = vld [vmem:[#allocation4 + $0x8] sm:$0xff]
  %v2913 = vld [vmem:[#allocation4 + $0x10] sm:$0xff]
  %v2914 = vld [vmem:[#allocation4 + $0x18] sm:$0xff]
  %v2915 = vld [vmem:[#allocation4 + $0x20] sm:$0xff]
  %v2916 = vld [vmem:[#allocation4 + $0x28] sm:$0xff]
  %v2917 = vld [vmem:[#allocation4 + $0x30] sm:$0xff]
  %v2918 = vld [vmem:[#allocation4 + $0x38] sm:$0xff]
  %v2919 = vld [vmem:[#allocation4 + $0x40] sm:$0xff]
  %v2920 = vld [vmem:[#allocation4 + $0x48] sm:$0xff]
  %v2921 = vld [vmem:[#allocation4 + $0x50] sm:$0xff]
  %v2922 = vld [vmem:[#allocation4 + $0x58] sm:$0xff]
  %v2923 = vld [vmem:[#allocation4 + $0x60] sm:$0xff]
  %v2924 = vld [vmem:[#allocation4 + $0x68] sm:$0xff]
  %v2925 = vld [vmem:[#allocation4 + $0x70] sm:$0xff]
  %v2926 = vld [vmem:[#allocation4 + $0x78] sm:$0xff]
  %v2927 = vld [vmem:[#allocation4 + $0x80] sm:$0xff]
  %v2928 = vld [vmem:[#allocation4 + $0x88] sm:$0xff]
  %v2929 = vld [vmem:[#allocation4 + $0x90] sm:$0xff]
  %v2930 = vld [vmem:[#allocation4 + $0x98] sm:$0xff]
  %v2931 = vld [vmem:[#allocation4 + $0xa0] sm:$0xff]
  %v2932 = vld [vmem:[#allocation4 + $0xa8] sm:$0xff]
  %v2933 = vld [vmem:[#allocation4 + $0xb0] sm:$0xff]
  %v2934 = vld [vmem:[#allocation4 + $0xb8] sm:$0xff]
  %v2935 = vld [vmem:[#allocation4 + $0xc0] sm:$0xff]
  %v2936 = vld [vmem:[#allocation4 + $0xc8] sm:$0xff]
  %v2937 = vld [vmem:[#allocation4 + $0xd0] sm:$0xff]
  %v2938 = vld [vmem:[#allocation4 + $0xd8] sm:$0xff]
  %v2939 = vld [vmem:[#allocation4 + $0xe0] sm:$0xff]
  %v2940 = vld [vmem:[#allocation4 + $0xe8] sm:$0xff]
  %v2941 = vld [vmem:[#allocation4 + $0xf0] sm:$0xff]
  %v2942 = vld [vmem:[#allocation4 + $0xf8] sm:$0xff]
  %v2943 = vld [vmem:[#allocation4 + $0x100] sm:$0xff]
  %v2944 = vld [vmem:[#allocation4 + $0x108] sm:$0xff]
  %v2945 = vld [vmem:[#allocation4 + $0x110] sm:$0xff]
  %v2946 = vld [vmem:[#allocation4 + $0x118] sm:$0xff]
  %v2947 = vld [vmem:[#allocation4 + $0x120] sm:$0xff]
  %v2948 = vld [vmem:[#allocation4 + $0x128] sm:$0xff]
  %v2949 = vld [vmem:[#allocation4 + $0x130] sm:$0xff]
  %v2950 = vld [vmem:[#allocation4 + $0x138] sm:$0xff]
  %v2951 = vld [vmem:[#allocation4 + $0x140] sm:$0xff]
  %v2952 = vld [vmem:[#allocation4 + $0x148] sm:$0xff]
  %v2953 = vld [vmem:[#allocation4 + $0x150] sm:$0xff]
  %v2954 = vld [vmem:[#allocation4 + $0x158] sm:$0xff]
  %v2955 = vld [vmem:[#allocation4 + $0x160] sm:$0xff]
  %v2956 = vld [vmem:[#allocation4 + $0x168] sm:$0xff]
  %v2957 = vld [vmem:[#allocation4 + $0x170] sm:$0xff]
  %v2958 = vld [vmem:[#allocation4 + $0x178] sm:$0xff]
  %v2959 = vld [vmem:[#allocation4 + $0x180] sm:$0xff]
  %v2960 = vld [vmem:[#allocation4 + $0x188] sm:$0xff]
  %v2961 = vld [vmem:[#allocation4 + $0x190] sm:$0xff]
  %v2962 = vld [vmem:[#allocation4 + $0x198] sm:$0xff]
  %v2963 = vld [vmem:[#allocation4 + $0x1a0] sm:$0xff]
  %v2964 = vld [vmem:[#allocation4 + $0x1a8] sm:$0xff]
  %v2965 = vld [vmem:[#allocation4 + $0x1b0] sm:$0xff]
  %v2966 = vld [vmem:[#allocation4 + $0x1b8] sm:$0xff]
  %v2967 = vld [vmem:[#allocation4 + $0x1c0] sm:$0xff]
  %v2968 = vld [vmem:[#allocation4 + $0x1c8] sm:$0xff]
  %v2969 = vld [vmem:[#allocation4 + $0x1d0] sm:$0xff]
  %v2970 = vld [vmem:[#allocation4 + $0x1d8] sm:$0xff]
  %v2971 = vld [vmem:[#allocation4 + $0x1e0] sm:$0xff]
  %v2972 = vld [vmem:[#allocation4 + $0x1e8] sm:$0xff]
  %v2973 = vld [vmem:[#allocation4 + $0x1f0] sm:$0xff]
  %v2974 = vld [vmem:[#allocation4 + $0x1f8] sm:$0xff]
  %v2975 = vld [vmem:[#allocation3] sm:$0xf]
  %v2976 = vld [vmem:[#allocation3 + $0x4] sm:$0xf]
  %v2977 = vld [vmem:[#allocation3 + $0x8] sm:$0xf]
  %v2978 = vld [vmem:[#allocation3 + $0xc] sm:$0xf]
  %v2979 = vld [vmem:[#allocation3 + $0x10] sm:$0xf]
  %v2980 = vld [vmem:[#allocation3 + $0x14] sm:$0xf]
  %v2981 = vld [vmem:[#allocation3 + $0x18] sm:$0xf]
  %v2982 = vld [vmem:[#allocation3 + $0x1c] sm:$0xf]
  %v2983 = vld [vmem:[#allocation3 + $0x20] sm:$0xf]
  %v2984 = vld [vmem:[#allocation3 + $0x24] sm:$0xf]
  %v2985 = vld [vmem:[#allocation3 + $0x28] sm:$0xf]
  %v2986 = vld [vmem:[#allocation3 + $0x2c] sm:$0xf]
  %v2987 = vld [vmem:[#allocation3 + $0x30] sm:$0xf]
  %v2988 = vld [vmem:[#allocation3 + $0x34] sm:$0xf]
  %v2989 = vld [vmem:[#allocation3 + $0x38] sm:$0xf]
  %v2990 = vld [vmem:[#allocation3 + $0x3c] sm:$0xf]
  %v2991 = vld [vmem:[#allocation3 + $0x40] sm:$0xf]
  %v2992 = vld [vmem:[#allocation3 + $0x44] sm:$0xf]
  %v2993 = vld [vmem:[#allocation3 + $0x48] sm:$0xf]
  %v2994 = vld [vmem:[#allocation3 + $0x4c] sm:$0xf]
  %v2995 = vld [vmem:[#allocation3 + $0x50] sm:$0xf]
  %v2996 = vld [vmem:[#allocation3 + $0x54] sm:$0xf]
  %v2997 = vld [vmem:[#allocation3 + $0x58] sm:$0xf]
  %v2998 = vld [vmem:[#allocation3 + $0x5c] sm:$0xf]
  %v2999 = vld [vmem:[#allocation3 + $0x60] sm:$0xf]
  %v3000 = vld [vmem:[#allocation3 + $0x64] sm:$0xf]
  %v3001 = vld [vmem:[#allocation3 + $0x68] sm:$0xf]
  %v3002 = vld [vmem:[#allocation3 + $0x6c] sm:$0xf]
  %v3003 = vld [vmem:[#allocation3 + $0x70] sm:$0xf]
  %v3004 = vld [vmem:[#allocation3 + $0x74] sm:$0xf]
  %v3005 = vld [vmem:[#allocation3 + $0x78] sm:$0xf]
  %v3006 = vld [vmem:[#allocation3 + $0x7c] sm:$0xf]
  %v3007 = vld [vmem:[#allocation3 + $0x80] sm:$0xf]
  %v3008 = vld [vmem:[#allocation3 + $0x84] sm:$0xf]
  %v3009 = vld [vmem:[#allocation3 + $0x88] sm:$0xf]
  %v3010 = vld [vmem:[#allocation3 + $0x8c] sm:$0xf]
  %v3011 = vld [vmem:[#allocation3 + $0x90] sm:$0xf]
  %v3012 = vld [vmem:[#allocation3 + $0x94] sm:$0xf]
  %v3013 = vld [vmem:[#allocation3 + $0x98] sm:$0xf]
  %v3014 = vld [vmem:[#allocation3 + $0x9c] sm:$0xf]
  %v3015 = vld [vmem:[#allocation3 + $0xa0] sm:$0xf]
  %v3016 = vld [vmem:[#allocation3 + $0xa4] sm:$0xf]
  %v3017 = vld [vmem:[#allocation3 + $0xa8] sm:$0xf]
  %v3018 = vld [vmem:[#allocation3 + $0xac] sm:$0xf]
  %v3019 = vld [vmem:[#allocation3 + $0xb0] sm:$0xf]
  %v3020 = vld [vmem:[#allocation3 + $0xb4] sm:$0xf]
  %v3021 = vld [vmem:[#allocation3 + $0xb8] sm:$0xf]
  %v3022 = vld [vmem:[#allocation3 + $0xbc] sm:$0xf]
  %v3023 = vld [vmem:[#allocation3 + $0xc0] sm:$0xf]
  %v3024 = vld [vmem:[#allocation3 + $0xc4] sm:$0xf]
  %v3025 = vld [vmem:[#allocation3 + $0xc8] sm:$0xf]
  %v3026 = vld [vmem:[#allocation3 + $0xcc] sm:$0xf]
  %v3027 = vld [vmem:[#allocation3 + $0xd0] sm:$0xf]
  %v3028 = vld [vmem:[#allocation3 + $0xd4] sm:$0xf]
  %v3029 = vld [vmem:[#allocation3 + $0xd8] sm:$0xf]
  %v3030 = vld [vmem:[#allocation3 + $0xdc] sm:$0xf]
  %v3031 = vld [vmem:[#allocation3 + $0xe0] sm:$0xf]
  %v3032 = vld [vmem:[#allocation3 + $0xe4] sm:$0xf]
  %v3033 = vld [vmem:[#allocation3 + $0xe8] sm:$0xf]
  %v3034 = vld [vmem:[#allocation3 + $0xec] sm:$0xf]
  %v3035 = vld [vmem:[#allocation3 + $0xf0] sm:$0xf]
  %v3036 = vld [vmem:[#allocation3 + $0xf4] sm:$0xf]
  %v3037 = vld [vmem:[#allocation3 + $0xf8] sm:$0xf]
  %v3038 = vld [vmem:[#allocation3 + $0xfc] sm:$0xf]
  %v3039 = vld [vmem:[#allocation3 + $0x100] sm:$0xf]
  %v3040 = vld [vmem:[#allocation3 + $0x104] sm:$0xf]
  %v3041 = vld [vmem:[#allocation3 + $0x108] sm:$0xf]
  %v3042 = vld [vmem:[#allocation3 + $0x10c] sm:$0xf]
  %v3043 = vld [vmem:[#allocation3 + $0x110] sm:$0xf]
  %v3044 = vld [vmem:[#allocation3 + $0x114] sm:$0xf]
  %v3045 = vld [vmem:[#allocation3 + $0x118] sm:$0xf]
  %v3046 = vld [vmem:[#allocation3 + $0x11c] sm:$0xf]
  %v3047 = vld [vmem:[#allocation3 + $0x120] sm:$0xf]
  %v3048 = vld [vmem:[#allocation3 + $0x124] sm:$0xf]
  %v3049 = vld [vmem:[#allocation3 + $0x128] sm:$0xf]
  %v3050 = vld [vmem:[#allocation3 + $0x12c] sm:$0xf]
  %v3051 = vld [vmem:[#allocation3 + $0x130] sm:$0xf]
  %v3052 = vld [vmem:[#allocation3 + $0x134] sm:$0xf]
  %v3053 = vld [vmem:[#allocation3 + $0x138] sm:$0xf]
  %v3054 = vld [vmem:[#allocation3 + $0x13c] sm:$0xf]
  %v3055 = vld [vmem:[#allocation3 + $0x140] sm:$0xf]
  %v3056 = vld [vmem:[#allocation3 + $0x144] sm:$0xf]
  %v3057 = vld [vmem:[#allocation3 + $0x148] sm:$0xf]
  %v3058 = vld [vmem:[#allocation3 + $0x14c] sm:$0xf]
  %v3059 = vld [vmem:[#allocation3 + $0x150] sm:$0xf]
  %v3060 = vld [vmem:[#allocation3 + $0x154] sm:$0xf]
  %v3061 = vld [vmem:[#allocation3 + $0x158] sm:$0xf]
  %v3062 = vld [vmem:[#allocation3 + $0x15c] sm:$0xf]
  %v3063 = vld [vmem:[#allocation3 + $0x160] sm:$0xf]
  %v3064 = vld [vmem:[#allocation3 + $0x164] sm:$0xf]
  %v3065 = vld [vmem:[#allocation3 + $0x168] sm:$0xf]
  %v3066 = vld [vmem:[#allocation3 + $0x16c] sm:$0xf]
  %v3067 = vld [vmem:[#allocation3 + $0x170] sm:$0xf]
  %v3068 = vld [vmem:[#allocation3 + $0x174] sm:$0xf]
  %v3069 = vld [vmem:[#allocation3 + $0x178] sm:$0xf]
  %v3070 = vld [vmem:[#allocation3 + $0x17c] sm:$0xf]
  %v3071 = vld [vmem:[#allocation3 + $0x180] sm:$0xf]
  %v3072 = vld [vmem:[#allocation3 + $0x184] sm:$0xf]
  %v3073 = vld [vmem:[#allocation3 + $0x188] sm:$0xf]
  %v3074 = vld [vmem:[#allocation3 + $0x18c] sm:$0xf]
  %v3075 = vld [vmem:[#allocation3 + $0x190] sm:$0xf]
  %v3076 = vld [vmem:[#allocation3 + $0x194] sm:$0xf]
  %v3077 = vld [vmem:[#allocation3 + $0x198] sm:$0xf]
  %v3078 = vld [vmem:[#allocation3 + $0x19c] sm:$0xf]
  %v3079 = vld [vmem:[#allocation3 + $0x1a0] sm:$0xf]
  %v3080 = vld [vmem:[#allocation3 + $0x1a4] sm:$0xf]
  %v3081 = vld [vmem:[#allocation3 + $0x1a8] sm:$0xf]
  %v3082 = vld [vmem:[#allocation3 + $0x1ac] sm:$0xf]
  %v3083 = vld [vmem:[#allocation3 + $0x1b0] sm:$0xf]
  %v3084 = vld [vmem:[#allocation3 + $0x1b4] sm:$0xf]
  %v3085 = vld [vmem:[#allocation3 + $0x1b8] sm:$0xf]
  %v3086 = vld [vmem:[#allocation3 + $0x1bc] sm:$0xf]
  %v3087 = vld [vmem:[#allocation3 + $0x1c0] sm:$0xf]
  %v3088 = vld [vmem:[#allocation3 + $0x1c4] sm:$0xf]
  %v3089 = vld [vmem:[#allocation3 + $0x1c8] sm:$0xf]
  %v3090 = vld [vmem:[#allocation3 + $0x1cc] sm:$0xf]
  %v3091 = vld [vmem:[#allocation3 + $0x1d0] sm:$0xf]
  %v3092 = vld [vmem:[#allocation3 + $0x1d4] sm:$0xf]
  %v3093 = vld [vmem:[#allocation3 + $0x1d8] sm:$0xf]
  %v3094 = vld [vmem:[#allocation3 + $0x1dc] sm:$0xf]
  %v3095 = vld [vmem:[#allocation3 + $0x1e0] sm:$0xf]
  %v3096 = vld [vmem:[#allocation3 + $0x1e4] sm:$0xf]
  %v3097 = vld [vmem:[#allocation3 + $0x1e8] sm:$0xf]
  %v3098 = vld [vmem:[#allocation3 + $0x1ec] sm:$0xf]
  %v3099 = vld [vmem:[#allocation3 + $0x1f0] sm:$0xf]
  %v3100 = vld [vmem:[#allocation3 + $0x1f4] sm:$0xf]
  %v3101 = vld [vmem:[#allocation3 + $0x1f8] sm:$0xf]
  %v3102 = vld [vmem:[#allocation3 + $0x1fc] sm:$0xf]
  %v3103 = vld [vmem:[#allocation3 + $0x200] sm:$0xf]
  %v3104 = vld [vmem:[#allocation3 + $0x204] sm:$0xf]
  %v3105 = vld [vmem:[#allocation3 + $0x208] sm:$0xf]
  %v3106 = vld [vmem:[#allocation3 + $0x20c] sm:$0xf]
  %v3107 = vld [vmem:[#allocation3 + $0x210] sm:$0xf]
  %v3108 = vld [vmem:[#allocation3 + $0x214] sm:$0xf]
  %v3109 = vld [vmem:[#allocation3 + $0x218] sm:$0xf]
  %v3110 = vld [vmem:[#allocation3 + $0x21c] sm:$0xf]
  %v3111 = vld [vmem:[#allocation3 + $0x220] sm:$0xf]
  %v3112 = vld [vmem:[#allocation3 + $0x224] sm:$0xf]
  %v3113 = vld [vmem:[#allocation3 + $0x228] sm:$0xf]
  %v3114 = vld [vmem:[#allocation3 + $0x22c] sm:$0xf]
  %v3115 = vld [vmem:[#allocation3 + $0x230] sm:$0xf]
  %v3116 = vld [vmem:[#allocation3 + $0x234] sm:$0xf]
  %v3117 = vld [vmem:[#allocation3 + $0x238] sm:$0xf]
  %v3118 = vld [vmem:[#allocation3 + $0x23c] sm:$0xf]
  %v3119 = vld [vmem:[#allocation3 + $0x240] sm:$0xf]
  %v3120 = vld [vmem:[#allocation3 + $0x244] sm:$0xf]
  %v3121 = vld [vmem:[#allocation3 + $0x248] sm:$0xf]
  %v3122 = vld [vmem:[#allocation3 + $0x24c] sm:$0xf]
  %v3123 = vld [vmem:[#allocation3 + $0x250] sm:$0xf]
  %v3124 = vld [vmem:[#allocation3 + $0x254] sm:$0xf]
  %v3125 = vld [vmem:[#allocation3 + $0x258] sm:$0xf]
  %v3126 = vld [vmem:[#allocation3 + $0x25c] sm:$0xf]
  %v3127 = vld [vmem:[#allocation3 + $0x260] sm:$0xf]
  %v3128 = vld [vmem:[#allocation3 + $0x264] sm:$0xf]
  %v3129 = vld [vmem:[#allocation3 + $0x268] sm:$0xf]
  %v3130 = vld [vmem:[#allocation3 + $0x26c] sm:$0xf]
  %v3131 = vld [vmem:[#allocation3 + $0x270] sm:$0xf]
  %v3132 = vld [vmem:[#allocation3 + $0x274] sm:$0xf]
  %v3133 = vld [vmem:[#allocation3 + $0x278] sm:$0xf]
  %v3134 = vld [vmem:[#allocation3 + $0x27c] sm:$0xf]
  %v3135 = vld [vmem:[#allocation3 + $0x280] sm:$0xf]
  %v3136 = vld [vmem:[#allocation3 + $0x284] sm:$0xf]
  %v3137 = vld [vmem:[#allocation3 + $0x288] sm:$0xf]
  %v3138 = vld [vmem:[#allocation3 + $0x28c] sm:$0xf]
  %v3139 = vld [vmem:[#allocation3 + $0x290] sm:$0xf]
  %v3140 = vld [vmem:[#allocation3 + $0x294] sm:$0xf]
  %v3141 = vld [vmem:[#allocation3 + $0x298] sm:$0xf]
  %v3142 = vld [vmem:[#allocation3 + $0x29c] sm:$0xf]
  %v3143 = vld [vmem:[#allocation3 + $0x2a0] sm:$0xf]
  %v3144 = vld [vmem:[#allocation3 + $0x2a4] sm:$0xf]
  %v3145 = vld [vmem:[#allocation3 + $0x2a8] sm:$0xf]
  %v3146 = vld [vmem:[#allocation3 + $0x2ac] sm:$0xf]
  %v3147 = vld [vmem:[#allocation3 + $0x2b0] sm:$0xf]
  %v3148 = vld [vmem:[#allocation3 + $0x2b4] sm:$0xf]
  %v3149 = vld [vmem:[#allocation3 + $0x2b8] sm:$0xf]
  %v3150 = vld [vmem:[#allocation3 + $0x2bc] sm:$0xf]
  %v3151 = vld [vmem:[#allocation3 + $0x2c0] sm:$0xf]
  %v3152 = vld [vmem:[#allocation3 + $0x2c4] sm:$0xf]
  %v3153 = vld [vmem:[#allocation3 + $0x2c8] sm:$0xf]
  %v3154 = vld [vmem:[#allocation3 + $0x2cc] sm:$0xf]
  %v3155 = vld [vmem:[#allocation3 + $0x2d0] sm:$0xf]
  %v3156 = vld [vmem:[#allocation3 + $0x2d4] sm:$0xf]
  %v3157 = vld [vmem:[#allocation3 + $0x2d8] sm:$0xf]
  %v3158 = vld [vmem:[#allocation3 + $0x2dc] sm:$0xf]
  %v3159 = vld [vmem:[#allocation3 + $0x2e0] sm:$0xf]
  %v3160 = vld [vmem:[#allocation3 + $0x2e4] sm:$0xf]
  %v3161 = vld [vmem:[#allocation3 + $0x2e8] sm:$0xf]
  %v3162 = vld [vmem:[#allocation3 + $0x2ec] sm:$0xf]
  %v3163 = vld [vmem:[#allocation3 + $0x2f0] sm:$0xf]
  %v3164 = vld [vmem:[#allocation3 + $0x2f4] sm:$0xf]
  %v3165 = vld [vmem:[#allocation3 + $0x2f8] sm:$0xf]
  %v3166 = vld [vmem:[#allocation3 + $0x2fc] sm:$0xf]
  %v3167 = vld [vmem:[#allocation3 + $0x300] sm:$0xf]
  %v3168 = vld [vmem:[#allocation3 + $0x304] sm:$0xf]
  %v3169 = vld [vmem:[#allocation3 + $0x308] sm:$0xf]
  %v3170 = vld [vmem:[#allocation3 + $0x30c] sm:$0xf]
  %v3171 = vld [vmem:[#allocation3 + $0x310] sm:$0xf]
  %v3172 = vld [vmem:[#allocation3 + $0x314] sm:$0xf]
  %v3173 = vld [vmem:[#allocation3 + $0x318] sm:$0xf]
  %v3174 = vld [vmem:[#allocation3 + $0x31c] sm:$0xf]
  %v3175 = vld [vmem:[#allocation3 + $0x320] sm:$0xf]
  %v3176 = vld [vmem:[#allocation3 + $0x324] sm:$0xf]
  %v3177 = vld [vmem:[#allocation3 + $0x328] sm:$0xf]
  %v3178 = vld [vmem:[#allocation3 + $0x32c] sm:$0xf]
  %v3179 = vld [vmem:[#allocation3 + $0x330] sm:$0xf]
  %v3180 = vld [vmem:[#allocation3 + $0x334] sm:$0xf]
  %v3181 = vld [vmem:[#allocation3 + $0x338] sm:$0xf]
  %v3182 = vld [vmem:[#allocation3 + $0x33c] sm:$0xf]
  %v3183 = vld [vmem:[#allocation3 + $0x340] sm:$0xf]
  %v3184 = vld [vmem:[#allocation3 + $0x344] sm:$0xf]
  %v3185 = vld [vmem:[#allocation3 + $0x348] sm:$0xf]
  %v3186 = vld [vmem:[#allocation3 + $0x34c] sm:$0xf]
  %v3187 = vld [vmem:[#allocation3 + $0x350] sm:$0xf]
  %v3188 = vld [vmem:[#allocation3 + $0x354] sm:$0xf]
  %v3189 = vld [vmem:[#allocation3 + $0x358] sm:$0xf]
  %v3190 = vld [vmem:[#allocation3 + $0x35c] sm:$0xf]
  %v3191 = vld [vmem:[#allocation3 + $0x360] sm:$0xf]
  %v3192 = vld [vmem:[#allocation3 + $0x364] sm:$0xf]
  %v3193 = vld [vmem:[#allocation3 + $0x368] sm:$0xf]
  %v3194 = vld [vmem:[#allocation3 + $0x36c] sm:$0xf]
  %v3195 = vld [vmem:[#allocation3 + $0x370] sm:$0xf]
  %v3196 = vld [vmem:[#allocation3 + $0x374] sm:$0xf]
  %v3197 = vld [vmem:[#allocation3 + $0x378] sm:$0xf]
  %v3198 = vld [vmem:[#allocation3 + $0x37c] sm:$0xf]
  %v3199 = vld [vmem:[#allocation3 + $0x380] sm:$0xf]
  %v3200 = vld [vmem:[#allocation3 + $0x384] sm:$0xf]
  %v3201 = vld [vmem:[#allocation3 + $0x388] sm:$0xf]
  %v3202 = vld [vmem:[#allocation3 + $0x38c] sm:$0xf]
  %v3203 = vld [vmem:[#allocation3 + $0x390] sm:$0xf]
  %v3204 = vld [vmem:[#allocation3 + $0x394] sm:$0xf]
  %v3205 = vld [vmem:[#allocation3 + $0x398] sm:$0xf]
  %v3206 = vld [vmem:[#allocation3 + $0x39c] sm:$0xf]
  %v3207 = vld [vmem:[#allocation3 + $0x3a0] sm:$0xf]
  %v3208 = vld [vmem:[#allocation3 + $0x3a4] sm:$0xf]
  %v3209 = vld [vmem:[#allocation3 + $0x3a8] sm:$0xf]
  %v3210 = vld [vmem:[#allocation3 + $0x3ac] sm:$0xf]
  %v3211 = vld [vmem:[#allocation3 + $0x3b0] sm:$0xf]
  %v3212 = vld [vmem:[#allocation3 + $0x3b4] sm:$0xf]
  %v3213 = vld [vmem:[#allocation3 + $0x3b8] sm:$0xf]
  %v3214 = vld [vmem:[#allocation3 + $0x3bc] sm:$0xf]
  %v3215 = vld [vmem:[#allocation3 + $0x3c0] sm:$0xf]
  %v3216 = vld [vmem:[#allocation3 + $0x3c4] sm:$0xf]
  %v3217 = vld [vmem:[#allocation3 + $0x3c8] sm:$0xf]
  %v3218 = vld [vmem:[#allocation3 + $0x3cc] sm:$0xf]
  %v3219 = vld [vmem:[#allocation3 + $0x3d0] sm:$0xf]
  %v3220 = vld [vmem:[#allocation3 + $0x3d4] sm:$0xf]
  %v3221 = vld [vmem:[#allocation3 + $0x3d8] sm:$0xf]
  %v3222 = vld [vmem:[#allocation3 + $0x3dc] sm:$0xf]
  %v3223 = vld [vmem:[#allocation3 + $0x3e0] sm:$0xf]
  %v3224 = vld [vmem:[#allocation3 + $0x3e4] sm:$0xf]
  %v3225 = vld [vmem:[#allocation3 + $0x3e8] sm:$0xf]
  %v3226 = vld [vmem:[#allocation3 + $0x3ec] sm:$0xf]
  %v3227 = vld [vmem:[#allocation3 + $0x3f0] sm:$0xf]
  %v3228 = vld [vmem:[#allocation3 + $0x3f4] sm:$0xf]
  %v3229 = vld [vmem:[#allocation3 + $0x3f8] sm:$0xf]
  %v3230 = vld [vmem:[#allocation3 + $0x3fc] sm:$0xf]
  %v3231 = vld [vmem:[%s5] sm:$0x1]
  %v3233 = vlaneseq
  %v3234 = vshrl.u32 %v3233, 7
  %v3235 = vsub.s32 0, %v3234
  %v3236 = vrot.slane %v3231, %v3235
  %v3302 = vunpack.c.l.b16 %v2911
  %v3303 = vunpack.c.h.b16 %v2911
  %v3304 = vunpack.c.l.b16 %v2912
  %v3305 = vunpack.c.h.b16 %v2912
  %v3306 = vunpack.c.l.b16 %v2913
  %v3307 = vunpack.c.h.b16 %v2913
  %v3308 = vunpack.c.l.b16 %v2914
  %v3309 = vunpack.c.h.b16 %v2914
  %v3310 = vunpack.c.l.b16 %v2915
  %v3311 = vunpack.c.h.b16 %v2915
  %v3312 = vunpack.c.l.b16 %v2916
  %v3313 = vunpack.c.h.b16 %v2916
  %v3314 = vunpack.c.l.b16 %v2917
  %v3315 = vunpack.c.h.b16 %v2917
  %v3316 = vunpack.c.l.b16 %v2918
  %v3317 = vunpack.c.h.b16 %v2918
  %v3318 = vunpack.c.l.b16 %v2919
  %v3319 = vunpack.c.h.b16 %v2919
  %v3320 = vunpack.c.l.b16 %v2920
  %v3321 = vunpack.c.h.b16 %v2920
  %v3322 = vunpack.c.l.b16 %v2921
  %v3323 = vunpack.c.h.b16 %v2921
  %v3324 = vunpack.c.l.b16 %v2922
  %v3325 = vunpack.c.h.b16 %v2922
  %v3326 = vunpack.c.l.b16 %v2923
  %v3327 = vunpack.c.h.b16 %v2923
  %v3328 = vunpack.c.l.b16 %v2924
  %v3329 = vunpack.c.h.b16 %v2924
  %v3330 = vunpack.c.l.b16 %v2925
  %v3331 = vunpack.c.h.b16 %v2925
  %v3332 = vunpack.c.l.b16 %v2926
  %v3333 = vunpack.c.h.b16 %v2926
  %v3334 = vunpack.c.l.b16 %v2927
  %v3335 = vunpack.c.h.b16 %v2927
  %v3336 = vunpack.c.l.b16 %v2928
  %v3337 = vunpack.c.h.b16 %v2928
  %v3338 = vunpack.c.l.b16 %v2929
  %v3339 = vunpack.c.h.b16 %v2929
  %v3340 = vunpack.c.l.b16 %v2930
  %v3341 = vunpack.c.h.b16 %v2930
  %v3342 = vunpack.c.l.b16 %v2931
  %v3343 = vunpack.c.h.b16 %v2931
  %v3344 = vunpack.c.l.b16 %v2932
  %v3345 = vunpack.c.h.b16 %v2932
  %v3346 = vunpack.c.l.b16 %v2933
  %v3347 = vunpack.c.h.b16 %v2933
  %v3348 = vunpack.c.l.b16 %v2934
  %v3349 = vunpack.c.h.b16 %v2934
  %v3350 = vunpack.c.l.b16 %v2935
  %v3351 = vunpack.c.h.b16 %v2935
  %v3352 = vunpack.c.l.b16 %v2936
  %v3353 = vunpack.c.h.b16 %v2936
  %v3354 = vunpack.c.l.b16 %v2937
  %v3355 = vunpack.c.h.b16 %v2937
  %v3356 = vunpack.c.l.b16 %v2938
  %v3357 = vunpack.c.h.b16 %v2938
  %v3358 = vunpack.c.l.b16 %v2939
  %v3359 = vunpack.c.h.b16 %v2939
  %v3360 = vunpack.c.l.b16 %v2940
  %v3361 = vunpack.c.h.b16 %v2940
  %v3362 = vunpack.c.l.b16 %v2941
  %v3363 = vunpack.c.h.b16 %v2941
  %v3364 = vunpack.c.l.b16 %v2942
  %v3365 = vunpack.c.h.b16 %v2942
  %v3366 = vunpack.c.l.b16 %v2943
  %v3367 = vunpack.c.h.b16 %v2943
  %v3368 = vunpack.c.l.b16 %v2944
  %v3369 = vunpack.c.h.b16 %v2944
  %v3370 = vunpack.c.l.b16 %v2945
  %v3371 = vunpack.c.h.b16 %v2945
  %v3372 = vunpack.c.l.b16 %v2946
  %v3373 = vunpack.c.h.b16 %v2946
  %v3374 = vunpack.c.l.b16 %v2947
  %v3375 = vunpack.c.h.b16 %v2947
  %v3376 = vunpack.c.l.b16 %v2948
  %v3377 = vunpack.c.h.b16 %v2948
  %v3378 = vunpack.c.l.b16 %v2949
  %v3379 = vunpack.c.h.b16 %v2949
  %v3380 = vunpack.c.l.b16 %v2950
  %v3381 = vunpack.c.h.b16 %v2950
  %v3382 = vunpack.c.l.b16 %v2951
  %v3383 = vunpack.c.h.b16 %v2951
  %v3384 = vunpack.c.l.b16 %v2952
  %v3385 = vunpack.c.h.b16 %v2952
  %v3386 = vunpack.c.l.b16 %v2953
  %v3387 = vunpack.c.h.b16 %v2953
  %v3388 = vunpack.c.l.b16 %v2954
  %v3389 = vunpack.c.h.b16 %v2954
  %v3390 = vunpack.c.l.b16 %v2955
  %v3391 = vunpack.c.h.b16 %v2955
  %v3392 = vunpack.c.l.b16 %v2956
  %v3393 = vunpack.c.h.b16 %v2956
  %v3394 = vunpack.c.l.b16 %v2957
  %v3395 = vunpack.c.h.b16 %v2957
  %v3396 = vunpack.c.l.b16 %v2958
  %v3397 = vunpack.c.h.b16 %v2958
  %v3398 = vunpack.c.l.b16 %v2959
  %v3399 = vunpack.c.h.b16 %v2959
  %v3400 = vunpack.c.l.b16 %v2960
  %v3401 = vunpack.c.h.b16 %v2960
  %v3402 = vunpack.c.l.b16 %v2961
  %v3403 = vunpack.c.h.b16 %v2961
  %v3404 = vunpack.c.l.b16 %v2962
  %v3405 = vunpack.c.h.b16 %v2962
  %v3406 = vunpack.c.l.b16 %v2963
  %v3407 = vunpack.c.h.b16 %v2963
  %v3408 = vunpack.c.l.b16 %v2964
  %v3409 = vunpack.c.h.b16 %v2964
  %v3410 = vunpack.c.l.b16 %v2965
  %v3411 = vunpack.c.h.b16 %v2965
  %v3412 = vunpack.c.l.b16 %v2966
  %v3413 = vunpack.c.h.b16 %v2966
  %v3414 = vunpack.c.l.b16 %v2967
  %v3415 = vunpack.c.h.b16 %v2967
  %v3416 = vunpack.c.l.b16 %v2968
  %v3417 = vunpack.c.h.b16 %v2968
  %v3418 = vunpack.c.l.b16 %v2969
  %v3419 = vunpack.c.h.b16 %v2969
  %v3420 = vunpack.c.l.b16 %v2970
  %v3421 = vunpack.c.h.b16 %v2970
  %v3422 = vunpack.c.l.b16 %v2971
  %v3423 = vunpack.c.h.b16 %v2971
  %v3424 = vunpack.c.l.b16 %v2972
  %v3425 = vunpack.c.h.b16 %v2972
  %v3426 = vunpack.c.l.b16 %v2973
  %v3427 = vunpack.c.h.b16 %v2973
  %v3428 = vunpack.c.l.b16 %v2974
  %v3429 = vunpack.c.h.b16 %v2974
  %v3430 = vpack.c.b16 %v3318, %v3302
  %v3431 = vpack.c.b16 %v3319, %v3303
  %v3432 = vpack.c.b16 %v3320, %v3304
  %v3433 = vpack.c.b16 %v3321, %v3305
  %v3434 = vpack.c.b16 %v3322, %v3306
  %v3435 = vpack.c.b16 %v3323, %v3307
  %v3436 = vpack.c.b16 %v3324, %v3308
  %v3437 = vpack.c.b16 %v3325, %v3309
  %v3438 = vpack.c.b16 %v3326, %v3310
  %v3439 = vpack.c.b16 %v3327, %v3311
  %v3440 = vpack.c.b16 %v3328, %v3312
  %v3441 = vpack.c.b16 %v3329, %v3313
  %v3442 = vpack.c.b16 %v3330, %v3314
  %v3443 = vpack.c.b16 %v3331, %v3315
  %v3444 = vpack.c.b16 %v3332, %v3316
  %v3445 = vpack.c.b16 %v3333, %v3317
  %v3446 = vpack.c.b16 %v3350, %v3334
  %v3447 = vpack.c.b16 %v3351, %v3335
  %v3448 = vpack.c.b16 %v3352, %v3336
  %v3449 = vpack.c.b16 %v3353, %v3337
  %v3450 = vpack.c.b16 %v3354, %v3338
  %v3451 = vpack.c.b16 %v3355, %v3339
  %v3452 = vpack.c.b16 %v3356, %v3340
  %v3453 = vpack.c.b16 %v3357, %v3341
  %v3454 = vpack.c.b16 %v3358, %v3342
  %v3455 = vpack.c.b16 %v3359, %v3343
  %v3456 = vpack.c.b16 %v3360, %v3344
  %v3457 = vpack.c.b16 %v3361, %v3345
  %v3458 = vpack.c.b16 %v3362, %v3346
  %v3459 = vpack.c.b16 %v3363, %v3347
  %v3460 = vpack.c.b16 %v3364, %v3348
  %v3461 = vpack.c.b16 %v3365, %v3349
  %v3462 = vpack.c.b16 %v3382, %v3366
  %v3463 = vpack.c.b16 %v3383, %v3367
  %v3464 = vpack.c.b16 %v3384, %v3368
  %v3465 = vpack.c.b16 %v3385, %v3369
  %v3466 = vpack.c.b16 %v3386, %v3370
  %v3467 = vpack.c.b16 %v3387, %v3371
  %v3468 = vpack.c.b16 %v3388, %v3372
  %v3469 = vpack.c.b16 %v3389, %v3373
  %v3470 = vpack.c.b16 %v3390, %v3374
  %v3471 = vpack.c.b16 %v3391, %v3375
  %v3472 = vpack.c.b16 %v3392, %v3376
  %v3473 = vpack.c.b16 %v3393, %v3377
  %v3474 = vpack.c.b16 %v3394, %v3378
  %v3475 = vpack.c.b16 %v3395, %v3379
  %v3476 = vpack.c.b16 %v3396, %v3380
  %v3477 = vpack.c.b16 %v3397, %v3381
  %v3478 = vpack.c.b16 %v3414, %v3398
  %v3479 = vpack.c.b16 %v3415, %v3399
  %v3480 = vpack.c.b16 %v3416, %v3400
  %v3481 = vpack.c.b16 %v3417, %v3401
  %v3482 = vpack.c.b16 %v3418, %v3402
  %v3483 = vpack.c.b16 %v3419, %v3403
  %v3484 = vpack.c.b16 %v3420, %v3404
  %v3485 = vpack.c.b16 %v3421, %v3405
  %v3486 = vpack.c.b16 %v3422, %v3406
  %v3487 = vpack.c.b16 %v3423, %v3407
  %v3488 = vpack.c.b16 %v3424, %v3408
  %v3489 = vpack.c.b16 %v3425, %v3409
  %v3490 = vpack.c.b16 %v3426, %v3410
  %v3491 = vpack.c.b16 %v3427, %v3411
  %v3492 = vpack.c.b16 %v3428, %v3412
  %v3493 = vpack.c.b16 %v3429, %v3413
  %v3814 = vunpack.c.l.b16 %v2975
  %v3815 = vunpack.c.l.b16 %v2976
  %v3816 = vunpack.c.l.b16 %v2977
  %v3817 = vunpack.c.l.b16 %v2978
  %v3818 = vunpack.c.l.b16 %v2979
  %v3819 = vunpack.c.l.b16 %v2980
  %v3820 = vunpack.c.l.b16 %v2981
  %v3821 = vunpack.c.l.b16 %v2982
  %v3822 = vunpack.c.l.b16 %v2983
  %v3823 = vunpack.c.l.b16 %v2984
  %v3824 = vunpack.c.l.b16 %v2985
  %v3825 = vunpack.c.l.b16 %v2986
  %v3826 = vunpack.c.l.b16 %v2987
  %v3827 = vunpack.c.l.b16 %v2988
  %v3828 = vunpack.c.l.b16 %v2989
  %v3829 = vunpack.c.l.b16 %v2990
  %v3830 = vunpack.c.l.b16 %v2991
  %v3831 = vunpack.c.l.b16 %v2992
  %v3832 = vunpack.c.l.b16 %v2993
  %v3833 = vunpack.c.l.b16 %v2994
  %v3834 = vunpack.c.l.b16 %v2995
  %v3835 = vunpack.c.l.b16 %v2996
  %v3836 = vunpack.c.l.b16 %v2997
  %v3837 = vunpack.c.l.b16 %v2998
  %v3838 = vunpack.c.l.b16 %v2999
  %v3839 = vunpack.c.l.b16 %v3000
  %v3840 = vunpack.c.l.b16 %v3001
  %v3841 = vunpack.c.l.b16 %v3002
  %v3842 = vunpack.c.l.b16 %v3003
  %v3843 = vunpack.c.l.b16 %v3004
  %v3844 = vunpack.c.l.b16 %v3005
  %v3845 = vunpack.c.l.b16 %v3006
  %v3846 = vunpack.c.l.b16 %v3007
  %v3847 = vunpack.c.l.b16 %v3008
  %v3848 = vunpack.c.l.b16 %v3009
  %v3849 = vunpack.c.l.b16 %v3010
  %v3850 = vunpack.c.l.b16 %v3011
  %v3851 = vunpack.c.l.b16 %v3012
  %v3852 = vunpack.c.l.b16 %v3013
  %v3853 = vunpack.c.l.b16 %v3014
  %v3854 = vunpack.c.l.b16 %v3015
  %v3855 = vunpack.c.l.b16 %v3016
  %v3856 = vunpack.c.l.b16 %v3017
  %v3857 = vunpack.c.l.b16 %v3018
  %v3858 = vunpack.c.l.b16 %v3019
  %v3859 = vunpack.c.l.b16 %v3020
  %v3860 = vunpack.c.l.b16 %v3021
  %v3861 = vunpack.c.l.b16 %v3022
  %v3862 = vunpack.c.l.b16 %v3023
  %v3863 = vunpack.c.l.b16 %v3024
  %v3864 = vunpack.c.l.b16 %v3025
  %v3865 = vunpack.c.l.b16 %v3026
  %v3866 = vunpack.c.l.b16 %v3027
  %v3867 = vunpack.c.l.b16 %v3028
  %v3868 = vunpack.c.l.b16 %v3029
  %v3869 = vunpack.c.l.b16 %v3030
  %v3870 = vunpack.c.l.b16 %v3031
  %v3871 = vunpack.c.l.b16 %v3032
  %v3872 = vunpack.c.l.b16 %v3033
  %v3873 = vunpack.c.l.b16 %v3034
  %v3874 = vunpack.c.l.b16 %v3035
  %v3875 = vunpack.c.l.b16 %v3036
  %v3876 = vunpack.c.l.b16 %v3037
  %v3877 = vunpack.c.l.b16 %v3038
  %v3878 = vunpack.c.l.b16 %v3039
  %v3879 = vunpack.c.l.b16 %v3040
  %v3880 = vunpack.c.l.b16 %v3041
  %v3881 = vunpack.c.l.b16 %v3042
  %v3882 = vunpack.c.l.b16 %v3043
  %v3883 = vunpack.c.l.b16 %v3044
  %v3884 = vunpack.c.l.b16 %v3045
  %v3885 = vunpack.c.l.b16 %v3046
  %v3886 = vunpack.c.l.b16 %v3047
  %v3887 = vunpack.c.l.b16 %v3048
  %v3888 = vunpack.c.l.b16 %v3049
  %v3889 = vunpack.c.l.b16 %v3050
  %v3890 = vunpack.c.l.b16 %v3051
  %v3891 = vunpack.c.l.b16 %v3052
  %v3892 = vunpack.c.l.b16 %v3053
  %v3893 = vunpack.c.l.b16 %v3054
  %v3894 = vunpack.c.l.b16 %v3055
  %v3895 = vunpack.c.l.b16 %v3056
  %v3896 = vunpack.c.l.b16 %v3057
  %v3897 = vunpack.c.l.b16 %v3058
  %v3898 = vunpack.c.l.b16 %v3059
  %v3899 = vunpack.c.l.b16 %v3060
  %v3900 = vunpack.c.l.b16 %v3061
  %v3901 = vunpack.c.l.b16 %v3062
  %v3902 = vunpack.c.l.b16 %v3063
  %v3903 = vunpack.c.l.b16 %v3064
  %v3904 = vunpack.c.l.b16 %v3065
  %v3905 = vunpack.c.l.b16 %v3066
  %v3906 = vunpack.c.l.b16 %v3067
  %v3907 = vunpack.c.l.b16 %v3068
  %v3908 = vunpack.c.l.b16 %v3069
  %v3909 = vunpack.c.l.b16 %v3070
  %v3910 = vunpack.c.l.b16 %v3071
  %v3911 = vunpack.c.l.b16 %v3072
  %v3912 = vunpack.c.l.b16 %v3073
  %v3913 = vunpack.c.l.b16 %v3074
  %v3914 = vunpack.c.l.b16 %v3075
  %v3915 = vunpack.c.l.b16 %v3076
  %v3916 = vunpack.c.l.b16 %v3077
  %v3917 = vunpack.c.l.b16 %v3078
  %v3918 = vunpack.c.l.b16 %v3079
  %v3919 = vunpack.c.l.b16 %v3080
  %v3920 = vunpack.c.l.b16 %v3081
  %v3921 = vunpack.c.l.b16 %v3082
  %v3922 = vunpack.c.l.b16 %v3083
  %v3923 = vunpack.c.l.b16 %v3084
  %v3924 = vunpack.c.l.b16 %v3085
  %v3925 = vunpack.c.l.b16 %v3086
  %v3926 = vunpack.c.l.b16 %v3087
  %v3927 = vunpack.c.l.b16 %v3088
  %v3928 = vunpack.c.l.b16 %v3089
  %v3929 = vunpack.c.l.b16 %v3090
  %v3930 = vunpack.c.l.b16 %v3091
  %v3931 = vunpack.c.l.b16 %v3092
  %v3932 = vunpack.c.l.b16 %v3093
  %v3933 = vunpack.c.l.b16 %v3094
  %v3934 = vunpack.c.l.b16 %v3095
  %v3935 = vunpack.c.l.b16 %v3096
  %v3936 = vunpack.c.l.b16 %v3097
  %v3937 = vunpack.c.l.b16 %v3098
  %v3938 = vunpack.c.l.b16 %v3099
  %v3939 = vunpack.c.l.b16 %v3100
  %v3940 = vunpack.c.l.b16 %v3101
  %v3941 = vunpack.c.l.b16 %v3102
  %v3942 = vunpack.c.l.b16 %v3103
  %v3943 = vunpack.c.l.b16 %v3104
  %v3944 = vunpack.c.l.b16 %v3105
  %v3945 = vunpack.c.l.b16 %v3106
  %v3946 = vunpack.c.l.b16 %v3107
  %v3947 = vunpack.c.l.b16 %v3108
  %v3948 = vunpack.c.l.b16 %v3109
  %v3949 = vunpack.c.l.b16 %v3110
  %v3950 = vunpack.c.l.b16 %v3111
  %v3951 = vunpack.c.l.b16 %v3112
  %v3952 = vunpack.c.l.b16 %v3113
  %v3953 = vunpack.c.l.b16 %v3114
  %v3954 = vunpack.c.l.b16 %v3115
  %v3955 = vunpack.c.l.b16 %v3116
  %v3956 = vunpack.c.l.b16 %v3117
  %v3957 = vunpack.c.l.b16 %v3118
  %v3958 = vunpack.c.l.b16 %v3119
  %v3959 = vunpack.c.l.b16 %v3120
  %v3960 = vunpack.c.l.b16 %v3121
  %v3961 = vunpack.c.l.b16 %v3122
  %v3962 = vunpack.c.l.b16 %v3123
  %v3963 = vunpack.c.l.b16 %v3124
  %v3964 = vunpack.c.l.b16 %v3125
  %v3965 = vunpack.c.l.b16 %v3126
  %v3966 = vunpack.c.l.b16 %v3127
  %v3967 = vunpack.c.l.b16 %v3128
  %v3968 = vunpack.c.l.b16 %v3129
  %v3969 = vunpack.c.l.b16 %v3130
  %v3970 = vunpack.c.l.b16 %v3131
  %v3971 = vunpack.c.l.b16 %v3132
  %v3972 = vunpack.c.l.b16 %v3133
  %v3973 = vunpack.c.l.b16 %v3134
  %v3974 = vunpack.c.l.b16 %v3135
  %v3975 = vunpack.c.l.b16 %v3136
  %v3976 = vunpack.c.l.b16 %v3137
  %v3977 = vunpack.c.l.b16 %v3138
  %v3978 = vunpack.c.l.b16 %v3139
  %v3979 = vunpack.c.l.b16 %v3140
  %v3980 = vunpack.c.l.b16 %v3141
  %v3981 = vunpack.c.l.b16 %v3142
  %v3982 = vunpack.c.l.b16 %v3143
  %v3983 = vunpack.c.l.b16 %v3144
  %v3984 = vunpack.c.l.b16 %v3145
  %v3985 = vunpack.c.l.b16 %v3146
  %v3986 = vunpack.c.l.b16 %v3147
  %v3987 = vunpack.c.l.b16 %v3148
  %v3988 = vunpack.c.l.b16 %v3149
  %v3989 = vunpack.c.l.b16 %v3150
  %v3990 = vunpack.c.l.b16 %v3151
  %v3991 = vunpack.c.l.b16 %v3152
  %v3992 = vunpack.c.l.b16 %v3153
  %v3993 = vunpack.c.l.b16 %v3154
  %v3994 = vunpack.c.l.b16 %v3155
  %v3995 = vunpack.c.l.b16 %v3156
  %v3996 = vunpack.c.l.b16 %v3157
  %v3997 = vunpack.c.l.b16 %v3158
  %v3998 = vunpack.c.l.b16 %v3159
  %v3999 = vunpack.c.l.b16 %v3160
  %v4000 = vunpack.c.l.b16 %v3161
  %v4001 = vunpack.c.l.b16 %v3162
  %v4002 = vunpack.c.l.b16 %v3163
  %v4003 = vunpack.c.l.b16 %v3164
  %v4004 = vunpack.c.l.b16 %v3165
  %v4005 = vunpack.c.l.b16 %v3166
  %v4006 = vunpack.c.l.b16 %v3167
  %v4007 = vunpack.c.l.b16 %v3168
  %v4008 = vunpack.c.l.b16 %v3169
  %v4009 = vunpack.c.l.b16 %v3170
  %v4010 = vunpack.c.l.b16 %v3171
  %v4011 = vunpack.c.l.b16 %v3172
  %v4012 = vunpack.c.l.b16 %v3173
  %v4013 = vunpack.c.l.b16 %v3174
  %v4014 = vunpack.c.l.b16 %v3175
  %v4015 = vunpack.c.l.b16 %v3176
  %v4016 = vunpack.c.l.b16 %v3177
  %v4017 = vunpack.c.l.b16 %v3178
  %v4018 = vunpack.c.l.b16 %v3179
  %v4019 = vunpack.c.l.b16 %v3180
  %v4020 = vunpack.c.l.b16 %v3181
  %v4021 = vunpack.c.l.b16 %v3182
  %v4022 = vunpack.c.l.b16 %v3183
  %v4023 = vunpack.c.l.b16 %v3184
  %v4024 = vunpack.c.l.b16 %v3185
  %v4025 = vunpack.c.l.b16 %v3186
  %v4026 = vunpack.c.l.b16 %v3187
  %v4027 = vunpack.c.l.b16 %v3188
  %v4028 = vunpack.c.l.b16 %v3189
  %v4029 = vunpack.c.l.b16 %v3190
  %v4030 = vunpack.c.l.b16 %v3191
  %v4031 = vunpack.c.l.b16 %v3192
  %v4032 = vunpack.c.l.b16 %v3193
  %v4033 = vunpack.c.l.b16 %v3194
  %v4034 = vunpack.c.l.b16 %v3195
  %v4035 = vunpack.c.l.b16 %v3196
  %v4036 = vunpack.c.l.b16 %v3197
  %v4037 = vunpack.c.l.b16 %v3198
  %v4038 = vunpack.c.l.b16 %v3199
  %v4039 = vunpack.c.l.b16 %v3200
  %v4040 = vunpack.c.l.b16 %v3201
  %v4041 = vunpack.c.l.b16 %v3202
  %v4042 = vunpack.c.l.b16 %v3203
  %v4043 = vunpack.c.l.b16 %v3204
  %v4044 = vunpack.c.l.b16 %v3205
  %v4045 = vunpack.c.l.b16 %v3206
  %v4046 = vunpack.c.l.b16 %v3207
  %v4047 = vunpack.c.l.b16 %v3208
  %v4048 = vunpack.c.l.b16 %v3209
  %v4049 = vunpack.c.l.b16 %v3210
  %v4050 = vunpack.c.l.b16 %v3211
  %v4051 = vunpack.c.l.b16 %v3212
  %v4052 = vunpack.c.l.b16 %v3213
  %v4053 = vunpack.c.l.b16 %v3214
  %v4054 = vunpack.c.l.b16 %v3215
  %v4055 = vunpack.c.l.b16 %v3216
  %v4056 = vunpack.c.l.b16 %v3217
  %v4057 = vunpack.c.l.b16 %v3218
  %v4058 = vunpack.c.l.b16 %v3219
  %v4059 = vunpack.c.l.b16 %v3220
  %v4060 = vunpack.c.l.b16 %v3221
  %v4061 = vunpack.c.l.b16 %v3222
  %v4062 = vunpack.c.l.b16 %v3223
  %v4063 = vunpack.c.l.b16 %v3224
  %v4064 = vunpack.c.l.b16 %v3225
  %v4065 = vunpack.c.l.b16 %v3226
  %v4066 = vunpack.c.l.b16 %v3227
  %v4067 = vunpack.c.l.b16 %v3228
  %v4068 = vunpack.c.l.b16 %v3229
  %v4069 = vunpack.c.l.b16 %v3230
  %v4070 = vpack.c.b16 %v3815, %v3814
  %v4071 = vpack.c.b16 %v3817, %v3816
  %v4072 = vpack.c.b16 %v3819, %v3818
  %v4073 = vpack.c.b16 %v3821, %v3820
  %v4074 = vpack.c.b16 %v3823, %v3822
  %v4075 = vpack.c.b16 %v3825, %v3824
  %v4076 = vpack.c.b16 %v3827, %v3826
  %v4077 = vpack.c.b16 %v3829, %v3828
  %v4078 = vpack.c.b16 %v3831, %v3830
  %v4079 = vpack.c.b16 %v3833, %v3832
  %v4080 = vpack.c.b16 %v3835, %v3834
  %v4081 = vpack.c.b16 %v3837, %v3836
  %v4082 = vpack.c.b16 %v3839, %v3838
  %v4083 = vpack.c.b16 %v3841, %v3840
  %v4084 = vpack.c.b16 %v3843, %v3842
  %v4085 = vpack.c.b16 %v3845, %v3844
  %v4086 = vpack.c.b16 %v3847, %v3846
  %v4087 = vpack.c.b16 %v3849, %v3848
  %v4088 = vpack.c.b16 %v3851, %v3850
  %v4089 = vpack.c.b16 %v3853, %v3852
  %v4090 = vpack.c.b16 %v3855, %v3854
  %v4091 = vpack.c.b16 %v3857, %v3856
  %v4092 = vpack.c.b16 %v3859, %v3858
  %v4093 = vpack.c.b16 %v3861, %v3860
  %v4094 = vpack.c.b16 %v3863, %v3862
  %v4095 = vpack.c.b16 %v3865, %v3864
  %v4096 = vpack.c.b16 %v3867, %v3866
  %v4097 = vpack.c.b16 %v3869, %v3868
  %v4098 = vpack.c.b16 %v3871, %v3870
  %v4099 = vpack.c.b16 %v3873, %v3872
  %v4100 = vpack.c.b16 %v3875, %v3874
  %v4101 = vpack.c.b16 %v3877, %v3876
  %v4102 = vpack.c.b16 %v3879, %v3878
  %v4103 = vpack.c.b16 %v3881, %v3880
  %v4104 = vpack.c.b16 %v3883, %v3882
  %v4105 = vpack.c.b16 %v3885, %v3884
  %v4106 = vpack.c.b16 %v3887, %v3886
  %v4107 = vpack.c.b16 %v3889, %v3888
  %v4108 = vpack.c.b16 %v3891, %v3890
  %v4109 = vpack.c.b16 %v3893, %v3892
  %v4110 = vpack.c.b16 %v3895, %v3894
  %v4111 = vpack.c.b16 %v3897, %v3896
  %v4112 = vpack.c.b16 %v3899, %v3898
  %v4113 = vpack.c.b16 %v3901, %v3900
  %v4114 = vpack.c.b16 %v3903, %v3902
  %v4115 = vpack.c.b16 %v3905, %v3904
  %v4116 = vpack.c.b16 %v3907, %v3906
  %v4117 = vpack.c.b16 %v3909, %v3908
  %v4118 = vpack.c.b16 %v3911, %v3910
  %v4119 = vpack.c.b16 %v3913, %v3912
  %v4120 = vpack.c.b16 %v3915, %v3914
  %v4121 = vpack.c.b16 %v3917, %v3916
  %v4122 = vpack.c.b16 %v3919, %v3918
  %v4123 = vpack.c.b16 %v3921, %v3920
  %v4124 = vpack.c.b16 %v3923, %v3922
  %v4125 = vpack.c.b16 %v3925, %v3924
  %v4126 = vpack.c.b16 %v3927, %v3926
  %v4127 = vpack.c.b16 %v3929, %v3928
  %v4128 = vpack.c.b16 %v3931, %v3930
  %v4129 = vpack.c.b16 %v3933, %v3932
  %v4130 = vpack.c.b16 %v3935, %v3934
  %v4131 = vpack.c.b16 %v3937, %v3936
  %v4132 = vpack.c.b16 %v3939, %v3938
  %v4133 = vpack.c.b16 %v3941, %v3940
  %v4134 = vpack.c.b16 %v3943, %v3942
  %v4135 = vpack.c.b16 %v3945, %v3944
  %v4136 = vpack.c.b16 %v3947, %v3946
  %v4137 = vpack.c.b16 %v3949, %v3948
  %v4138 = vpack.c.b16 %v3951, %v3950
  %v4139 = vpack.c.b16 %v3953, %v3952
  %v4140 = vpack.c.b16 %v3955, %v3954
  %v4141 = vpack.c.b16 %v3957, %v3956
  %v4142 = vpack.c.b16 %v3959, %v3958
  %v4143 = vpack.c.b16 %v3961, %v3960
  %v4144 = vpack.c.b16 %v3963, %v3962
  %v4145 = vpack.c.b16 %v3965, %v3964
  %v4146 = vpack.c.b16 %v3967, %v3966
  %v4147 = vpack.c.b16 %v3969, %v3968
  %v4148 = vpack.c.b16 %v3971, %v3970
  %v4149 = vpack.c.b16 %v3973, %v3972
  %v4150 = vpack.c.b16 %v3975, %v3974
  %v4151 = vpack.c.b16 %v3977, %v3976
  %v4152 = vpack.c.b16 %v3979, %v3978
  %v4153 = vpack.c.b16 %v3981, %v3980
  %v4154 = vpack.c.b16 %v3983, %v3982
  %v4155 = vpack.c.b16 %v3985, %v3984
  %v4156 = vpack.c.b16 %v3987, %v3986
  %v4157 = vpack.c.b16 %v3989, %v3988
  %v4158 = vpack.c.b16 %v3991, %v3990
  %v4159 = vpack.c.b16 %v3993, %v3992
  %v4160 = vpack.c.b16 %v3995, %v3994
  %v4161 = vpack.c.b16 %v3997, %v3996
  %v4162 = vpack.c.b16 %v3999, %v3998
  %v4163 = vpack.c.b16 %v4001, %v4000
  %v4164 = vpack.c.b16 %v4003, %v4002
  %v4165 = vpack.c.b16 %v4005, %v4004
  %v4166 = vpack.c.b16 %v4007, %v4006
  %v4167 = vpack.c.b16 %v4009, %v4008
  %v4168 = vpack.c.b16 %v4011, %v4010
  %v4169 = vpack.c.b16 %v4013, %v4012
  %v4170 = vpack.c.b16 %v4015, %v4014
  %v4171 = vpack.c.b16 %v4017, %v4016
  %v4172 = vpack.c.b16 %v4019, %v4018
  %v4173 = vpack.c.b16 %v4021, %v4020
  %v4174 = vpack.c.b16 %v4023, %v4022
  %v4175 = vpack.c.b16 %v4025, %v4024
  %v4176 = vpack.c.b16 %v4027, %v4026
  %v4177 = vpack.c.b16 %v4029, %v4028
  %v4178 = vpack.c.b16 %v4031, %v4030
  %v4179 = vpack.c.b16 %v4033, %v4032
  %v4180 = vpack.c.b16 %v4035, %v4034
  %v4181 = vpack.c.b16 %v4037, %v4036
  %v4182 = vpack.c.b16 %v4039, %v4038
  %v4183 = vpack.c.b16 %v4041, %v4040
  %v4184 = vpack.c.b16 %v4043, %v4042
  %v4185 = vpack.c.b16 %v4045, %v4044
  %v4186 = vpack.c.b16 %v4047, %v4046
  %v4187 = vpack.c.b16 %v4049, %v4048
  %v4188 = vpack.c.b16 %v4051, %v4050
  %v4189 = vpack.c.b16 %v4053, %v4052
  %v4190 = vpack.c.b16 %v4055, %v4054
  %v4191 = vpack.c.b16 %v4057, %v4056
  %v4192 = vpack.c.b16 %v4059, %v4058
  %v4193 = vpack.c.b16 %v4061, %v4060
  %v4194 = vpack.c.b16 %v4063, %v4062
  %v4195 = vpack.c.b16 %v4065, %v4064
  %v4196 = vpack.c.b16 %v4067, %v4066
  %v4197 = vpack.c.b16 %v4069, %v4068
  %4326 = vmatprep.subr.bf16.mxu0 0
  %4327 = vmatpush1.bf16.msra.mxu0 %v4077
  %4328 = vmatprep.subr.bf16.mxu0 0
  %4329 = vmatpush1.bf16.msra.mxu0 %v4076
  %4330 = vmatprep.subr.bf16.mxu0 0
  %4331 = vmatpush1.bf16.msra.mxu0 %v4075
  %4332 = vmatprep.subr.bf16.mxu0 0
  %4333 = vmatpush1.bf16.msra.mxu0 %v4074
  %4334 = vmatprep.subr.bf16.mxu0 0
  %4335 = vmatpush1.bf16.msra.mxu0 %v4073
  %4336 = vmatprep.subr.bf16.mxu0 0
  %4337 = vmatpush1.bf16.msra.mxu0 %v4072
  %4338 = vmatprep.subr.bf16.mxu0 0
  %4339 = vmatpush1.bf16.msra.mxu0 %v4071
  %4340 = vmatprep.subr.bf16.mxu0 0
  %4341 = vmatpush1.bf16.msra.mxu0 %v4070
  %4342 = vmatprep.subr.bf16.mxu0 0
  %4343 = vmatpush2.bf16.msra.mxu0 %v4085
  %4344 = vmatprep.subr.bf16.mxu0 0
  %4345 = vmatpush2.bf16.msra.mxu0 %v4084
  %4346 = vmatprep.subr.bf16.mxu0 0
  %4347 = vmatpush2.bf16.msra.mxu0 %v4083
  %4348 = vmatprep.subr.bf16.mxu0 0
  %4349 = vmatpush2.bf16.msra.mxu0 %v4082
  %4350 = vmatprep.subr.bf16.mxu0 0
  %4351 = vmatpush2.bf16.msra.mxu0 %v4081
  %4352 = vmatprep.subr.bf16.mxu0 0
  %4353 = vmatpush2.bf16.msra.mxu0 %v4080
  %4354 = vmatprep.subr.bf16.mxu0 0
  %4355 = vmatpush2.bf16.msra.mxu0 %v4079
  %4356 = vmatprep.subr.bf16.mxu0 0
  %4357 = vmatpush2.bf16.msra.mxu0 %v4078
  %4358 = vmatprep.mubr.bf16.mxu0 %v3431
  %4359 = vmatmul.mubr.bf16.gmra.mxu0 %v3430
  %v4360 = vpop.f32.mrf.mxu0
  %v4361 = vadd.f32 %v3236, %v4360
  %v4362 = vpop.f32.mrf.mxu0
  %v4363 = vpop.f32.mrf.mxu0
  %v4364 = vadd.f32 %v3236, %v4363
  %v4365 = vpop.f32.mrf.mxu0
  %4366 = vmatprep.mubr.bf16.mxu0 %v3447
  %4367 = vmatmul.mubr.bf16.gmra.mxu0 %v3446
  %v4368 = vpop.f32.mrf.mxu0
  %v4369 = vadd.f32 %v3236, %v4368
  %v4370 = vpop.f32.mrf.mxu0
  %v4371 = vpop.f32.mrf.mxu0
  %v4372 = vadd.f32 %v3236, %v4371
  %v4373 = vpop.f32.mrf.mxu0
  %4374 = vmatprep.mubr.bf16.mxu0 %v3463
  %4375 = vmatmul.mubr.bf16.gmra.mxu0 %v3462
  %v4376 = vpop.f32.mrf.mxu0
  %v4377 = vadd.f32 %v3236, %v4376
  %v4378 = vpop.f32.mrf.mxu0
  %v4379 = vpop.f32.mrf.mxu0
  %v4380 = vadd.f32 %v3236, %v4379
  %v4381 = vpop.f32.mrf.mxu0
  %4382 = vmatprep.mubr.bf16.mxu0 %v3479
  %4383 = vmatmul.mubr.bf16.gmra.mxu0 %v3478
  %v4384 = vpop.f32.mrf.mxu0
  %v4385 = vadd.f32 %v3236, %v4384
  %v4386 = vpop.f32.mrf.mxu0
  %v4387 = vpop.f32.mrf.mxu0
  %v4388 = vadd.f32 %v3236, %v4387
  %v4389 = vpop.f32.mrf.mxu0
  %4390 = vdwg.mxu0
  %4391 = vmatprep.subr.bf16.mxu0 0
  %4392 = vmatpush1.bf16.msra.mxu0 %v4093
  %4393 = vmatprep.subr.bf16.mxu0 0
  %4394 = vmatpush1.bf16.msra.mxu0 %v4092
  %4395 = vmatprep.subr.bf16.mxu0 0
  %4396 = vmatpush1.bf16.msra.mxu0 %v4091
  %4397 = vmatprep.subr.bf16.mxu0 0
  %4398 = vmatpush1.bf16.msra.mxu0 %v4090
  %4399 = vmatprep.subr.bf16.mxu0 0
  %4400 = vmatpush1.bf16.msra.mxu0 %v4089
  %4401 = vmatprep.subr.bf16.mxu0 0
  %4402 = vmatpush1.bf16.msra.mxu0 %v4088
  %4403 = vmatprep.subr.bf16.mxu0 0
  %4404 = vmatpush1.bf16.msra.mxu0 %v4087
  %4405 = vmatprep.subr.bf16.mxu0 0
  %4406 = vmatpush1.bf16.msra.mxu0 %v4086
  %4407 = vmatprep.subr.bf16.mxu0 0
  %4408 = vmatpush2.bf16.msra.mxu0 %v4101
  %4409 = vmatprep.subr.bf16.mxu0 0
  %4410 = vmatpush2.bf16.msra.mxu0 %v4100
  %4411 = vmatprep.subr.bf16.mxu0 0
  %4412 = vmatpush2.bf16.msra.mxu0 %v4099
  %4413 = vmatprep.subr.bf16.mxu0 0
  %4414 = vmatpush2.bf16.msra.mxu0 %v4098
  %4415 = vmatprep.subr.bf16.mxu0 0
  %4416 = vmatpush2.bf16.msra.mxu0 %v4097
  %4417 = vmatprep.subr.bf16.mxu0 0
  %4418 = vmatpush2.bf16.msra.mxu0 %v4096
  %4419 = vmatprep.subr.bf16.mxu0 0
  %4420 = vmatpush2.bf16.msra.mxu0 %v4095
  %4421 = vmatprep.subr.bf16.mxu0 0
  %4422 = vmatpush2.bf16.msra.mxu0 %v4094
  %4423 = vmatprep.mubr.bf16.mxu0 %v3433
  %4424 = vmatmul.mubr.bf16.gmra.mxu0 %v3432
  %v4425 = vpop.f32.mrf.mxu0
  %v4426 = vadd.f32 %v4361, %v4425
  %v4427 = vpop.f32.mrf.mxu0
  %v4428 = vpop.f32.mrf.mxu0
  %v4429 = vadd.f32 %v4364, %v4428
  %v4430 = vpop.f32.mrf.mxu0
  %4431 = vmatprep.mubr.bf16.mxu0 %v3449
  %4432 = vmatmul.mubr.bf16.gmra.mxu0 %v3448
  %v4433 = vpop.f32.mrf.mxu0
  %v4434 = vadd.f32 %v4369, %v4433
  %v4435 = vpop.f32.mrf.mxu0
  %v4436 = vpop.f32.mrf.mxu0
  %v4437 = vadd.f32 %v4372, %v4436
  %v4438 = vpop.f32.mrf.mxu0
  %4439 = vmatprep.mubr.bf16.mxu0 %v3465
  %4440 = vmatmul.mubr.bf16.gmra.mxu0 %v3464
  %v4441 = vpop.f32.mrf.mxu0
  %v4442 = vadd.f32 %v4377, %v4441
  %v4443 = vpop.f32.mrf.mxu0
  %v4444 = vpop.f32.mrf.mxu0
  %v4445 = vadd.f32 %v4380, %v4444
  %v4446 = vpop.f32.mrf.mxu0
  %4447 = vmatprep.mubr.bf16.mxu0 %v3481
  %4448 = vmatmul.mubr.bf16.gmra.mxu0 %v3480
  %v4449 = vpop.f32.mrf.mxu0
  %v4450 = vadd.f32 %v4385, %v4449
  %v4451 = vpop.f32.mrf.mxu0
  %v4452 = vpop.f32.mrf.mxu0
  %v4453 = vadd.f32 %v4388, %v4452
  %v4454 = vpop.f32.mrf.mxu0
  %4455 = vdwg.mxu0
  %4456 = vmatprep.subr.bf16.mxu0 0
  %4457 = vmatpush1.bf16.msra.mxu0 %v4109
  %4458 = vmatprep.subr.bf16.mxu0 0
  %4459 = vmatpush1.bf16.msra.mxu0 %v4108
  %4460 = vmatprep.subr.bf16.mxu0 0
  %4461 = vmatpush1.bf16.msra.mxu0 %v4107
  %4462 = vmatprep.subr.bf16.mxu0 0
  %4463 = vmatpush1.bf16.msra.mxu0 %v4106
  %4464 = vmatprep.subr.bf16.mxu0 0
  %4465 = vmatpush1.bf16.msra.mxu0 %v4105
  %4466 = vmatprep.subr.bf16.mxu0 0
  %4467 = vmatpush1.bf16.msra.mxu0 %v4104
  %4468 = vmatprep.subr.bf16.mxu0 0
  %4469 = vmatpush1.bf16.msra.mxu0 %v4103
  %4470 = vmatprep.subr.bf16.mxu0 0
  %4471 = vmatpush1.bf16.msra.mxu0 %v4102
  %4472 = vmatprep.subr.bf16.mxu0 0
  %4473 = vmatpush2.bf16.msra.mxu0 %v4117
  %4474 = vmatprep.subr.bf16.mxu0 0
  %4475 = vmatpush2.bf16.msra.mxu0 %v4116
  %4476 = vmatprep.subr.bf16.mxu0 0
  %4477 = vmatpush2.bf16.msra.mxu0 %v4115
  %4478 = vmatprep.subr.bf16.mxu0 0
  %4479 = vmatpush2.bf16.msra.mxu0 %v4114
  %4480 = vmatprep.subr.bf16.mxu0 0
  %4481 = vmatpush2.bf16.msra.mxu0 %v4113
  %4482 = vmatprep.subr.bf16.mxu0 0
  %4483 = vmatpush2.bf16.msra.mxu0 %v4112
  %4484 = vmatprep.subr.bf16.mxu0 0
  %4485 = vmatpush2.bf16.msra.mxu0 %v4111
  %4486 = vmatprep.subr.bf16.mxu0 0
  %4487 = vmatpush2.bf16.msra.mxu0 %v4110
  %4488 = vmatprep.mubr.bf16.mxu0 %v3435
  %4489 = vmatmul.mubr.bf16.gmra.mxu0 %v3434
  %v4490 = vpop.f32.mrf.mxu0
  %v4491 = vadd.f32 %v4426, %v4490
  %v4492 = vpop.f32.mrf.mxu0
  %v4493 = vpop.f32.mrf.mxu0
  %v4494 = vadd.f32 %v4429, %v4493
  %v4495 = vpop.f32.mrf.mxu0
  %4496 = vmatprep.mubr.bf16.mxu0 %v3451
  %4497 = vmatmul.mubr.bf16.gmra.mxu0 %v3450
  %v4498 = vpop.f32.mrf.mxu0
  %v4499 = vadd.f32 %v4434, %v4498
  %v4500 = vpop.f32.mrf.mxu0
  %v4501 = vpop.f32.mrf.mxu0
  %v4502 = vadd.f32 %v4437, %v4501
  %v4503 = vpop.f32.mrf.mxu0
  %4504 = vmatprep.mubr.bf16.mxu0 %v3467
  %4505 = vmatmul.mubr.bf16.gmra.mxu0 %v3466
  %v4506 = vpop.f32.mrf.mxu0
  %v4507 = vadd.f32 %v4442, %v4506
  %v4508 = vpop.f32.mrf.mxu0
  %v4509 = vpop.f32.mrf.mxu0
  %v4510 = vadd.f32 %v4445, %v4509
  %v4511 = vpop.f32.mrf.mxu0
  %4512 = vmatprep.mubr.bf16.mxu0 %v3483
  %4513 = vmatmul.mubr.bf16.gmra.mxu0 %v3482
  %v4514 = vpop.f32.mrf.mxu0
  %v4515 = vadd.f32 %v4450, %v4514
  %v4516 = vpop.f32.mrf.mxu0
  %v4517 = vpop.f32.mrf.mxu0
  %v4518 = vadd.f32 %v4453, %v4517
  %v4519 = vpop.f32.mrf.mxu0
  %4520 = vdwg.mxu0
  %4521 = vmatprep.subr.bf16.mxu0 0
  %4522 = vmatpush1.bf16.msra.mxu0 %v4125
  %4523 = vmatprep.subr.bf16.mxu0 0
  %4524 = vmatpush1.bf16.msra.mxu0 %v4124
  %4525 = vmatprep.subr.bf16.mxu0 0
  %4526 = vmatpush1.bf16.msra.mxu0 %v4123
  %4527 = vmatprep.subr.bf16.mxu0 0
  %4528 = vmatpush1.bf16.msra.mxu0 %v4122
  %4529 = vmatprep.subr.bf16.mxu0 0
  %4530 = vmatpush1.bf16.msra.mxu0 %v4121
  %4531 = vmatprep.subr.bf16.mxu0 0
  %4532 = vmatpush1.bf16.msra.mxu0 %v4120
  %4533 = vmatprep.subr.bf16.mxu0 0
  %4534 = vmatpush1.bf16.msra.mxu0 %v4119
  %4535 = vmatprep.subr.bf16.mxu0 0
  %4536 = vmatpush1.bf16.msra.mxu0 %v4118
  %4537 = vmatprep.subr.bf16.mxu0 0
  %4538 = vmatpush2.bf16.msra.mxu0 %v4133
  %4539 = vmatprep.subr.bf16.mxu0 0
  %4540 = vmatpush2.bf16.msra.mxu0 %v4132
  %4541 = vmatprep.subr.bf16.mxu0 0
  %4542 = vmatpush2.bf16.msra.mxu0 %v4131
  %4543 = vmatprep.subr.bf16.mxu0 0
  %4544 = vmatpush2.bf16.msra.mxu0 %v4130
  %4545 = vmatprep.subr.bf16.mxu0 0
  %4546 = vmatpush2.bf16.msra.mxu0 %v4129
  %4547 = vmatprep.subr.bf16.mxu0 0
  %4548 = vmatpush2.bf16.msra.mxu0 %v4128
  %4549 = vmatprep.subr.bf16.mxu0 0
  %4550 = vmatpush2.bf16.msra.mxu0 %v4127
  %4551 = vmatprep.subr.bf16.mxu0 0
  %4552 = vmatpush2.bf16.msra.mxu0 %v4126
  %4553 = vmatprep.mubr.bf16.mxu0 %v3437
  %4554 = vmatmul.mubr.bf16.gmra.mxu0 %v3436
  %v4555 = vpop.f32.mrf.mxu0
  %v4556 = vadd.f32 %v4491, %v4555
  %v4557 = vpop.f32.mrf.mxu0
  %v4558 = vpop.f32.mrf.mxu0
  %v4559 = vadd.f32 %v4494, %v4558
  %v4560 = vpop.f32.mrf.mxu0
  %4561 = vmatprep.mubr.bf16.mxu0 %v3453
  %4562 = vmatmul.mubr.bf16.gmra.mxu0 %v3452
  %v4563 = vpop.f32.mrf.mxu0
  %v4564 = vadd.f32 %v4499, %v4563
  %v4565 = vpop.f32.mrf.mxu0
  %v4566 = vpop.f32.mrf.mxu0
  %v4567 = vadd.f32 %v4502, %v4566
  %v4568 = vpop.f32.mrf.mxu0
  %4569 = vmatprep.mubr.bf16.mxu0 %v3469
  %4570 = vmatmul.mubr.bf16.gmra.mxu0 %v3468
  %v4571 = vpop.f32.mrf.mxu0
  %v4572 = vadd.f32 %v4507, %v4571
  %v4573 = vpop.f32.mrf.mxu0
  %v4574 = vpop.f32.mrf.mxu0
  %v4575 = vadd.f32 %v4510, %v4574
  %v4576 = vpop.f32.mrf.mxu0
  %4577 = vmatprep.mubr.bf16.mxu0 %v3485
  %4578 = vmatmul.mubr.bf16.gmra.mxu0 %v3484
  %v4579 = vpop.f32.mrf.mxu0
  %v4580 = vadd.f32 %v4515, %v4579
  %v4581 = vpop.f32.mrf.mxu0
  %v4582 = vpop.f32.mrf.mxu0
  %v4583 = vadd.f32 %v4518, %v4582
  %v4584 = vpop.f32.mrf.mxu0
  %4585 = vdwg.mxu0
  %4586 = vmatprep.subr.bf16.mxu0 0
  %4587 = vmatpush1.bf16.msra.mxu0 %v4141
  %4588 = vmatprep.subr.bf16.mxu0 0
  %4589 = vmatpush1.bf16.msra.mxu0 %v4140
  %4590 = vmatprep.subr.bf16.mxu0 0
  %4591 = vmatpush1.bf16.msra.mxu0 %v4139
  %4592 = vmatprep.subr.bf16.mxu0 0
  %4593 = vmatpush1.bf16.msra.mxu0 %v4138
  %4594 = vmatprep.subr.bf16.mxu0 0
  %4595 = vmatpush1.bf16.msra.mxu0 %v4137
  %4596 = vmatprep.subr.bf16.mxu0 0
  %4597 = vmatpush1.bf16.msra.mxu0 %v4136
  %4598 = vmatprep.subr.bf16.mxu0 0
  %4599 = vmatpush1.bf16.msra.mxu0 %v4135
  %4600 = vmatprep.subr.bf16.mxu0 0
  %4601 = vmatpush1.bf16.msra.mxu0 %v4134
  %4602 = vmatprep.subr.bf16.mxu0 0
  %4603 = vmatpush2.bf16.msra.mxu0 %v4149
  %4604 = vmatprep.subr.bf16.mxu0 0
  %4605 = vmatpush2.bf16.msra.mxu0 %v4148
  %4606 = vmatprep.subr.bf16.mxu0 0
  %4607 = vmatpush2.bf16.msra.mxu0 %v4147
  %4608 = vmatprep.subr.bf16.mxu0 0
  %4609 = vmatpush2.bf16.msra.mxu0 %v4146
  %4610 = vmatprep.subr.bf16.mxu0 0
  %4611 = vmatpush2.bf16.msra.mxu0 %v4145
  %4612 = vmatprep.subr.bf16.mxu0 0
  %4613 = vmatpush2.bf16.msra.mxu0 %v4144
  %4614 = vmatprep.subr.bf16.mxu0 0
  %4615 = vmatpush2.bf16.msra.mxu0 %v4143
  %4616 = vmatprep.subr.bf16.mxu0 0
  %4617 = vmatpush2.bf16.msra.mxu0 %v4142
  %4618 = vmatprep.mubr.bf16.mxu0 %v3439
  %4619 = vmatmul.mubr.bf16.gmra.mxu0 %v3438
  %v4620 = vpop.f32.mrf.mxu0
  %v4621 = vadd.f32 %v4556, %v4620
  %v4622 = vpop.f32.mrf.mxu0
  %v4623 = vpop.f32.mrf.mxu0
  %v4624 = vadd.f32 %v4559, %v4623
  %v4625 = vpop.f32.mrf.mxu0
  %4626 = vmatprep.mubr.bf16.mxu0 %v3455
  %4627 = vmatmul.mubr.bf16.gmra.mxu0 %v3454
  %v4628 = vpop.f32.mrf.mxu0
  %v4629 = vadd.f32 %v4564, %v4628
  %v4630 = vpop.f32.mrf.mxu0
  %v4631 = vpop.f32.mrf.mxu0
  %v4632 = vadd.f32 %v4567, %v4631
  %v4633 = vpop.f32.mrf.mxu0
  %4634 = vmatprep.mubr.bf16.mxu0 %v3471
  %4635 = vmatmul.mubr.bf16.gmra.mxu0 %v3470
  %v4636 = vpop.f32.mrf.mxu0
  %v4637 = vadd.f32 %v4572, %v4636
  %v4638 = vpop.f32.mrf.mxu0
  %v4639 = vpop.f32.mrf.mxu0
  %v4640 = vadd.f32 %v4575, %v4639
  %v4641 = vpop.f32.mrf.mxu0
  %4642 = vmatprep.mubr.bf16.mxu0 %v3487
  %4643 = vmatmul.mubr.bf16.gmra.mxu0 %v3486
  %v4644 = vpop.f32.mrf.mxu0
  %v4645 = vadd.f32 %v4580, %v4644
  %v4646 = vpop.f32.mrf.mxu0
  %v4647 = vpop.f32.mrf.mxu0
  %v4648 = vadd.f32 %v4583, %v4647
  %v4649 = vpop.f32.mrf.mxu0
  %4650 = vdwg.mxu0
  %4651 = vmatprep.subr.bf16.mxu0 0
  %4652 = vmatpush1.bf16.msra.mxu0 %v4157
  %4653 = vmatprep.subr.bf16.mxu0 0
  %4654 = vmatpush1.bf16.msra.mxu0 %v4156
  %4655 = vmatprep.subr.bf16.mxu0 0
  %4656 = vmatpush1.bf16.msra.mxu0 %v4155
  %4657 = vmatprep.subr.bf16.mxu0 0
  %4658 = vmatpush1.bf16.msra.mxu0 %v4154
  %4659 = vmatprep.subr.bf16.mxu0 0
  %4660 = vmatpush1.bf16.msra.mxu0 %v4153
  %4661 = vmatprep.subr.bf16.mxu0 0
  %4662 = vmatpush1.bf16.msra.mxu0 %v4152
  %4663 = vmatprep.subr.bf16.mxu0 0
  %4664 = vmatpush1.bf16.msra.mxu0 %v4151
  %4665 = vmatprep.subr.bf16.mxu0 0
  %4666 = vmatpush1.bf16.msra.mxu0 %v4150
  %4667 = vmatprep.subr.bf16.mxu0 0
  %4668 = vmatpush2.bf16.msra.mxu0 %v4165
  %4669 = vmatprep.subr.bf16.mxu0 0
  %4670 = vmatpush2.bf16.msra.mxu0 %v4164
  %4671 = vmatprep.subr.bf16.mxu0 0
  %4672 = vmatpush2.bf16.msra.mxu0 %v4163
  %4673 = vmatprep.subr.bf16.mxu0 0
  %4674 = vmatpush2.bf16.msra.mxu0 %v4162
  %4675 = vmatprep.subr.bf16.mxu0 0
  %4676 = vmatpush2.bf16.msra.mxu0 %v4161
  %4677 = vmatprep.subr.bf16.mxu0 0
  %4678 = vmatpush2.bf16.msra.mxu0 %v4160
  %4679 = vmatprep.subr.bf16.mxu0 0
  %4680 = vmatpush2.bf16.msra.mxu0 %v4159
  %4681 = vmatprep.subr.bf16.mxu0 0
  %4682 = vmatpush2.bf16.msra.mxu0 %v4158
  %4683 = vmatprep.mubr.bf16.mxu0 %v3441
  %4684 = vmatmul.mubr.bf16.gmra.mxu0 %v3440
  %v4685 = vpop.f32.mrf.mxu0
  %v4686 = vadd.f32 %v4621, %v4685
  %v4687 = vpop.f32.mrf.mxu0
  %v4688 = vpop.f32.mrf.mxu0
  %v4689 = vadd.f32 %v4624, %v4688
  %v4690 = vpop.f32.mrf.mxu0
  %4691 = vmatprep.mubr.bf16.mxu0 %v3457
  %4692 = vmatmul.mubr.bf16.gmra.mxu0 %v3456
  %v4693 = vpop.f32.mrf.mxu0
  %v4694 = vadd.f32 %v4629, %v4693
  %v4695 = vpop.f32.mrf.mxu0
  %v4696 = vpop.f32.mrf.mxu0
  %v4697 = vadd.f32 %v4632, %v4696
  %v4698 = vpop.f32.mrf.mxu0
  %4699 = vmatprep.mubr.bf16.mxu0 %v3473
  %4700 = vmatmul.mubr.bf16.gmra.mxu0 %v3472
  %v4701 = vpop.f32.mrf.mxu0
  %v4702 = vadd.f32 %v4637, %v4701
  %v4703 = vpop.f32.mrf.mxu0
  %v4704 = vpop.f32.mrf.mxu0
  %v4705 = vadd.f32 %v4640, %v4704
  %v4706 = vpop.f32.mrf.mxu0
  %4707 = vmatprep.mubr.bf16.mxu0 %v3489
  %4708 = vmatmul.mubr.bf16.gmra.mxu0 %v3488
  %v4709 = vpop.f32.mrf.mxu0
  %v4710 = vadd.f32 %v4645, %v4709
  %v4711 = vpop.f32.mrf.mxu0
  %v4712 = vpop.f32.mrf.mxu0
  %v4713 = vadd.f32 %v4648, %v4712
  %v4714 = vpop.f32.mrf.mxu0
  %4715 = vdwg.mxu0
  %4716 = vmatprep.subr.bf16.mxu0 0
  %4717 = vmatpush1.bf16.msra.mxu0 %v4173
  %4718 = vmatprep.subr.bf16.mxu0 0
  %4719 = vmatpush1.bf16.msra.mxu0 %v4172
  %4720 = vmatprep.subr.bf16.mxu0 0
  %4721 = vmatpush1.bf16.msra.mxu0 %v4171
  %4722 = vmatprep.subr.bf16.mxu0 0
  %4723 = vmatpush1.bf16.msra.mxu0 %v4170
  %4724 = vmatprep.subr.bf16.mxu0 0
  %4725 = vmatpush1.bf16.msra.mxu0 %v4169
  %4726 = vmatprep.subr.bf16.mxu0 0
  %4727 = vmatpush1.bf16.msra.mxu0 %v4168
  %4728 = vmatprep.subr.bf16.mxu0 0
  %4729 = vmatpush1.bf16.msra.mxu0 %v4167
  %4730 = vmatprep.subr.bf16.mxu0 0
  %4731 = vmatpush1.bf16.msra.mxu0 %v4166
  %4732 = vmatprep.subr.bf16.mxu0 0
  %4733 = vmatpush2.bf16.msra.mxu0 %v4181
  %4734 = vmatprep.subr.bf16.mxu0 0
  %4735 = vmatpush2.bf16.msra.mxu0 %v4180
  %4736 = vmatprep.subr.bf16.mxu0 0
  %4737 = vmatpush2.bf16.msra.mxu0 %v4179
  %4738 = vmatprep.subr.bf16.mxu0 0
  %4739 = vmatpush2.bf16.msra.mxu0 %v4178
  %4740 = vmatprep.subr.bf16.mxu0 0
  %4741 = vmatpush2.bf16.msra.mxu0 %v4177
  %4742 = vmatprep.subr.bf16.mxu0 0
  %4743 = vmatpush2.bf16.msra.mxu0 %v4176
  %4744 = vmatprep.subr.bf16.mxu0 0
  %4745 = vmatpush2.bf16.msra.mxu0 %v4175
  %4746 = vmatprep.subr.bf16.mxu0 0
  %4747 = vmatpush2.bf16.msra.mxu0 %v4174
  %4748 = vmatprep.mubr.bf16.mxu0 %v3443
  %4749 = vmatmul.mubr.bf16.gmra.mxu0 %v3442
  %v4750 = vpop.f32.mrf.mxu0
  %v4751 = vadd.f32 %v4686, %v4750
  %v4752 = vpop.f32.mrf.mxu0
  %v4753 = vpop.f32.mrf.mxu0
  %v4754 = vadd.f32 %v4689, %v4753
  %v4755 = vpop.f32.mrf.mxu0
  %4756 = vmatprep.mubr.bf16.mxu0 %v3459
  %4757 = vmatmul.mubr.bf16.gmra.mxu0 %v3458
  %v4758 = vpop.f32.mrf.mxu0
  %v4759 = vadd.f32 %v4694, %v4758
  %v4760 = vpop.f32.mrf.mxu0
  %v4761 = vpop.f32.mrf.mxu0
  %v4762 = vadd.f32 %v4697, %v4761
  %v4763 = vpop.f32.mrf.mxu0
  %4764 = vmatprep.mubr.bf16.mxu0 %v3475
  %4765 = vmatmul.mubr.bf16.gmra.mxu0 %v3474
  %v4766 = vpop.f32.mrf.mxu0
  %v4767 = vadd.f32 %v4702, %v4766
  %v4768 = vpop.f32.mrf.mxu0
  %v4769 = vpop.f32.mrf.mxu0
  %v4770 = vadd.f32 %v4705, %v4769
  %v4771 = vpop.f32.mrf.mxu0
  %4772 = vmatprep.mubr.bf16.mxu0 %v3491
  %4773 = vmatmul.mubr.bf16.gmra.mxu0 %v3490
  %v4774 = vpop.f32.mrf.mxu0
  %v4775 = vadd.f32 %v4710, %v4774
  %v4776 = vpop.f32.mrf.mxu0
  %v4777 = vpop.f32.mrf.mxu0
  %v4778 = vadd.f32 %v4713, %v4777
  %v4779 = vpop.f32.mrf.mxu0
  %4780 = vdwg.mxu0
  %4781 = vmatprep.subr.bf16.mxu0 0
  %4782 = vmatpush1.bf16.msra.mxu0 %v4189
  %4783 = vmatprep.subr.bf16.mxu0 0
  %4784 = vmatpush1.bf16.msra.mxu0 %v4188
  %4785 = vmatprep.subr.bf16.mxu0 0
  %4786 = vmatpush1.bf16.msra.mxu0 %v4187
  %4787 = vmatprep.subr.bf16.mxu0 0
  %4788 = vmatpush1.bf16.msra.mxu0 %v4186
  %4789 = vmatprep.subr.bf16.mxu0 0
  %4790 = vmatpush1.bf16.msra.mxu0 %v4185
  %4791 = vmatprep.subr.bf16.mxu0 0
  %4792 = vmatpush1.bf16.msra.mxu0 %v4184
  %4793 = vmatprep.subr.bf16.mxu0 0
  %4794 = vmatpush1.bf16.msra.mxu0 %v4183
  %4795 = vmatprep.subr.bf16.mxu0 0
  %4796 = vmatpush1.bf16.msra.mxu0 %v4182
  %4797 = vmatprep.subr.bf16.mxu0 0
  %4798 = vmatpush2.bf16.msra.mxu0 %v4197
  %4799 = vmatprep.subr.bf16.mxu0 0
  %4800 = vmatpush2.bf16.msra.mxu0 %v4196
  %4801 = vmatprep.subr.bf16.mxu0 0
  %4802 = vmatpush2.bf16.msra.mxu0 %v4195
  %4803 = vmatprep.subr.bf16.mxu0 0
  %4804 = vmatpush2.bf16.msra.mxu0 %v4194
  %4805 = vmatprep.subr.bf16.mxu0 0
  %4806 = vmatpush2.bf16.msra.mxu0 %v4193
  %4807 = vmatprep.subr.bf16.mxu0 0
  %4808 = vmatpush2.bf16.msra.mxu0 %v4192
  %4809 = vmatprep.subr.bf16.mxu0 0
  %4810 = vmatpush2.bf16.msra.mxu0 %v4191
  %4811 = vmatprep.subr.bf16.mxu0 0
  %4812 = vmatpush2.bf16.msra.mxu0 %v4190
  %4813 = vmatprep.mubr.bf16.mxu0 %v3445
  %4814 = vmatmul.mubr.bf16.gmra.mxu0 %v3444
  %v4815 = vpop.f32.mrf.mxu0
  %v4816 = vadd.f32 %v4751, %v4815
  %v4817 = vpop.f32.mrf.mxu0
  %v4818 = vpop.f32.mrf.mxu0
  %v4819 = vadd.f32 %v4754, %v4818
  %v4820 = vpop.f32.mrf.mxu0
  %4821 = vmatprep.mubr.bf16.mxu0 %v3461
  %4822 = vmatmul.mubr.bf16.gmra.mxu0 %v3460
  %v4823 = vpop.f32.mrf.mxu0
  %v4824 = vadd.f32 %v4759, %v4823
  %v4825 = vpop.f32.mrf.mxu0
  %v4826 = vpop.f32.mrf.mxu0
  %v4827 = vadd.f32 %v4762, %v4826
  %v4828 = vpop.f32.mrf.mxu0
  %4829 = vmatprep.mubr.bf16.mxu0 %v3477
  %4830 = vmatmul.mubr.bf16.gmra.mxu0 %v3476
  %v4831 = vpop.f32.mrf.mxu0
  %v4832 = vadd.f32 %v4767, %v4831
  %v4833 = vpop.f32.mrf.mxu0
  %v4834 = vpop.f32.mrf.mxu0
  %v4835 = vadd.f32 %v4770, %v4834
  %v4836 = vpop.f32.mrf.mxu0
  %4837 = vmatprep.mubr.bf16.mxu0 %v3493
  %4838 = vmatmul.mubr.bf16.gmra.mxu0 %v3492
  %v4839 = vpop.f32.mrf.mxu0
  %v4840 = vadd.f32 %v4775, %v4839
  %v4841 = vpop.f32.mrf.mxu0
  %v4842 = vpop.f32.mrf.mxu0
  %v4843 = vadd.f32 %v4778, %v4842
  %v4844 = vpop.f32.mrf.mxu0
  %4845 = vdwg.mxu0
  %v4846 = vmax.f32 %v4816, 0.0
  %v4847 = vmax.f32 %v4819, 0.0
  %v4848 = vmax.f32 %v4824, 0.0
  %v4849 = vmax.f32 %v4827, 0.0
  %v4850 = vmax.f32 %v4832, 0.0
  %v4851 = vmax.f32 %v4835, 0.0
  %v4852 = vmax.f32 %v4840, 0.0
  %v4853 = vmax.f32 %v4843, 0.0
  %v4854 = vlaneseq
  %v4855 = vshrl.u32 %v4854, 7
  %v4856 = vadd.s32 %v4855, 8
  %v4857 = vadd.s32 %v4855, 16
  %v4858 = vadd.s32 %v4855, 24
  %v4859 = vadd.s32 %v4855, 32
  %v4860 = vadd.s32 %v4855, 40
  %v4861 = vadd.s32 %v4855, 48
  %v4862 = vadd.s32 %v4855, 56
  %vm4863 = vcmp.lt.s32.totalorder %v4855, 49
  %vm4864 = vcmp.lt.s32.totalorder %v4856, 49
  %vm4865 = vcmp.lt.s32.totalorder %v4857, 49
  %vm4866 = vcmp.lt.s32.totalorder %v4858, 49
  %vm4867 = vcmp.lt.s32.totalorder %v4859, 49
  %vm4868 = vcmp.lt.s32.totalorder %v4860, 49
  %vm4869 = vcmp.lt.s32.totalorder %v4861, 49
  %vm4870 = vcmp.lt.s32.totalorder %v4862, 49
  %v4871 = vsel %vm4863, 1, 0
  %v4872 = vsel %vm4864, 1, 0
  %v4873 = vsel %vm4865, 1, 0
  %v4874 = vsel %vm4866, 1, 0
  %v4875 = vsel %vm4867, 1, 0
  %v4876 = vsel %vm4868, 1, 0
  %v4877 = vsel %vm4869, 1, 0
  %v4878 = vsel %vm4870, 1, 0
  %vm4879 = vcmp.eq.s32.totalorder %v4871, 1
  %vm4880 = vcmp.eq.s32.totalorder %v4872, 1
  %vm4881 = vcmp.eq.s32.totalorder %v4873, 1
  %vm4882 = vcmp.eq.s32.totalorder %v4874, 1
  %vm4883 = vcmp.eq.s32.totalorder %v4875, 1
  %vm4884 = vcmp.eq.s32.totalorder %v4876, 1
  %vm4885 = vcmp.eq.s32.totalorder %v4877, 1
  %vm4886 = vcmp.eq.s32.totalorder %v4878, 1
  %v4887 = vsel %vm4879, %v4846, 0.0
  %v4888 = vsel %vm4880, %v4847, 0.0
  %v4889 = vsel %vm4881, %v4848, 0.0
  %v4890 = vsel %vm4882, %v4849, 0.0
  %v4891 = vsel %vm4883, %v4850, 0.0
  %v4892 = vsel %vm4884, %v4851, 0.0
  %v4893 = vsel %vm4885, %v4852, 0.0
  %v4894 = vsel %vm4886, %v4853, 0.0
  %v4895 = vpack.c.bf16 %v4888, %v4887
  %v4896 = vpack.c.bf16 %v4890, %v4889
  %v4897 = vpack.c.bf16 %v4892, %v4891
  %v4898 = vpack.c.bf16 %v4894, %v4893
  %v4899 = vld [vmem:[%s6] sm:$0xf]
  %v4900 = vld [vmem:[%s6 + $0x4] sm:$0xf]
  %v4901 = vld [vmem:[%s6 + $0x8] sm:$0xf]
  %v4902 = vld [vmem:[%s6 + $0xc] sm:$0xf]
  %v4903 = vld [vmem:[%s6 + $0x10] sm:$0xf]
  %v4904 = vld [vmem:[%s6 + $0x14] sm:$0xf]
  %v4905 = vld [vmem:[%s6 + $0x18] sm:$0xf]
  %v4906 = vld [vmem:[%s6 + $0x1c] sm:$0xf]
  %v4907 = vld [vmem:[%s6 + $0x20] sm:$0xf]
  %v4908 = vld [vmem:[%s6 + $0x24] sm:$0xf]
  %v4909 = vld [vmem:[%s6 + $0x28] sm:$0xf]
  %v4910 = vld [vmem:[%s6 + $0x2c] sm:$0xf]
  %v4911 = vld [vmem:[%s6 + $0x30] sm:$0xf]
  %v4912 = vld [vmem:[%s6 + $0x34] sm:$0xf]
  %v4913 = vld [vmem:[%s6 + $0x38] sm:$0xf]
  %v4914 = vld [vmem:[%s6 + $0x3c] sm:$0xf]
  %v4915 = vld [vmem:[%s6 + $0x40] sm:$0xf]
  %v4916 = vld [vmem:[%s6 + $0x44] sm:$0xf]
  %v4917 = vld [vmem:[%s6 + $0x48] sm:$0xf]
  %v4918 = vld [vmem:[%s6 + $0x4c] sm:$0xf]
  %v4919 = vld [vmem:[%s6 + $0x50] sm:$0xf]
  %v4920 = vld [vmem:[%s6 + $0x54] sm:$0xf]
  %v4921 = vld [vmem:[%s6 + $0x58] sm:$0xf]
  %v4922 = vld [vmem:[%s6 + $0x5c] sm:$0xf]
  %v4923 = vld [vmem:[%s6 + $0x60] sm:$0xf]
  %v4924 = vld [vmem:[%s6 + $0x64] sm:$0xf]
  %v4925 = vld [vmem:[%s6 + $0x68] sm:$0xf]
  %v4926 = vld [vmem:[%s6 + $0x6c] sm:$0xf]
  %v4927 = vld [vmem:[%s6 + $0x70] sm:$0xf]
  %v4928 = vld [vmem:[%s6 + $0x74] sm:$0xf]
  %v4929 = vld [vmem:[%s6 + $0x78] sm:$0xf]
  %v4930 = vld [vmem:[%s6 + $0x7c] sm:$0xf]
  %v4963 = vunpack.c.l.b16 %v4899
  %v4964 = vunpack.c.l.b16 %v4900
  %v4965 = vunpack.c.l.b16 %v4901
  %v4966 = vunpack.c.l.b16 %v4902
  %v4967 = vunpack.c.l.b16 %v4903
  %v4968 = vunpack.c.l.b16 %v4904
  %v4969 = vunpack.c.l.b16 %v4905
  %v4970 = vunpack.c.l.b16 %v4906
  %v4971 = vunpack.c.l.b16 %v4907
  %v4972 = vunpack.c.l.b16 %v4908
  %v4973 = vunpack.c.l.b16 %v4909
  %v4974 = vunpack.c.l.b16 %v4910
  %v4975 = vunpack.c.l.b16 %v4911
  %v4976 = vunpack.c.l.b16 %v4912
  %v4977 = vunpack.c.l.b16 %v4913
  %v4978 = vunpack.c.l.b16 %v4914
  %v4979 = vunpack.c.l.b16 %v4915
  %v4980 = vunpack.c.l.b16 %v4916
  %v4981 = vunpack.c.l.b16 %v4917
  %v4982 = vunpack.c.l.b16 %v4918
  %v4983 = vunpack.c.l.b16 %v4919
  %v4984 = vunpack.c.l.b16 %v4920
  %v4985 = vunpack.c.l.b16 %v4921
  %v4986 = vunpack.c.l.b16 %v4922
  %v4987 = vunpack.c.l.b16 %v4923
  %v4988 = vunpack.c.l.b16 %v4924
  %v4989 = vunpack.c.l.b16 %v4925
  %v4990 = vunpack.c.l.b16 %v4926
  %v4991 = vunpack.c.l.b16 %v4927
  %v4992 = vunpack.c.l.b16 %v4928
  %v4993 = vunpack.c.l.b16 %v4929
  %v4994 = vunpack.c.l.b16 %v4930
  %v4995 = vpack.c.b16 %v4964, %v4963
  %v4996 = vpack.c.b16 %v4966, %v4965
  %v4997 = vpack.c.b16 %v4968, %v4967
  %v4998 = vpack.c.b16 %v4970, %v4969
  %v4999 = vpack.c.b16 %v4972, %v4971
  %v5000 = vpack.c.b16 %v4974, %v4973
  %v5001 = vpack.c.b16 %v4976, %v4975
  %v5002 = vpack.c.b16 %v4978, %v4977
  %v5003 = vpack.c.b16 %v4980, %v4979
  %v5004 = vpack.c.b16 %v4982, %v4981
  %v5005 = vpack.c.b16 %v4984, %v4983
  %v5006 = vpack.c.b16 %v4986, %v4985
  %v5007 = vpack.c.b16 %v4988, %v4987
  %v5008 = vpack.c.b16 %v4990, %v4989
  %v5009 = vpack.c.b16 %v4992, %v4991
  %v5010 = vpack.c.b16 %v4994, %v4993
  %vm5011 = vcmask 523264
  %v5013 = vsel %vm5011, %v4995, 0
  %v5016 = vsel %vm5011, %v4996, 0
  %v5019 = vsel %vm5011, %v4997, 0
  %v5022 = vsel %vm5011, %v4998, 0
  %v5025 = vsel %vm5011, %v4999, 0
  %v5028 = vsel %vm5011, %v5000, 0
  %v5031 = vsel %vm5011, %v5001, 0
  %v5034 = vsel %vm5011, %v5002, 0
  %v5037 = vsel %vm5011, %v5003, 0
  %v5040 = vsel %vm5011, %v5004, 0
  %v5043 = vsel %vm5011, %v5005, 0
  %v5046 = vsel %vm5011, %v5006, 0
  %v5049 = vsel %vm5011, %v5007, 0
  %v5052 = vsel %vm5011, %v5008, 0
  %v5055 = vsel %vm5011, %v5009, 0
  %v5058 = vsel %vm5011, %v5010, 0
  %5060 = vmatprep.subr.bf16.mxu0 0
  %5061 = vmatpush1.bf16.msra.mxu0 0
  %5062 = vmatprep.subr.bf16.mxu0 0
  %5063 = vmatpush1.bf16.msra.mxu0 0
  %5064 = vmatprep.subr.bf16.mxu0 0
  %5065 = vmatpush1.bf16.msra.mxu0 0
  %5066 = vmatprep.subr.bf16.mxu0 0
  %5067 = vmatpush1.bf16.msra.mxu0 0
  %5068 = vmatprep.subr.bf16.mxu0 0
  %5069 = vmatpush1.bf16.msra.mxu0 %v4898
  %5070 = vmatprep.subr.bf16.mxu0 0
  %5071 = vmatpush1.bf16.msra.mxu0 %v4897
  %5072 = vmatprep.subr.bf16.mxu0 0
  %5073 = vmatpush1.bf16.msra.mxu0 %v4896
  %5074 = vmatprep.subr.bf16.mxu0 0
  %5075 = vmatpush1.bf16.msra.mxu0 %v4895
  %5076 = vmatprep.subr.bf16.mxu0 0
  %5077 = vmatpush2.bf16.msra.mxu0 0
  %5078 = vmatprep.subr.bf16.mxu0 0
  %5079 = vmatpush2.bf16.msra.mxu0 0
  %5080 = vmatprep.subr.bf16.mxu0 0
  %5081 = vmatpush2.bf16.msra.mxu0 0
  %5082 = vmatprep.subr.bf16.mxu0 0
  %5083 = vmatpush2.bf16.msra.mxu0 0
  %5084 = vmatprep.subr.bf16.mxu0 0
  %5085 = vmatpush2.bf16.msra.mxu0 0
  %5086 = vmatprep.subr.bf16.mxu0 0
  %5087 = vmatpush2.bf16.msra.mxu0 0
  %5088 = vmatprep.subr.bf16.mxu0 0
  %5089 = vmatpush2.bf16.msra.mxu0 0
  %5090 = vmatprep.subr.bf16.mxu0 0
  %5091 = vmatpush2.bf16.msra.mxu0 0
  %5092 = vmatprep.mubr.bf16.mxu0 0
  %5093 = vmatmul.mubr.bf16.gmra.mxu0 %v5013
  %v5094 = vpop.f32.mrf.mxu0
  %v5095 = vadd.f32 0.0, %v5094
  %v5096 = vpop.f32.mrf.mxu0
  %v5097 = vpop.f32.mrf.mxu0
  %v5098 = vadd.f32 0.0, %v5097
  %v5099 = vpop.f32.mrf.mxu0
  %5100 = vmatprep.mubr.bf16.mxu0 0
  %5101 = vmatmul.mubr.bf16.gmra.mxu0 %v5016
  %v5102 = vpop.f32.mrf.mxu0
  %v5103 = vadd.f32 0.0, %v5102
  %v5104 = vpop.f32.mrf.mxu0
  %v5105 = vpop.f32.mrf.mxu0
  %v5106 = vadd.f32 0.0, %v5105
  %v5107 = vpop.f32.mrf.mxu0
  %5108 = vmatprep.mubr.bf16.mxu0 0
  %5109 = vmatmul.mubr.bf16.gmra.mxu0 %v5019
  %v5110 = vpop.f32.mrf.mxu0
  %v5111 = vadd.f32 0.0, %v5110
  %v5112 = vpop.f32.mrf.mxu0
  %v5113 = vpop.f32.mrf.mxu0
  %v5114 = vadd.f32 0.0, %v5113
  %v5115 = vpop.f32.mrf.mxu0
  %5116 = vmatprep.mubr.bf16.mxu0 0
  %5117 = vmatmul.mubr.bf16.gmra.mxu0 %v5022
  %v5118 = vpop.f32.mrf.mxu0
  %v5119 = vadd.f32 0.0, %v5118
  %v5120 = vpop.f32.mrf.mxu0
  %v5121 = vpop.f32.mrf.mxu0
  %v5122 = vadd.f32 0.0, %v5121
  %v5123 = vpop.f32.mrf.mxu0
  %5124 = vmatprep.mubr.bf16.mxu0 0
  %5125 = vmatmul.mubr.bf16.gmra.mxu0 %v5025
  %v5126 = vpop.f32.mrf.mxu0
  %v5127 = vadd.f32 0.0, %v5126
  %v5128 = vpop.f32.mrf.mxu0
  %v5129 = vpop.f32.mrf.mxu0
  %v5130 = vadd.f32 0.0, %v5129
  %v5131 = vpop.f32.mrf.mxu0
  %5132 = vmatprep.mubr.bf16.mxu0 0
  %5133 = vmatmul.mubr.bf16.gmra.mxu0 %v5028
  %v5134 = vpop.f32.mrf.mxu0
  %v5135 = vadd.f32 0.0, %v5134
  %v5136 = vpop.f32.mrf.mxu0
  %v5137 = vpop.f32.mrf.mxu0
  %v5138 = vadd.f32 0.0, %v5137
  %v5139 = vpop.f32.mrf.mxu0
  %5140 = vmatprep.mubr.bf16.mxu0 0
  %5141 = vmatmul.mubr.bf16.gmra.mxu0 %v5031
  %v5142 = vpop.f32.mrf.mxu0
  %v5143 = vadd.f32 0.0, %v5142
  %v5144 = vpop.f32.mrf.mxu0
  %v5145 = vpop.f32.mrf.mxu0
  %v5146 = vadd.f32 0.0, %v5145
  %v5147 = vpop.f32.mrf.mxu0
  %5148 = vmatprep.mubr.bf16.mxu0 0
  %5149 = vmatmul.mubr.bf16.gmra.mxu0 %v5034
  %v5150 = vpop.f32.mrf.mxu0
  %v5151 = vadd.f32 0.0, %v5150
  %v5152 = vpop.f32.mrf.mxu0
  %v5153 = vpop.f32.mrf.mxu0
  %v5154 = vadd.f32 0.0, %v5153
  %v5155 = vpop.f32.mrf.mxu0
  %5156 = vmatprep.mubr.bf16.mxu0 0
  %5157 = vmatmul.mubr.bf16.gmra.mxu0 %v5037
  %v5158 = vpop.f32.mrf.mxu0
  %v5159 = vadd.f32 0.0, %v5158
  %v5160 = vpop.f32.mrf.mxu0
  %v5161 = vpop.f32.mrf.mxu0
  %v5162 = vadd.f32 0.0, %v5161
  %v5163 = vpop.f32.mrf.mxu0
  %5164 = vmatprep.mubr.bf16.mxu0 0
  %5165 = vmatmul.mubr.bf16.gmra.mxu0 %v5040
  %v5166 = vpop.f32.mrf.mxu0
  %v5167 = vadd.f32 0.0, %v5166
  %v5168 = vpop.f32.mrf.mxu0
  %v5169 = vpop.f32.mrf.mxu0
  %v5170 = vadd.f32 0.0, %v5169
  %v5171 = vpop.f32.mrf.mxu0
  %5172 = vmatprep.mubr.bf16.mxu0 0
  %5173 = vmatmul.mubr.bf16.gmra.mxu0 %v5043
  %v5174 = vpop.f32.mrf.mxu0
  %v5175 = vadd.f32 0.0, %v5174
  %v5176 = vpop.f32.mrf.mxu0
  %v5177 = vpop.f32.mrf.mxu0
  %v5178 = vadd.f32 0.0, %v5177
  %v5179 = vpop.f32.mrf.mxu0
  %5180 = vmatprep.mubr.bf16.mxu0 0
  %5181 = vmatmul.mubr.bf16.gmra.mxu0 %v5046
  %v5182 = vpop.f32.mrf.mxu0
  %v5183 = vadd.f32 0.0, %v5182
  %v5184 = vpop.f32.mrf.mxu0
  %v5185 = vpop.f32.mrf.mxu0
  %v5186 = vadd.f32 0.0, %v5185
  %v5187 = vpop.f32.mrf.mxu0
  %5188 = vmatprep.mubr.bf16.mxu0 0
  %5189 = vmatmul.mubr.bf16.gmra.mxu0 %v5049
  %v5190 = vpop.f32.mrf.mxu0
  %v5191 = vadd.f32 0.0, %v5190
  %v5192 = vpop.f32.mrf.mxu0
  %v5193 = vpop.f32.mrf.mxu0
  %v5194 = vadd.f32 0.0, %v5193
  %v5195 = vpop.f32.mrf.mxu0
  %5196 = vmatprep.mubr.bf16.mxu0 0
  %5197 = vmatmul.mubr.bf16.gmra.mxu0 %v5052
  %v5198 = vpop.f32.mrf.mxu0
  %v5199 = vadd.f32 0.0, %v5198
  %v5200 = vpop.f32.mrf.mxu0
  %v5201 = vpop.f32.mrf.mxu0
  %v5202 = vadd.f32 0.0, %v5201
  %v5203 = vpop.f32.mrf.mxu0
  %5204 = vmatprep.mubr.bf16.mxu0 0
  %5205 = vmatmul.mubr.bf16.gmra.mxu0 %v5055
  %v5206 = vpop.f32.mrf.mxu0
  %v5207 = vadd.f32 0.0, %v5206
  %v5208 = vpop.f32.mrf.mxu0
  %v5209 = vpop.f32.mrf.mxu0
  %v5210 = vadd.f32 0.0, %v5209
  %v5211 = vpop.f32.mrf.mxu0
  %5212 = vmatprep.mubr.bf16.mxu0 0
  %5213 = vmatmul.mubr.bf16.gmra.mxu0 %v5058
  %v5214 = vpop.f32.mrf.mxu0
  %v5215 = vadd.f32 0.0, %v5214
  %v5216 = vpop.f32.mrf.mxu0
  %v5217 = vpop.f32.mrf.mxu0
  %v5218 = vadd.f32 0.0, %v5217
  %v5219 = vpop.f32.mrf.mxu0
  %5220 = vdwg.mxu0
  %v5221 = vpack.c.bf16 %v5098, %v5095
  %v5222 = vpack.c.bf16 %v5106, %v5103
  %v5223 = vpack.c.bf16 %v5114, %v5111
  %v5224 = vpack.c.bf16 %v5122, %v5119
  %v5225 = vpack.c.bf16 %v5130, %v5127
  %v5226 = vpack.c.bf16 %v5138, %v5135
  %v5227 = vpack.c.bf16 %v5146, %v5143
  %v5228 = vpack.c.bf16 %v5154, %v5151
  %v5229 = vpack.c.bf16 %v5162, %v5159
  %v5230 = vpack.c.bf16 %v5170, %v5167
  %v5231 = vpack.c.bf16 %v5178, %v5175
  %v5232 = vpack.c.bf16 %v5186, %v5183
  %v5233 = vpack.c.bf16 %v5194, %v5191
  %v5234 = vpack.c.bf16 %v5202, %v5199
  %v5235 = vpack.c.bf16 %v5210, %v5207
  %v5236 = vpack.c.bf16 %v5218, %v5215
  %v5238 = vunpack.c.l.b16 %v5221
  %v5239 = vunpack.c.h.b16 %v5221
  %v5240 = vpack.c.b16 %v5238, %v5238
  %v5241 = vpack.c.b16 %v5239, %v5239
  %vm5244 = vcmask 519168
  %5245 = vst.msk [vmem:[#allocation5] sm:$0xf] %vm5244, %v5240
  %5246 = vst.msk [vmem:[#allocation5 + $0x20] sm:$0xf] %vm5244, %v5241
  %v5248 = vunpack.c.l.b16 %v5222
  %v5249 = vunpack.c.h.b16 %v5222
  %v5250 = vpack.c.b16 %v5248, %v5248
  %v5251 = vpack.c.b16 %v5249, %v5249
  %5252 = vrot.lane.b32.xlu0 %v5250, 64
  %v5253 = vpop.permute.xlu0 %5252
  %5254 = vrot.lane.b32.xlu0 %v5251, 64
  %v5255 = vpop.permute.xlu0 %5254
  %vm5258 = vcmask 1043968
  %5259 = vst.msk [vmem:[#allocation5] sm:$0xf] %vm5258, %v5253
  %5260 = vst.msk [vmem:[#allocation5 + $0x20] sm:$0xf] %vm5258, %v5255
  %v5262 = vunpack.c.l.b16 %v5223
  %v5263 = vunpack.c.h.b16 %v5223
  %v5264 = vpack.c.b16 %v5262, %v5262
  %v5265 = vpack.c.b16 %v5263, %v5263
  %5268 = vst.msk [vmem:[#allocation5 + $0x4] sm:$0xf] %vm5244, %v5264
  %5269 = vst.msk [vmem:[#allocation5 + $0x24] sm:$0xf] %vm5244, %v5265
  %v5271 = vunpack.c.l.b16 %v5224
  %v5272 = vunpack.c.h.b16 %v5224
  %v5273 = vpack.c.b16 %v5271, %v5271
  %v5274 = vpack.c.b16 %v5272, %v5272
  %5275 = vrot.lane.b32.xlu0 %v5273, 64
  %v5276 = vpop.permute.xlu0 %5275
  %5277 = vrot.lane.b32.xlu0 %v5274, 64
  %v5278 = vpop.permute.xlu0 %5277
  %5281 = vst.msk [vmem:[#allocation5 + $0x4] sm:$0xf] %vm5258, %v5276
  %5282 = vst.msk [vmem:[#allocation5 + $0x24] sm:$0xf] %vm5258, %v5278
  %v5284 = vunpack.c.l.b16 %v5225
  %v5285 = vunpack.c.h.b16 %v5225
  %v5286 = vpack.c.b16 %v5284, %v5284
  %v5287 = vpack.c.b16 %v5285, %v5285
  %5290 = vst.msk [vmem:[#allocation5 + $0x8] sm:$0xf] %vm5244, %v5286
  %5291 = vst.msk [vmem:[#allocation5 + $0x28] sm:$0xf] %vm5244, %v5287
  %v5293 = vunpack.c.l.b16 %v5226
  %v5294 = vunpack.c.h.b16 %v5226
  %v5295 = vpack.c.b16 %v5293, %v5293
  %v5296 = vpack.c.b16 %v5294, %v5294
  %5297 = vrot.lane.b32.xlu0 %v5295, 64
  %v5298 = vpop.permute.xlu0 %5297
  %5299 = vrot.lane.b32.xlu0 %v5296, 64
  %v5300 = vpop.permute.xlu0 %5299
  %5303 = vst.msk [vmem:[#allocation5 + $0x8] sm:$0xf] %vm5258, %v5298
  %5304 = vst.msk [vmem:[#allocation5 + $0x28] sm:$0xf] %vm5258, %v5300
  %v5306 = vunpack.c.l.b16 %v5227
  %v5307 = vunpack.c.h.b16 %v5227
  %v5308 = vpack.c.b16 %v5306, %v5306
  %v5309 = vpack.c.b16 %v5307, %v5307
  %5312 = vst.msk [vmem:[#allocation5 + $0xc] sm:$0xf] %vm5244, %v5308
  %5313 = vst.msk [vmem:[#allocation5 + $0x2c] sm:$0xf] %vm5244, %v5309
  %v5315 = vunpack.c.l.b16 %v5228
  %v5316 = vunpack.c.h.b16 %v5228
  %v5317 = vpack.c.b16 %v5315, %v5315
  %v5318 = vpack.c.b16 %v5316, %v5316
  %5319 = vrot.lane.b32.xlu0 %v5317, 64
  %v5320 = vpop.permute.xlu0 %5319
  %5321 = vrot.lane.b32.xlu0 %v5318, 64
  %v5322 = vpop.permute.xlu0 %5321
  %5325 = vst.msk [vmem:[#allocation5 + $0xc] sm:$0xf] %vm5258, %v5320
  %5326 = vst.msk [vmem:[#allocation5 + $0x2c] sm:$0xf] %vm5258, %v5322
  %v5328 = vunpack.c.l.b16 %v5229
  %v5329 = vunpack.c.h.b16 %v5229
  %v5330 = vpack.c.b16 %v5328, %v5328
  %v5331 = vpack.c.b16 %v5329, %v5329
  %5334 = vst.msk [vmem:[#allocation5 + $0x10] sm:$0xf] %vm5244, %v5330
  %5335 = vst.msk [vmem:[#allocation5 + $0x30] sm:$0xf] %vm5244, %v5331
  %v5337 = vunpack.c.l.b16 %v5230
  %v5338 = vunpack.c.h.b16 %v5230
  %v5339 = vpack.c.b16 %v5337, %v5337
  %v5340 = vpack.c.b16 %v5338, %v5338
  %5341 = vrot.lane.b32.xlu0 %v5339, 64
  %v5342 = vpop.permute.xlu0 %5341
  %5343 = vrot.lane.b32.xlu0 %v5340, 64
  %v5344 = vpop.permute.xlu0 %5343
  %5347 = vst.msk [vmem:[#allocation5 + $0x10] sm:$0xf] %vm5258, %v5342
  %5348 = vst.msk [vmem:[#allocation5 + $0x30] sm:$0xf] %vm5258, %v5344
  %v5350 = vunpack.c.l.b16 %v5231
  %v5351 = vunpack.c.h.b16 %v5231
  %v5352 = vpack.c.b16 %v5350, %v5350
  %v5353 = vpack.c.b16 %v5351, %v5351
  %5356 = vst.msk [vmem:[#allocation5 + $0x14] sm:$0xf] %vm5244, %v5352
  %5357 = vst.msk [vmem:[#allocation5 + $0x34] sm:$0xf] %vm5244, %v5353
  %v5359 = vunpack.c.l.b16 %v5232
  %v5360 = vunpack.c.h.b16 %v5232
  %v5361 = vpack.c.b16 %v5359, %v5359
  %v5362 = vpack.c.b16 %v5360, %v5360
  %5363 = vrot.lane.b32.xlu0 %v5361, 64
  %v5364 = vpop.permute.xlu0 %5363
  %5365 = vrot.lane.b32.xlu0 %v5362, 64
  %v5366 = vpop.permute.xlu0 %5365
  %5369 = vst.msk [vmem:[#allocation5 + $0x14] sm:$0xf] %vm5258, %v5364
  %5370 = vst.msk [vmem:[#allocation5 + $0x34] sm:$0xf] %vm5258, %v5366
  %v5372 = vunpack.c.l.b16 %v5233
  %v5373 = vunpack.c.h.b16 %v5233
  %v5374 = vpack.c.b16 %v5372, %v5372
  %v5375 = vpack.c.b16 %v5373, %v5373
  %5378 = vst.msk [vmem:[#allocation5 + $0x18] sm:$0xf] %vm5244, %v5374
  %5379 = vst.msk [vmem:[#allocation5 + $0x38] sm:$0xf] %vm5244, %v5375
  %v5381 = vunpack.c.l.b16 %v5234
  %v5382 = vunpack.c.h.b16 %v5234
  %v5383 = vpack.c.b16 %v5381, %v5381
  %v5384 = vpack.c.b16 %v5382, %v5382
  %5385 = vrot.lane.b32.xlu0 %v5383, 64
  %v5386 = vpop.permute.xlu0 %5385
  %5387 = vrot.lane.b32.xlu0 %v5384, 64
  %v5388 = vpop.permute.xlu0 %5387
  %5391 = vst.msk [vmem:[#allocation5 + $0x18] sm:$0xf] %vm5258, %v5386
  %5392 = vst.msk [vmem:[#allocation5 + $0x38] sm:$0xf] %vm5258, %v5388
  %v5394 = vunpack.c.l.b16 %v5235
  %v5395 = vunpack.c.h.b16 %v5235
  %v5396 = vpack.c.b16 %v5394, %v5394
  %v5397 = vpack.c.b16 %v5395, %v5395
  %5400 = vst.msk [vmem:[#allocation5 + $0x1c] sm:$0xf] %vm5244, %v5396
  %5401 = vst.msk [vmem:[#allocation5 + $0x3c] sm:$0xf] %vm5244, %v5397
  %v5403 = vunpack.c.l.b16 %v5236
  %v5404 = vunpack.c.h.b16 %v5236
  %v5405 = vpack.c.b16 %v5403, %v5403
  %v5406 = vpack.c.b16 %v5404, %v5404
  %5407 = vrot.lane.b32.xlu0 %v5405, 64
  %v5408 = vpop.permute.xlu0 %5407
  %5409 = vrot.lane.b32.xlu0 %v5406, 64
  %v5410 = vpop.permute.xlu0 %5409
  %5413 = vst.msk [vmem:[#allocation5 + $0x1c] sm:$0xf] %vm5258, %v5408
  %5414 = vst.msk [vmem:[#allocation5 + $0x3c] sm:$0xf] %vm5258, %v5410
  %v5415 = vld [vmem:[#allocation5] sm:$0xff]
  %v5416 = vld [vmem:[#allocation5 + $0x8] sm:$0xff]
  %v5417 = vld [vmem:[#allocation5 + $0x10] sm:$0xff]
  %v5418 = vld [vmem:[#allocation5 + $0x18] sm:$0xff]
  %v5419 = vld [vmem:[#allocation5 + $0x20] sm:$0xff]
  %v5420 = vld [vmem:[#allocation5 + $0x28] sm:$0xff]
  %v5421 = vld [vmem:[#allocation5 + $0x30] sm:$0xff]
  %v5422 = vld [vmem:[#allocation5 + $0x38] sm:$0xff]
  %v5423 = vld [vmem:[%s7] sm:$0xf]
  %v5424 = vld [vmem:[%s7 + $0x4] sm:$0xf]
  %v5425 = vld [vmem:[%s7 + $0x8] sm:$0xf]
  %v5426 = vld [vmem:[%s7 + $0xc] sm:$0xf]
  %v5427 = vld [vmem:[%s7 + $0x10] sm:$0xf]
  %v5428 = vld [vmem:[%s7 + $0x14] sm:$0xf]
  %v5429 = vld [vmem:[%s7 + $0x18] sm:$0xf]
  %v5430 = vld [vmem:[%s7 + $0x1c] sm:$0xf]
  %v5431 = vld [vmem:[%s7 + $0x20] sm:$0xf]
  %v5432 = vld [vmem:[%s7 + $0x24] sm:$0xf]
  %v5433 = vld [vmem:[%s7 + $0x28] sm:$0xf]
  %v5434 = vld [vmem:[%s7 + $0x2c] sm:$0xf]
  %v5435 = vld [vmem:[%s7 + $0x30] sm:$0xf]
  %v5436 = vld [vmem:[%s7 + $0x34] sm:$0xf]
  %v5437 = vld [vmem:[%s7 + $0x38] sm:$0xf]
  %v5438 = vld [vmem:[%s7 + $0x3c] sm:$0xf]
  %v5439 = vld [vmem:[%s7 + $0x40] sm:$0xf]
  %v5440 = vld [vmem:[%s7 + $0x44] sm:$0xf]
  %v5441 = vld [vmem:[%s7 + $0x48] sm:$0xf]
  %v5442 = vld [vmem:[%s7 + $0x4c] sm:$0xf]
  %v5443 = vld [vmem:[%s7 + $0x50] sm:$0xf]
  %v5444 = vld [vmem:[%s7 + $0x54] sm:$0xf]
  %v5445 = vld [vmem:[%s7 + $0x58] sm:$0xf]
  %v5446 = vld [vmem:[%s7 + $0x5c] sm:$0xf]
  %v5447 = vld [vmem:[%s7 + $0x60] sm:$0xf]
  %v5448 = vld [vmem:[%s7 + $0x64] sm:$0xf]
  %v5449 = vld [vmem:[%s7 + $0x68] sm:$0xf]
  %v5450 = vld [vmem:[%s7 + $0x6c] sm:$0xf]
  %v5451 = vld [vmem:[%s7 + $0x70] sm:$0xf]
  %v5452 = vld [vmem:[%s7 + $0x74] sm:$0xf]
  %v5453 = vld [vmem:[%s7 + $0x78] sm:$0xf]
  %v5454 = vld [vmem:[%s7 + $0x7c] sm:$0xf]
  %v5455 = vld [vmem:[%s7 + $0x80] sm:$0xf]
  %v5456 = vld [vmem:[%s7 + $0x84] sm:$0xf]
  %v5457 = vld [vmem:[%s7 + $0x88] sm:$0xf]
  %v5458 = vld [vmem:[%s7 + $0x8c] sm:$0xf]
  %v5459 = vld [vmem:[%s7 + $0x90] sm:$0xf]
  %v5460 = vld [vmem:[%s7 + $0x94] sm:$0xf]
  %v5461 = vld [vmem:[%s7 + $0x98] sm:$0xf]
  %v5462 = vld [vmem:[%s7 + $0x9c] sm:$0xf]
  %v5463 = vld [vmem:[%s7 + $0xa0] sm:$0xf]
  %v5464 = vld [vmem:[%s7 + $0xa4] sm:$0xf]
  %v5465 = vld [vmem:[%s7 + $0xa8] sm:$0xf]
  %v5466 = vld [vmem:[%s7 + $0xac] sm:$0xf]
  %v5467 = vld [vmem:[%s7 + $0xb0] sm:$0xf]
  %v5468 = vld [vmem:[%s7 + $0xb4] sm:$0xf]
  %v5469 = vld [vmem:[%s7 + $0xb8] sm:$0xf]
  %v5470 = vld [vmem:[%s7 + $0xbc] sm:$0xf]
  %v5471 = vld [vmem:[%s7 + $0xc0] sm:$0xf]
  %v5472 = vld [vmem:[%s7 + $0xc4] sm:$0xf]
  %v5473 = vld [vmem:[%s7 + $0xc8] sm:$0xf]
  %v5474 = vld [vmem:[%s7 + $0xcc] sm:$0xf]
  %v5475 = vld [vmem:[%s7 + $0xd0] sm:$0xf]
  %v5476 = vld [vmem:[%s7 + $0xd4] sm:$0xf]
  %v5477 = vld [vmem:[%s7 + $0xd8] sm:$0xf]
  %v5478 = vld [vmem:[%s7 + $0xdc] sm:$0xf]
  %v5479 = vld [vmem:[%s7 + $0xe0] sm:$0xf]
  %v5480 = vld [vmem:[%s7 + $0xe4] sm:$0xf]
  %v5481 = vld [vmem:[%s7 + $0xe8] sm:$0xf]
  %v5482 = vld [vmem:[%s7 + $0xec] sm:$0xf]
  %v5483 = vld [vmem:[%s7 + $0xf0] sm:$0xf]
  %v5484 = vld [vmem:[%s7 + $0xf4] sm:$0xf]
  %v5485 = vld [vmem:[%s7 + $0xf8] sm:$0xf]
  %v5486 = vld [vmem:[%s7 + $0xfc] sm:$0xf]
  %v5487 = vld [vmem:[%s7 + $0x100] sm:$0xf]
  %v5488 = vld [vmem:[%s7 + $0x104] sm:$0xf]
  %v5489 = vld [vmem:[%s7 + $0x108] sm:$0xf]
  %v5490 = vld [vmem:[%s7 + $0x10c] sm:$0xf]
  %v5491 = vld [vmem:[%s7 + $0x110] sm:$0xf]
  %v5492 = vld [vmem:[%s7 + $0x114] sm:$0xf]
  %v5493 = vld [vmem:[%s7 + $0x118] sm:$0xf]
  %v5494 = vld [vmem:[%s7 + $0x11c] sm:$0xf]
  %v5495 = vld [vmem:[%s7 + $0x120] sm:$0xf]
  %v5496 = vld [vmem:[%s7 + $0x124] sm:$0xf]
  %v5497 = vld [vmem:[%s7 + $0x128] sm:$0xf]
  %v5498 = vld [vmem:[%s7 + $0x12c] sm:$0xf]
  %v5499 = vld [vmem:[%s7 + $0x130] sm:$0xf]
  %v5500 = vld [vmem:[%s7 + $0x134] sm:$0xf]
  %v5501 = vld [vmem:[%s7 + $0x138] sm:$0xf]
  %v5502 = vld [vmem:[%s7 + $0x13c] sm:$0xf]
  %v5503 = vld [vmem:[%s7 + $0x140] sm:$0xf]
  %v5504 = vld [vmem:[%s7 + $0x144] sm:$0xf]
  %v5505 = vld [vmem:[%s7 + $0x148] sm:$0xf]
  %v5506 = vld [vmem:[%s7 + $0x14c] sm:$0xf]
  %v5507 = vld [vmem:[%s7 + $0x150] sm:$0xf]
  %v5508 = vld [vmem:[%s7 + $0x154] sm:$0xf]
  %v5509 = vld [vmem:[%s7 + $0x158] sm:$0xf]
  %v5510 = vld [vmem:[%s7 + $0x15c] sm:$0xf]
  %v5511 = vld [vmem:[%s7 + $0x160] sm:$0xf]
  %v5512 = vld [vmem:[%s7 + $0x164] sm:$0xf]
  %v5513 = vld [vmem:[%s7 + $0x168] sm:$0xf]
  %v5514 = vld [vmem:[%s7 + $0x16c] sm:$0xf]
  %v5515 = vld [vmem:[%s7 + $0x170] sm:$0xf]
  %v5516 = vld [vmem:[%s7 + $0x174] sm:$0xf]
  %v5517 = vld [vmem:[%s7 + $0x178] sm:$0xf]
  %v5518 = vld [vmem:[%s7 + $0x17c] sm:$0xf]
  %v5519 = vld [vmem:[%s7 + $0x180] sm:$0xf]
  %v5520 = vld [vmem:[%s7 + $0x184] sm:$0xf]
  %v5521 = vld [vmem:[%s7 + $0x188] sm:$0xf]
  %v5522 = vld [vmem:[%s7 + $0x18c] sm:$0xf]
  %v5523 = vld [vmem:[%s7 + $0x190] sm:$0xf]
  %v5524 = vld [vmem:[%s7 + $0x194] sm:$0xf]
  %v5525 = vld [vmem:[%s7 + $0x198] sm:$0xf]
  %v5526 = vld [vmem:[%s7 + $0x19c] sm:$0xf]
  %v5527 = vld [vmem:[%s7 + $0x1a0] sm:$0xf]
  %v5528 = vld [vmem:[%s7 + $0x1a4] sm:$0xf]
  %v5529 = vld [vmem:[%s7 + $0x1a8] sm:$0xf]
  %v5530 = vld [vmem:[%s7 + $0x1ac] sm:$0xf]
  %v5531 = vld [vmem:[%s7 + $0x1b0] sm:$0xf]
  %v5532 = vld [vmem:[%s7 + $0x1b4] sm:$0xf]
  %v5533 = vld [vmem:[%s7 + $0x1b8] sm:$0xf]
  %v5534 = vld [vmem:[%s7 + $0x1bc] sm:$0xf]
  %v5535 = vld [vmem:[%s7 + $0x1c0] sm:$0xf]
  %v5536 = vld [vmem:[%s7 + $0x1c4] sm:$0xf]
  %v5537 = vld [vmem:[%s7 + $0x1c8] sm:$0xf]
  %v5538 = vld [vmem:[%s7 + $0x1cc] sm:$0xf]
  %v5539 = vld [vmem:[%s7 + $0x1d0] sm:$0xf]
  %v5540 = vld [vmem:[%s7 + $0x1d4] sm:$0xf]
  %v5541 = vld [vmem:[%s7 + $0x1d8] sm:$0xf]
  %v5542 = vld [vmem:[%s7 + $0x1dc] sm:$0xf]
  %v5543 = vld [vmem:[%s7 + $0x1e0] sm:$0xf]
  %v5544 = vld [vmem:[%s7 + $0x1e4] sm:$0xf]
  %v5545 = vld [vmem:[%s7 + $0x1e8] sm:$0xf]
  %v5546 = vld [vmem:[%s7 + $0x1ec] sm:$0xf]
  %v5547 = vld [vmem:[%s7 + $0x1f0] sm:$0xf]
  %v5548 = vld [vmem:[%s7 + $0x1f4] sm:$0xf]
  %v5549 = vld [vmem:[%s7 + $0x1f8] sm:$0xf]
  %v5550 = vld [vmem:[%s7 + $0x1fc] sm:$0xf]
  %v5551 = vld [vmem:[%s8] sm:$0x1]
  %v5553 = vlaneseq
  %v5554 = vshrl.u32 %v5553, 7
  %v5555 = vsub.s32 0, %v5554
  %v5556 = vrot.slane %v5551, %v5555
  %v5566 = vunpack.c.l.b16 %v5415
  %v5567 = vunpack.c.h.b16 %v5415
  %v5568 = vunpack.c.l.b16 %v5416
  %v5569 = vunpack.c.h.b16 %v5416
  %v5570 = vunpack.c.l.b16 %v5417
  %v5571 = vunpack.c.h.b16 %v5417
  %v5572 = vunpack.c.l.b16 %v5418
  %v5573 = vunpack.c.h.b16 %v5418
  %v5574 = vunpack.c.l.b16 %v5419
  %v5575 = vunpack.c.h.b16 %v5419
  %v5576 = vunpack.c.l.b16 %v5420
  %v5577 = vunpack.c.h.b16 %v5420
  %v5578 = vunpack.c.l.b16 %v5421
  %v5579 = vunpack.c.h.b16 %v5421
  %v5580 = vunpack.c.l.b16 %v5422
  %v5581 = vunpack.c.h.b16 %v5422
  %v5582 = vpack.c.b16 %v5574, %v5566
  %v5583 = vpack.c.b16 %v5575, %v5567
  %v5584 = vpack.c.b16 %v5576, %v5568
  %v5585 = vpack.c.b16 %v5577, %v5569
  %v5586 = vpack.c.b16 %v5578, %v5570
  %v5587 = vpack.c.b16 %v5579, %v5571
  %v5588 = vpack.c.b16 %v5580, %v5572
  %v5589 = vpack.c.b16 %v5581, %v5573
  %v5726 = vunpack.c.l.b16 %v5423
  %v5727 = vunpack.c.l.b16 %v5424
  %v5728 = vunpack.c.l.b16 %v5425
  %v5729 = vunpack.c.l.b16 %v5426
  %v5730 = vunpack.c.l.b16 %v5427
  %v5731 = vunpack.c.l.b16 %v5428
  %v5732 = vunpack.c.l.b16 %v5429
  %v5733 = vunpack.c.l.b16 %v5430
  %v5734 = vunpack.c.l.b16 %v5431
  %v5735 = vunpack.c.l.b16 %v5432
  %v5736 = vunpack.c.l.b16 %v5433
  %v5737 = vunpack.c.l.b16 %v5434
  %v5738 = vunpack.c.l.b16 %v5435
  %v5739 = vunpack.c.l.b16 %v5436
  %v5740 = vunpack.c.l.b16 %v5437
  %v5741 = vunpack.c.l.b16 %v5438
  %v5742 = vunpack.c.l.b16 %v5439
  %v5743 = vunpack.c.l.b16 %v5440
  %v5744 = vunpack.c.l.b16 %v5441
  %v5745 = vunpack.c.l.b16 %v5442
  %v5746 = vunpack.c.l.b16 %v5443
  %v5747 = vunpack.c.l.b16 %v5444
  %v5748 = vunpack.c.l.b16 %v5445
  %v5749 = vunpack.c.l.b16 %v5446
  %v5750 = vunpack.c.l.b16 %v5447
  %v5751 = vunpack.c.l.b16 %v5448
  %v5752 = vunpack.c.l.b16 %v5449
  %v5753 = vunpack.c.l.b16 %v5450
  %v5754 = vunpack.c.l.b16 %v5451
  %v5755 = vunpack.c.l.b16 %v5452
  %v5756 = vunpack.c.l.b16 %v5453
  %v5757 = vunpack.c.l.b16 %v5454
  %v5758 = vunpack.c.l.b16 %v5455
  %v5759 = vunpack.c.l.b16 %v5456
  %v5760 = vunpack.c.l.b16 %v5457
  %v5761 = vunpack.c.l.b16 %v5458
  %v5762 = vunpack.c.l.b16 %v5459
  %v5763 = vunpack.c.l.b16 %v5460
  %v5764 = vunpack.c.l.b16 %v5461
  %v5765 = vunpack.c.l.b16 %v5462
  %v5766 = vunpack.c.l.b16 %v5463
  %v5767 = vunpack.c.l.b16 %v5464
  %v5768 = vunpack.c.l.b16 %v5465
  %v5769 = vunpack.c.l.b16 %v5466
  %v5770 = vunpack.c.l.b16 %v5467
  %v5771 = vunpack.c.l.b16 %v5468
  %v5772 = vunpack.c.l.b16 %v5469
  %v5773 = vunpack.c.l.b16 %v5470
  %v5774 = vunpack.c.l.b16 %v5471
  %v5775 = vunpack.c.l.b16 %v5472
  %v5776 = vunpack.c.l.b16 %v5473
  %v5777 = vunpack.c.l.b16 %v5474
  %v5778 = vunpack.c.l.b16 %v5475
  %v5779 = vunpack.c.l.b16 %v5476
  %v5780 = vunpack.c.l.b16 %v5477
  %v5781 = vunpack.c.l.b16 %v5478
  %v5782 = vunpack.c.l.b16 %v5479
  %v5783 = vunpack.c.l.b16 %v5480
  %v5784 = vunpack.c.l.b16 %v5481
  %v5785 = vunpack.c.l.b16 %v5482
  %v5786 = vunpack.c.l.b16 %v5483
  %v5787 = vunpack.c.l.b16 %v5484
  %v5788 = vunpack.c.l.b16 %v5485
  %v5789 = vunpack.c.l.b16 %v5486
  %v5790 = vunpack.c.l.b16 %v5487
  %v5791 = vunpack.c.l.b16 %v5488
  %v5792 = vunpack.c.l.b16 %v5489
  %v5793 = vunpack.c.l.b16 %v5490
  %v5794 = vunpack.c.l.b16 %v5491
  %v5795 = vunpack.c.l.b16 %v5492
  %v5796 = vunpack.c.l.b16 %v5493
  %v5797 = vunpack.c.l.b16 %v5494
  %v5798 = vunpack.c.l.b16 %v5495
  %v5799 = vunpack.c.l.b16 %v5496
  %v5800 = vunpack.c.l.b16 %v5497
  %v5801 = vunpack.c.l.b16 %v5498
  %v5802 = vunpack.c.l.b16 %v5499
  %v5803 = vunpack.c.l.b16 %v5500
  %v5804 = vunpack.c.l.b16 %v5501
  %v5805 = vunpack.c.l.b16 %v5502
  %v5806 = vunpack.c.l.b16 %v5503
  %v5807 = vunpack.c.l.b16 %v5504
  %v5808 = vunpack.c.l.b16 %v5505
  %v5809 = vunpack.c.l.b16 %v5506
  %v5810 = vunpack.c.l.b16 %v5507
  %v5811 = vunpack.c.l.b16 %v5508
  %v5812 = vunpack.c.l.b16 %v5509
  %v5813 = vunpack.c.l.b16 %v5510
  %v5814 = vunpack.c.l.b16 %v5511
  %v5815 = vunpack.c.l.b16 %v5512
  %v5816 = vunpack.c.l.b16 %v5513
  %v5817 = vunpack.c.l.b16 %v5514
  %v5818 = vunpack.c.l.b16 %v5515
  %v5819 = vunpack.c.l.b16 %v5516
  %v5820 = vunpack.c.l.b16 %v5517
  %v5821 = vunpack.c.l.b16 %v5518
  %v5822 = vunpack.c.l.b16 %v5519
  %v5823 = vunpack.c.l.b16 %v5520
  %v5824 = vunpack.c.l.b16 %v5521
  %v5825 = vunpack.c.l.b16 %v5522
  %v5826 = vunpack.c.l.b16 %v5523
  %v5827 = vunpack.c.l.b16 %v5524
  %v5828 = vunpack.c.l.b16 %v5525
  %v5829 = vunpack.c.l.b16 %v5526
  %v5830 = vunpack.c.l.b16 %v5527
  %v5831 = vunpack.c.l.b16 %v5528
  %v5832 = vunpack.c.l.b16 %v5529
  %v5833 = vunpack.c.l.b16 %v5530
  %v5834 = vunpack.c.l.b16 %v5531
  %v5835 = vunpack.c.l.b16 %v5532
  %v5836 = vunpack.c.l.b16 %v5533
  %v5837 = vunpack.c.l.b16 %v5534
  %v5838 = vunpack.c.l.b16 %v5535
  %v5839 = vunpack.c.l.b16 %v5536
  %v5840 = vunpack.c.l.b16 %v5537
  %v5841 = vunpack.c.l.b16 %v5538
  %v5842 = vunpack.c.l.b16 %v5539
  %v5843 = vunpack.c.l.b16 %v5540
  %v5844 = vunpack.c.l.b16 %v5541
  %v5845 = vunpack.c.l.b16 %v5542
  %v5846 = vunpack.c.l.b16 %v5543
  %v5847 = vunpack.c.l.b16 %v5544
  %v5848 = vunpack.c.l.b16 %v5545
  %v5849 = vunpack.c.l.b16 %v5546
  %v5850 = vunpack.c.l.b16 %v5547
  %v5851 = vunpack.c.l.b16 %v5548
  %v5852 = vunpack.c.l.b16 %v5549
  %v5853 = vunpack.c.l.b16 %v5550
  %v5854 = vpack.c.b16 %v5727, %v5726
  %v5855 = vpack.c.b16 %v5729, %v5728
  %v5856 = vpack.c.b16 %v5731, %v5730
  %v5857 = vpack.c.b16 %v5733, %v5732
  %v5858 = vpack.c.b16 %v5735, %v5734
  %v5859 = vpack.c.b16 %v5737, %v5736
  %v5860 = vpack.c.b16 %v5739, %v5738
  %v5861 = vpack.c.b16 %v5741, %v5740
  %v5862 = vpack.c.b16 %v5743, %v5742
  %v5863 = vpack.c.b16 %v5745, %v5744
  %v5864 = vpack.c.b16 %v5747, %v5746
  %v5865 = vpack.c.b16 %v5749, %v5748
  %v5866 = vpack.c.b16 %v5751, %v5750
  %v5867 = vpack.c.b16 %v5753, %v5752
  %v5868 = vpack.c.b16 %v5755, %v5754
  %v5869 = vpack.c.b16 %v5757, %v5756
  %v5870 = vpack.c.b16 %v5759, %v5758
  %v5871 = vpack.c.b16 %v5761, %v5760
  %v5872 = vpack.c.b16 %v5763, %v5762
  %v5873 = vpack.c.b16 %v5765, %v5764
  %v5874 = vpack.c.b16 %v5767, %v5766
  %v5875 = vpack.c.b16 %v5769, %v5768
  %v5876 = vpack.c.b16 %v5771, %v5770
  %v5877 = vpack.c.b16 %v5773, %v5772
  %v5878 = vpack.c.b16 %v5775, %v5774
  %v5879 = vpack.c.b16 %v5777, %v5776
  %v5880 = vpack.c.b16 %v5779, %v5778
  %v5881 = vpack.c.b16 %v5781, %v5780
  %v5882 = vpack.c.b16 %v5783, %v5782
  %v5883 = vpack.c.b16 %v5785, %v5784
  %v5884 = vpack.c.b16 %v5787, %v5786
  %v5885 = vpack.c.b16 %v5789, %v5788
  %v5886 = vpack.c.b16 %v5791, %v5790
  %v5887 = vpack.c.b16 %v5793, %v5792
  %v5888 = vpack.c.b16 %v5795, %v5794
  %v5889 = vpack.c.b16 %v5797, %v5796
  %v5890 = vpack.c.b16 %v5799, %v5798
  %v5891 = vpack.c.b16 %v5801, %v5800
  %v5892 = vpack.c.b16 %v5803, %v5802
  %v5893 = vpack.c.b16 %v5805, %v5804
  %v5894 = vpack.c.b16 %v5807, %v5806
  %v5895 = vpack.c.b16 %v5809, %v5808
  %v5896 = vpack.c.b16 %v5811, %v5810
  %v5897 = vpack.c.b16 %v5813, %v5812
  %v5898 = vpack.c.b16 %v5815, %v5814
  %v5899 = vpack.c.b16 %v5817, %v5816
  %v5900 = vpack.c.b16 %v5819, %v5818
  %v5901 = vpack.c.b16 %v5821, %v5820
  %v5902 = vpack.c.b16 %v5823, %v5822
  %v5903 = vpack.c.b16 %v5825, %v5824
  %v5904 = vpack.c.b16 %v5827, %v5826
  %v5905 = vpack.c.b16 %v5829, %v5828
  %v5906 = vpack.c.b16 %v5831, %v5830
  %v5907 = vpack.c.b16 %v5833, %v5832
  %v5908 = vpack.c.b16 %v5835, %v5834
  %v5909 = vpack.c.b16 %v5837, %v5836
  %v5910 = vpack.c.b16 %v5839, %v5838
  %v5911 = vpack.c.b16 %v5841, %v5840
  %v5912 = vpack.c.b16 %v5843, %v5842
  %v5913 = vpack.c.b16 %v5845, %v5844
  %v5914 = vpack.c.b16 %v5847, %v5846
  %v5915 = vpack.c.b16 %v5849, %v5848
  %v5916 = vpack.c.b16 %v5851, %v5850
  %v5917 = vpack.c.b16 %v5853, %v5852
  %5982 = vmatprep.subr.bf16.mxu0 0
  %5983 = vmatpush1.bf16.msra.mxu0 %v5861
  %5984 = vmatprep.subr.bf16.mxu0 0
  %5985 = vmatpush1.bf16.msra.mxu0 %v5860
  %5986 = vmatprep.subr.bf16.mxu0 0
  %5987 = vmatpush1.bf16.msra.mxu0 %v5859
  %5988 = vmatprep.subr.bf16.mxu0 0
  %5989 = vmatpush1.bf16.msra.mxu0 %v5858
  %5990 = vmatprep.subr.bf16.mxu0 0
  %5991 = vmatpush1.bf16.msra.mxu0 %v5857
  %5992 = vmatprep.subr.bf16.mxu0 0
  %5993 = vmatpush1.bf16.msra.mxu0 %v5856
  %5994 = vmatprep.subr.bf16.mxu0 0
  %5995 = vmatpush1.bf16.msra.mxu0 %v5855
  %5996 = vmatprep.subr.bf16.mxu0 0
  %5997 = vmatpush1.bf16.msra.mxu0 %v5854
  %5998 = vmatprep.subr.bf16.mxu0 0
  %5999 = vmatpush2.bf16.msra.mxu0 %v5869
  %6000 = vmatprep.subr.bf16.mxu0 0
  %6001 = vmatpush2.bf16.msra.mxu0 %v5868
  %6002 = vmatprep.subr.bf16.mxu0 0
  %6003 = vmatpush2.bf16.msra.mxu0 %v5867
  %6004 = vmatprep.subr.bf16.mxu0 0
  %6005 = vmatpush2.bf16.msra.mxu0 %v5866
  %6006 = vmatprep.subr.bf16.mxu0 0
  %6007 = vmatpush2.bf16.msra.mxu0 %v5865
  %6008 = vmatprep.subr.bf16.mxu0 0
  %6009 = vmatpush2.bf16.msra.mxu0 %v5864
  %6010 = vmatprep.subr.bf16.mxu0 0
  %6011 = vmatpush2.bf16.msra.mxu0 %v5863
  %6012 = vmatprep.subr.bf16.mxu0 0
  %6013 = vmatpush2.bf16.msra.mxu0 %v5862
  %6014 = vmatprep.mubr.bf16.mxu0 %v5583
  %6015 = vmatmul.mubr.bf16.gmra.mxu0 %v5582
  %v6016 = vpop.f32.mrf.mxu0
  %v6017 = vadd.f32 %v5556, %v6016
  %v6018 = vpop.f32.mrf.mxu0
  %v6019 = vpop.f32.mrf.mxu0
  %v6020 = vpop.f32.mrf.mxu0
  %6021 = vdwg.mxu0
  %6022 = vmatprep.subr.bf16.mxu0 0
  %6023 = vmatpush1.bf16.msra.mxu0 %v5877
  %6024 = vmatprep.subr.bf16.mxu0 0
  %6025 = vmatpush1.bf16.msra.mxu0 %v5876
  %6026 = vmatprep.subr.bf16.mxu0 0
  %6027 = vmatpush1.bf16.msra.mxu0 %v5875
  %6028 = vmatprep.subr.bf16.mxu0 0
  %6029 = vmatpush1.bf16.msra.mxu0 %v5874
  %6030 = vmatprep.subr.bf16.mxu0 0
  %6031 = vmatpush1.bf16.msra.mxu0 %v5873
  %6032 = vmatprep.subr.bf16.mxu0 0
  %6033 = vmatpush1.bf16.msra.mxu0 %v5872
  %6034 = vmatprep.subr.bf16.mxu0 0
  %6035 = vmatpush1.bf16.msra.mxu0 %v5871
  %6036 = vmatprep.subr.bf16.mxu0 0
  %6037 = vmatpush1.bf16.msra.mxu0 %v5870
  %6038 = vmatprep.subr.bf16.mxu0 0
  %6039 = vmatpush2.bf16.msra.mxu0 %v5885
  %6040 = vmatprep.subr.bf16.mxu0 0
  %6041 = vmatpush2.bf16.msra.mxu0 %v5884
  %6042 = vmatprep.subr.bf16.mxu0 0
  %6043 = vmatpush2.bf16.msra.mxu0 %v5883
  %6044 = vmatprep.subr.bf16.mxu0 0
  %6045 = vmatpush2.bf16.msra.mxu0 %v5882
  %6046 = vmatprep.subr.bf16.mxu0 0
  %6047 = vmatpush2.bf16.msra.mxu0 %v5881
  %6048 = vmatprep.subr.bf16.mxu0 0
  %6049 = vmatpush2.bf16.msra.mxu0 %v5880
  %6050 = vmatprep.subr.bf16.mxu0 0
  %6051 = vmatpush2.bf16.msra.mxu0 %v5879
  %6052 = vmatprep.subr.bf16.mxu0 0
  %6053 = vmatpush2.bf16.msra.mxu0 %v5878
  %6054 = vmatprep.mubr.bf16.mxu0 %v5585
  %6055 = vmatmul.mubr.bf16.gmra.mxu0 %v5584
  %v6056 = vpop.f32.mrf.mxu0
  %v6057 = vadd.f32 %v6017, %v6056
  %v6058 = vpop.f32.mrf.mxu0
  %v6059 = vpop.f32.mrf.mxu0
  %v6060 = vpop.f32.mrf.mxu0
  %6061 = vdwg.mxu0
  %6062 = vmatprep.subr.bf16.mxu0 0
  %6063 = vmatpush1.bf16.msra.mxu0 %v5893
  %6064 = vmatprep.subr.bf16.mxu0 0
  %6065 = vmatpush1.bf16.msra.mxu0 %v5892
  %6066 = vmatprep.subr.bf16.mxu0 0
  %6067 = vmatpush1.bf16.msra.mxu0 %v5891
  %6068 = vmatprep.subr.bf16.mxu0 0
  %6069 = vmatpush1.bf16.msra.mxu0 %v5890
  %6070 = vmatprep.subr.bf16.mxu0 0
  %6071 = vmatpush1.bf16.msra.mxu0 %v5889
  %6072 = vmatprep.subr.bf16.mxu0 0
  %6073 = vmatpush1.bf16.msra.mxu0 %v5888
  %6074 = vmatprep.subr.bf16.mxu0 0
  %6075 = vmatpush1.bf16.msra.mxu0 %v5887
  %6076 = vmatprep.subr.bf16.mxu0 0
  %6077 = vmatpush1.bf16.msra.mxu0 %v5886
  %6078 = vmatprep.subr.bf16.mxu0 0
  %6079 = vmatpush2.bf16.msra.mxu0 %v5901
  %6080 = vmatprep.subr.bf16.mxu0 0
  %6081 = vmatpush2.bf16.msra.mxu0 %v5900
  %6082 = vmatprep.subr.bf16.mxu0 0
  %6083 = vmatpush2.bf16.msra.mxu0 %v5899
  %6084 = vmatprep.subr.bf16.mxu0 0
  %6085 = vmatpush2.bf16.msra.mxu0 %v5898
  %6086 = vmatprep.subr.bf16.mxu0 0
  %6087 = vmatpush2.bf16.msra.mxu0 %v5897
  %6088 = vmatprep.subr.bf16.mxu0 0
  %6089 = vmatpush2.bf16.msra.mxu0 %v5896
  %6090 = vmatprep.subr.bf16.mxu0 0
  %6091 = vmatpush2.bf16.msra.mxu0 %v5895
  %6092 = vmatprep.subr.bf16.mxu0 0
  %6093 = vmatpush2.bf16.msra.mxu0 %v5894
  %6094 = vmatprep.mubr.bf16.mxu0 %v5587
  %6095 = vmatmul.mubr.bf16.gmra.mxu0 %v5586
  %v6096 = vpop.f32.mrf.mxu0
  %v6097 = vadd.f32 %v6057, %v6096
  %v6098 = vpop.f32.mrf.mxu0
  %v6099 = vpop.f32.mrf.mxu0
  %v6100 = vpop.f32.mrf.mxu0
  %6101 = vdwg.mxu0
  %6102 = vmatprep.subr.bf16.mxu0 0
  %6103 = vmatpush1.bf16.msra.mxu0 %v5909
  %6104 = vmatprep.subr.bf16.mxu0 0
  %6105 = vmatpush1.bf16.msra.mxu0 %v5908
  %6106 = vmatprep.subr.bf16.mxu0 0
  %6107 = vmatpush1.bf16.msra.mxu0 %v5907
  %6108 = vmatprep.subr.bf16.mxu0 0
  %6109 = vmatpush1.bf16.msra.mxu0 %v5906
  %6110 = vmatprep.subr.bf16.mxu0 0
  %6111 = vmatpush1.bf16.msra.mxu0 %v5905
  %6112 = vmatprep.subr.bf16.mxu0 0
  %6113 = vmatpush1.bf16.msra.mxu0 %v5904
  %6114 = vmatprep.subr.bf16.mxu0 0
  %6115 = vmatpush1.bf16.msra.mxu0 %v5903
  %6116 = vmatprep.subr.bf16.mxu0 0
  %6117 = vmatpush1.bf16.msra.mxu0 %v5902
  %6118 = vmatprep.subr.bf16.mxu0 0
  %6119 = vmatpush2.bf16.msra.mxu0 %v5917
  %6120 = vmatprep.subr.bf16.mxu0 0
  %6121 = vmatpush2.bf16.msra.mxu0 %v5916
  %6122 = vmatprep.subr.bf16.mxu0 0
  %6123 = vmatpush2.bf16.msra.mxu0 %v5915
  %6124 = vmatprep.subr.bf16.mxu0 0
  %6125 = vmatpush2.bf16.msra.mxu0 %v5914
  %6126 = vmatprep.subr.bf16.mxu0 0
  %6127 = vmatpush2.bf16.msra.mxu0 %v5913
  %6128 = vmatprep.subr.bf16.mxu0 0
  %6129 = vmatpush2.bf16.msra.mxu0 %v5912
  %6130 = vmatprep.subr.bf16.mxu0 0
  %6131 = vmatpush2.bf16.msra.mxu0 %v5911
  %6132 = vmatprep.subr.bf16.mxu0 0
  %6133 = vmatpush2.bf16.msra.mxu0 %v5910
  %6134 = vmatprep.mubr.bf16.mxu0 %v5589
  %6135 = vmatmul.mubr.bf16.gmra.mxu0 %v5588
  %v6136 = vpop.f32.mrf.mxu0
  %v6137 = vadd.f32 %v6097, %v6136
  %v6138 = vpop.f32.mrf.mxu0
  %v6139 = vpop.f32.mrf.mxu0
  %v6140 = vpop.f32.mrf.mxu0
  %6141 = vdwg.mxu0
  %v6142 = vmax.f32 %v6137, 0.0
  %vm6143 = vcmask 125952
  %6144 = vst.msk [vmem:[%s12] sm:$0xf] %vm6143, %v6142
  %v6145 = vpack.c.bf16 %v6142, %v6142
  %v6146 = vld [vmem:[%s9] sm:$0xf]
  %v6147 = vld [vmem:[%s9 + $0x4] sm:$0xf]
  %v6148 = vld [vmem:[%s9 + $0x8] sm:$0xf]
  %v6149 = vld [vmem:[%s9 + $0xc] sm:$0xf]
  %v6151 = vshrl.u32 %v6145, 16
  %v6155 = vunpack.c.l.b16 %v6148
  %v6156 = vunpack.c.l.b16 %v6149
  %v6157 = vpack.c.b16 %v6156, %v6155
  %vm6159 = vcmask 130048
  %v6161 = vsel %vm6159, %v6151, 0
  %6163 = vmatprep.subr.bf16.mxu0 0
  %6164 = vmatpush1.bf16.msra.mxu0 0
  %6165 = vmatprep.subr.bf16.mxu0 0
  %6166 = vmatpush1.bf16.msra.mxu0 0
  %6167 = vmatprep.subr.bf16.mxu0 0
  %6168 = vmatpush1.bf16.msra.mxu0 0
  %6169 = vmatprep.subr.bf16.mxu0 0
  %6170 = vmatpush1.bf16.msra.mxu0 0
  %6171 = vmatprep.subr.bf16.mxu0 0
  %6172 = vmatpush1.bf16.msra.mxu0 0
  %6173 = vmatprep.subr.bf16.mxu0 0
  %6174 = vmatpush1.bf16.msra.mxu0 0
  %6175 = vmatprep.subr.bf16.mxu0 0
  %6176 = vmatpush1.bf16.msra.mxu0 0
  %6177 = vmatprep.subr.bf16.mxu0 0
  %6178 = vmatpush1.bf16.msra.mxu0 %v6157
  %6179 = vmatprep.subr.bf16.mxu0 0
  %6180 = vmatpush2.bf16.msra.mxu0 0
  %6181 = vmatprep.subr.bf16.mxu0 0
  %6182 = vmatpush2.bf16.msra.mxu0 0
  %6183 = vmatprep.subr.bf16.mxu0 0
  %6184 = vmatpush2.bf16.msra.mxu0 0
  %6185 = vmatprep.subr.bf16.mxu0 0
  %6186 = vmatpush2.bf16.msra.mxu0 0
  %6187 = vmatprep.subr.bf16.mxu0 0
  %6188 = vmatpush2.bf16.msra.mxu0 0
  %6189 = vmatprep.subr.bf16.mxu0 0
  %6190 = vmatpush2.bf16.msra.mxu0 0
  %6191 = vmatprep.subr.bf16.mxu0 0
  %6192 = vmatpush2.bf16.msra.mxu0 0
  %6193 = vmatprep.subr.bf16.mxu0 0
  %6194 = vmatpush2.bf16.msra.mxu0 0
  %6195 = vmatprep.mubr.bf16.mxu0 0
  %6196 = vmatmul.mubr.bf16.gmra.mxu0 %v6161
  %v6197 = vpop.f32.mrf.mxu0
  %v6198 = vadd.f32 0.0, %v6197
  %v6199 = vpop.f32.mrf.mxu0
  %v6200 = vpop.f32.mrf.mxu0
  %v6201 = vpop.f32.mrf.mxu0
  %6202 = vdwg.mxu0
  %v6203 = vld [vmem:[%s9 + $0x10] sm:$0xf]
  %v6204 = vld [vmem:[%s9 + $0x14] sm:$0xf]
  %v6205 = vld [vmem:[%s9 + $0x18] sm:$0xf]
  %v6206 = vld [vmem:[%s9 + $0x1c] sm:$0xf]
  %v6207 = vrot.slane %v6151, 1
  %v6210 = vunpack.c.l.b16 %v6205
  %v6211 = vunpack.c.l.b16 %v6206
  %v6212 = vpack.c.b16 %v6211, %v6210
  %v6215 = vsel %vm6159, %v6207, 0
  %6217 = vmatprep.subr.bf16.mxu0 0
  %6218 = vmatpush1.bf16.msra.mxu0 0
  %6219 = vmatprep.subr.bf16.mxu0 0
  %6220 = vmatpush1.bf16.msra.mxu0 0
  %6221 = vmatprep.subr.bf16.mxu0 0
  %6222 = vmatpush1.bf16.msra.mxu0 0
  %6223 = vmatprep.subr.bf16.mxu0 0
  %6224 = vmatpush1.bf16.msra.mxu0 0
  %6225 = vmatprep.subr.bf16.mxu0 0
  %6226 = vmatpush1.bf16.msra.mxu0 0
  %6227 = vmatprep.subr.bf16.mxu0 0
  %6228 = vmatpush1.bf16.msra.mxu0 0
  %6229 = vmatprep.subr.bf16.mxu0 0
  %6230 = vmatpush1.bf16.msra.mxu0 0
  %6231 = vmatprep.subr.bf16.mxu0 0
  %6232 = vmatpush1.bf16.msra.mxu0 %v6212
  %6233 = vmatprep.subr.bf16.mxu0 0
  %6234 = vmatpush2.bf16.msra.mxu0 0
  %6235 = vmatprep.subr.bf16.mxu0 0
  %6236 = vmatpush2.bf16.msra.mxu0 0
  %6237 = vmatprep.subr.bf16.mxu0 0
  %6238 = vmatpush2.bf16.msra.mxu0 0
  %6239 = vmatprep.subr.bf16.mxu0 0
  %6240 = vmatpush2.bf16.msra.mxu0 0
  %6241 = vmatprep.subr.bf16.mxu0 0
  %6242 = vmatpush2.bf16.msra.mxu0 0
  %6243 = vmatprep.subr.bf16.mxu0 0
  %6244 = vmatpush2.bf16.msra.mxu0 0
  %6245 = vmatprep.subr.bf16.mxu0 0
  %6246 = vmatpush2.bf16.msra.mxu0 0
  %6247 = vmatprep.subr.bf16.mxu0 0
  %6248 = vmatpush2.bf16.msra.mxu0 0
  %6249 = vmatprep.mubr.bf16.mxu0 0
  %6250 = vmatmul.mubr.bf16.gmra.mxu0 %v6215
  %v6251 = vpop.f32.mrf.mxu0
  %v6252 = vadd.f32 0.0, %v6251
  %v6253 = vpop.f32.mrf.mxu0
  %v6254 = vpop.f32.mrf.mxu0
  %v6255 = vpop.f32.mrf.mxu0
  %6256 = vdwg.mxu0
  %v6259 = vunpack.c.l.b16 %v6146
  %v6260 = vunpack.c.l.b16 %v6147
  %v6261 = vpack.c.b16 %v6260, %v6259
  %v6263 = vsel %vm6159, %v6145, 0
  %6265 = vmatprep.subr.bf16.mxu0 0
  %6266 = vmatpush1.bf16.msra.mxu0 0
  %6267 = vmatprep.subr.bf16.mxu0 0
  %6268 = vmatpush1.bf16.msra.mxu0 0
  %6269 = vmatprep.subr.bf16.mxu0 0
  %6270 = vmatpush1.bf16.msra.mxu0 0
  %6271 = vmatprep.subr.bf16.mxu0 0
  %6272 = vmatpush1.bf16.msra.mxu0 0
  %6273 = vmatprep.subr.bf16.mxu0 0
  %6274 = vmatpush1.bf16.msra.mxu0 0
  %6275 = vmatprep.subr.bf16.mxu0 0
  %6276 = vmatpush1.bf16.msra.mxu0 0
  %6277 = vmatprep.subr.bf16.mxu0 0
  %6278 = vmatpush1.bf16.msra.mxu0 0
  %6279 = vmatprep.subr.bf16.mxu0 0
  %6280 = vmatpush1.bf16.msra.mxu0 %v6261
  %6281 = vmatprep.subr.bf16.mxu0 0
  %6282 = vmatpush2.bf16.msra.mxu0 0
  %6283 = vmatprep.subr.bf16.mxu0 0
  %6284 = vmatpush2.bf16.msra.mxu0 0
  %6285 = vmatprep.subr.bf16.mxu0 0
  %6286 = vmatpush2.bf16.msra.mxu0 0
  %6287 = vmatprep.subr.bf16.mxu0 0
  %6288 = vmatpush2.bf16.msra.mxu0 0
  %6289 = vmatprep.subr.bf16.mxu0 0
  %6290 = vmatpush2.bf16.msra.mxu0 0
  %6291 = vmatprep.subr.bf16.mxu0 0
  %6292 = vmatpush2.bf16.msra.mxu0 0
  %6293 = vmatprep.subr.bf16.mxu0 0
  %6294 = vmatpush2.bf16.msra.mxu0 0
  %6295 = vmatprep.subr.bf16.mxu0 0
  %6296 = vmatpush2.bf16.msra.mxu0 0
  %6297 = vmatprep.mubr.bf16.mxu0 0
  %6298 = vmatmul.mubr.bf16.gmra.mxu0 %v6263
  %v6299 = vpop.f32.mrf.mxu0
  %v6300 = vadd.f32 %v6198, %v6299
  %v6301 = vpop.f32.mrf.mxu0
  %v6302 = vpop.f32.mrf.mxu0
  %v6303 = vpop.f32.mrf.mxu0
  %6304 = vdwg.mxu0
  %v6306 = vrot.slane %v6145, 1
  %v6309 = vunpack.c.l.b16 %v6203
  %v6310 = vunpack.c.l.b16 %v6204
  %v6311 = vpack.c.b16 %v6310, %v6309
  %v6314 = vsel %vm6159, %v6306, 0
  %6316 = vmatprep.subr.bf16.mxu0 0
  %6317 = vmatpush1.bf16.msra.mxu0 0
  %6318 = vmatprep.subr.bf16.mxu0 0
  %6319 = vmatpush1.bf16.msra.mxu0 0
  %6320 = vmatprep.subr.bf16.mxu0 0
  %6321 = vmatpush1.bf16.msra.mxu0 0
  %6322 = vmatprep.subr.bf16.mxu0 0
  %6323 = vmatpush1.bf16.msra.mxu0 0
  %6324 = vmatprep.subr.bf16.mxu0 0
  %6325 = vmatpush1.bf16.msra.mxu0 0
  %6326 = vmatprep.subr.bf16.mxu0 0
  %6327 = vmatpush1.bf16.msra.mxu0 0
  %6328 = vmatprep.subr.bf16.mxu0 0
  %6329 = vmatpush1.bf16.msra.mxu0 0
  %6330 = vmatprep.subr.bf16.mxu0 0
  %6331 = vmatpush1.bf16.msra.mxu0 %v6311
  %6332 = vmatprep.subr.bf16.mxu0 0
  %6333 = vmatpush2.bf16.msra.mxu0 0
  %6334 = vmatprep.subr.bf16.mxu0 0
  %6335 = vmatpush2.bf16.msra.mxu0 0
  %6336 = vmatprep.subr.bf16.mxu0 0
  %6337 = vmatpush2.bf16.msra.mxu0 0
  %6338 = vmatprep.subr.bf16.mxu0 0
  %6339 = vmatpush2.bf16.msra.mxu0 0
  %6340 = vmatprep.subr.bf16.mxu0 0
  %6341 = vmatpush2.bf16.msra.mxu0 0
  %6342 = vmatprep.subr.bf16.mxu0 0
  %6343 = vmatpush2.bf16.msra.mxu0 0
  %6344 = vmatprep.subr.bf16.mxu0 0
  %6345 = vmatpush2.bf16.msra.mxu0 0
  %6346 = vmatprep.subr.bf16.mxu0 0
  %6347 = vmatpush2.bf16.msra.mxu0 0
  %6348 = vmatprep.mubr.bf16.mxu0 0
  %6349 = vmatmul.mubr.bf16.gmra.mxu0 %v6314
  %v6350 = vpop.f32.mrf.mxu0
  %v6351 = vadd.f32 %v6252, %v6350
  %v6352 = vpop.f32.mrf.mxu0
  %v6353 = vpop.f32.mrf.mxu0
  %v6354 = vpop.f32.mrf.mxu0
  %6355 = vdwg.mxu0
  %v6356 = vadd.f32 %v6300, %v6351
  %v6357 = vld [vmem:[%s10] sm:$0x1]
  %v6358 = vadd.f32 %v6356, %v6357
  %v6359 = vmax.f32 %v6358, 0.0
  %vm6360 = vcmask 516096
  %6361 = vst.msk [vmem:[%s11] sm:$0x1] %vm6360, %v6359
  // Predicated region
  $region106: #{spatial_encoder_forward.1} parent=0 // pred_check
    _
  $region107: #{spatial_encoder_forward.1} parent=0 // pred_check_branch
    %6363 = sbr.rel (0) target = $region109
  $region108: #{spatial_encoder_forward.1} parent=0 // pred_region
    _
  $region109: #{spatial_encoder_forward.1} parent=0 // pred_fallthru
    _
  // Predicated region
  $region110: #{spatial_encoder_forward.1} parent=0 // pred_check
    _
  $region111: #{spatial_encoder_forward.1} parent=0 // pred_check_branch
    %6365 = sbr.rel (0) target = $region113
  $region112: #{spatial_encoder_forward.1} parent=0 // pred_region
    _
  $region113: #{spatial_encoder_forward.1} parent=0 // pred_fallthru
    _
  // Predicated region
  $region114: #{spatial_encoder_forward.1} parent=0 // pred_check
    _
  $region115: #{spatial_encoder_forward.1} parent=0 // pred_check_branch
    %6367 = sbr.rel (0) target = $region117
  $region116: #{spatial_encoder_forward.1} parent=0 // pred_region
    _
  $region117: #{spatial_encoder_forward.1} parent=0 // pred_fallthru
    _
  // Predicated region
  $region118: #{spatial_encoder_forward.1} parent=0 // pred_check
    _
  $region119: #{spatial_encoder_forward.1} parent=0 // pred_check_branch
    %6369 = sbr.rel (0) target = $region121
  $region120: #{spatial_encoder_forward.1} parent=0 // pred_region
    _
  $region121: #{spatial_encoder_forward.1} parent=0 // pred_fallthru
    _
  %6370 = vsyncmov [#allocation6]
  %s6371 = vpop.sfrf %6370
  %p6372 = scmp.eq.s32.totalorder %s6371, 0
  %p6373 = pneg %p6372
  %6375 = shalt.err (%p6373)
  %s6376 = scalar_lea.sflag [#allocation6], 1
  %6377 = vsyncmov %s6376
  %s6378 = vpop.sfrf %6377
  %p6379 = scmp.eq.s32.totalorder %s6378, 0
  %p6380 = pneg %p6379
  %6382 = shalt.err (%p6380)

</llo_original>
